<compile_context>
chip_gen: v7x
topology: tpu7x:2x2x1
jax: 0.10.0
libtpu: 0.0.40
codegen_flags: <defaults>
</compile_context>

<pallas_src>
import functools

import jax
import jax.numpy as jnp
from jax import lax
from jax.experimental import pallas as pl
from jax.experimental.pallas import tpu as pltpu

_NEG = -1e30  # large-but-finite "minus infinity" (avoids inf-inf NaNs in pads)


def _clip_loss_kernel(scale_ref, n_ref, img_ref, txt_ref, *rest,
                      emit_logits, resident_text, mask_pads):
    """One [T, T] logits tile of the fused CLIP contrastive loss.

    Grid = (row blocks i, column blocks j), j innermost.

    scale_ref : SMEM (1,)  f32   logit_scale
    n_ref     : SMEM (1,)  i32   true (unpadded) batch size
    img_ref   : VMEM (T, Dp)     image feature row block i
    txt_ref   : VMEM (T, Dp) [tiled] or ANY/HBM (Np, Dp) [resident]
    rest      : loss_ref (1,1) f32
                [logits_ref (T,T)]           if emit_logits
                [txt_vmem (Np,Dp), txt_sem]  if resident_text
                row_m/row_l (T,1)  f32       row online stats (carried over j)
                col_m/col_l (nj,T) f32       col online stats (resident, all j)
                acc (1,1) f32                running sum of lse_r + lse_c - 2*diag
    """
    k = 0
    loss_ref = rest[k]; k += 1
    logits_ref = None
    if emit_logits:
        logits_ref = rest[k]; k += 1
    txt_vmem = txt_sem = None
    if resident_text:
        txt_vmem, txt_sem = rest[k], rest[k + 1]; k += 2
    row_m, row_l, col_m, col_l, acc_ref = rest[k:k + 5]

    i = pl.program_id(0)
    j = pl.program_id(1)
    ni = pl.num_programs(0)
    nj = pl.num_programs(1)

    tile = img_ref.shape[0]
    scale = scale_ref[0]

    # ---- one-time init (+ resident-text DMA) ------------------------------
    @pl.when(jnp.logical_and(i == 0, j == 0))
    def _():
        acc_ref[...] = jnp.zeros_like(acc_ref)
        loss_ref[...] = jnp.zeros_like(loss_ref)
        if resident_text:
            cp = pltpu.make_async_copy(txt_ref, txt_vmem, txt_sem)
            cp.start()
            cp.wait()

    @pl.when(j == 0)
    def _():
        row_m[...] = jnp.full_like(row_m, _NEG)
        row_l[...] = jnp.zeros_like(row_l)

    @pl.when(i == 0)
    def _():
        col_m[pl.ds(j, 1), :] = jnp.full((1, tile), _NEG, jnp.float32)
        col_l[pl.ds(j, 1), :] = jnp.zeros((1, tile), jnp.float32)

    # ---- text tile ---------------------------------------------------------
    if resident_text:
        off = pl.multiple_of(j * tile, tile)
        txt_tile = txt_vmem[pl.ds(off, tile), :]
    else:
        txt_tile = txt_ref[...]

    # ---- logits tile: MXU matmul contracting the feature axis --------------
    s = scale * lax.dot_general(
        img_ref[...], txt_tile,
        dimension_numbers=(((1,), (1,)), ((), ())),
        preferred_element_type=jnp.float32)                      # [T, T]

    if emit_logits:
        logits_ref[...] = s.astype(logits_ref.dtype)

    # ---- pad masking (only traced when N % tile != 0) ----------------------
    row_valid = col_valid = None
    if mask_pads:
        n_true = n_ref[0]
        row_ids = i * tile + lax.broadcasted_iota(jnp.int32, (tile, 1), 0)
        col_ids = j * tile + lax.broadcasted_iota(jnp.int32, (1, tile), 1)
        row_valid = row_ids < n_true
        col_valid = col_ids < n_true
        s = jnp.where(jnp.logical_and(row_valid, col_valid), s,
                      jnp.float32(_NEG))

    # ---- single full-tile exp shared by both softmax directions ------------
    row_max = jnp.max(s, axis=1, keepdims=True)                   # [T,1]
    col_max = jnp.max(s, axis=0, keepdims=True)                   # [1,T]
    c0 = jnp.max(row_max, keepdims=True)                          # [1,1] tile max
    p0 = jnp.exp(s - c0)                                          # the only TxT exp
    tile_row_sum = jnp.sum(p0, axis=1, keepdims=True)             # [T,1]
    tile_col_sum = jnp.sum(p0, axis=0, keepdims=True)             # [1,T]

    # image -> text direction (row online stats)
    m_old = row_m[...]
    m_new = jnp.maximum(m_old, row_max)
    row_l[...] = (row_l[...] * jnp.exp(m_old - m_new)
                  + jnp.exp(c0 - m_new + jnp.log(tile_row_sum)))
    row_m[...] = m_new

    # text -> image direction (column online stats)
    cm_old = col_m[pl.ds(j, 1), :]
    cm_new = jnp.maximum(cm_old, col_max)
    col_l[pl.ds(j, 1), :] = (col_l[pl.ds(j, 1), :] * jnp.exp(cm_old - cm_new)
                             + jnp.exp(c0 - cm_new + jnp.log(tile_col_sum)))
    col_m[pl.ds(j, 1), :] = cm_new

    # ---- diagonal (correct-class) logits straight from the MXU tile --------
    @pl.when(i == j)                    # square tiles: TM == TN == tile
    def _():
        rr = lax.broadcasted_iota(jnp.int32, (tile, tile), 0)
        cc = lax.broadcasted_iota(jnp.int32, (tile, tile), 1)
        d = jnp.sum(jnp.where(rr == cc, s, 0.0), axis=1, keepdims=True)  # [T,1]
        if mask_pads:
            d = jnp.where(row_valid, d, 0.0)
        acc_ref[...] += (-2.0) * jnp.sum(d, keepdims=True)

    # ---- row LSE once the sweep over all column blocks is done -------------
    @pl.when(j == nj - 1)
    def _():
        lse_r = row_m[...] + jnp.log(row_l[...])
        if mask_pads:
            lse_r = jnp.where(row_valid, lse_r, 0.0)
        acc_ref[...] += jnp.sum(lse_r, keepdims=True)

    # ---- column-block LSE once the last row block has been folded in -------
    @pl.when(i == ni - 1)
    def _():
        lse_c = col_m[pl.ds(j, 1), :] + jnp.log(col_l[pl.ds(j, 1), :])
        if mask_pads:
            lse_c = jnp.where(col_valid, lse_c, 0.0)
        acc_ref[...] += jnp.sum(lse_c, keepdims=True)

    # ---- finalize -----------------------------------------------------------
    @pl.when(jnp.logical_and(i == ni - 1, j == nj - 1))
    def _():
        n_f = n_ref[0].astype(jnp.float32)
        loss_ref[...] = acc_ref[...] * (0.5 / n_f)


def _round_up(x, m):
    return (x + m - 1) // m * m


def _pad2d(x, rows, cols):
    pr, pc = rows - x.shape[0], cols - x.shape[1]
    if pr or pc:
        x = jnp.pad(x, ((0, pr), (0, pc)))
    return x


def _vmem_capacity_bytes():
    try:
        return int(pltpu.get_tpu_info().vmem_capacity_bytes)
    except Exception:
        return 64 * 1024 * 1024          # conservative (v7x-sized) fallback


def openclip_sim_loss(image_features, text_features, logit_scale, *,
                      return_logits=True, logits_dtype=jnp.float32):
    """Pallas-backed OpenClipLoss.forward_sim_loss (reduction='mean').

    Returns (loss, logits_per_image or None, labels).
    """
    n, d = image_features.shape
    assert text_features.shape == (n, d)

    d_pad = _round_up(d, 128)
    n_pad = _round_up(n, 256)            # 256-wide tiles keep 256x256 MXUs full

    img_bytes = jnp.dtype(image_features.dtype).itemsize
    txt_bytes = jnp.dtype(text_features.dtype).itemsize
    logit_bytes = jnp.dtype(logits_dtype).itemsize if return_logits else 0

    def vmem_estimate(tile, resident):
        nj = n_pad // tile
        est = 2 * tile * d_pad * img_bytes                       # image double-buffer
        est += 2 * tile * tile * logit_bytes                     # logits out double-buffer
        if resident:
            est += n_pad * d_pad * txt_bytes                     # resident text scratch
        else:
            est += 2 * tile * d_pad * txt_bytes                  # text double-buffer
        est += 2 * max(nj, 8) * tile * 4                         # column stats
        est += 4 * tile * 4 + 4096                               # row stats, acc, loss
        return est

    vmem_cap = _vmem_capacity_bytes()
    budget = int(0.75 * vmem_cap)

    tile = 512 if (n_pad % 512 == 0 and vmem_estimate(512, False) <= budget) else 256
    assert n_pad % tile == 0
    grid = (n_pad // tile, n_pad // tile)

    # Keep the whole text matrix resident in VMEM when it fits: text HBM reads
    # drop from grid[0]*N*D to N*D bytes.
    resident_text = vmem_estimate(tile, True) <= budget
    # TODO(synk): when not resident, a deeper text prefetch (pipeline_mode=
    # pl.Buffered(3)) would help v5e's slower HBM; left at the default depth.

    mask_pads = n != n_pad

    img_p = _pad2d(image_features, n_pad, d_pad)     # native dtype (bf16 welcome)
    txt_p = _pad2d(text_features, n_pad, d_pad)

    scale = jnp.reshape(jnp.asarray(logit_scale, jnp.float32), (1,))
    n_arr = jnp.array([n], dtype=jnp.int32)

    in_specs = [
        pl.BlockSpec(memory_space=pltpu.MemorySpace.SMEM),        # logit_scale
        pl.BlockSpec(memory_space=pltpu.MemorySpace.SMEM),        # true N
        pl.BlockSpec((tile, d_pad), lambda i, j: (i, 0)),         # image row block
    ]
    if resident_text:
        in_specs.append(pl.BlockSpec(memory_space=pl.ANY))        # full text (HBM)
    else:
        in_specs.append(pl.BlockSpec((tile, d_pad), lambda i, j: (j, 0)))

    out_shape = [jax.ShapeDtypeStruct((1, 1), jnp.float32)]
    out_specs = [pl.BlockSpec((1, 1), lambda i, j: (0, 0))]
    if return_logits:
        out_shape.append(jax.ShapeDtypeStruct((n_pad, n_pad), logits_dtype))
        out_specs.append(pl.BlockSpec((tile, tile), lambda i, j: (i, j)))

    scratch_shapes = []
    if resident_text:
        scratch_shapes += [pltpu.VMEM((n_pad, d_pad), txt_p.dtype),
                           pltpu.SemaphoreType.DMA(())]
    scratch_shapes += [
        pltpu.VMEM((tile, 1), jnp.float32),             # row running max
        pltpu.VMEM((tile, 1), jnp.float32),             # row running sum-exp
        pltpu.VMEM((grid[1], tile), jnp.float32),       # col running max (lane-major)
        pltpu.VMEM((grid[1], tile), jnp.float32),       # col running sum-exp
        pltpu.VMEM((1, 1), jnp.float32),                # loss accumulator
    ]

    # Honest advisory byte counts: image read once (block index constant over
    # j), text once if resident else once per row block, logits written once.
    text_reads = (1 if resident_text else grid[0]) * n_pad * d_pad * txt_bytes
    cost = pl.CostEstimate(
        flops=2 * n_pad * n_pad * d_pad,
        transcendentals=n_pad * n_pad,
        bytes_accessed=(n_pad * d_pad * img_bytes + text_reads
                        + n_pad * n_pad * logit_bytes + 8),
    )

    vmem_limit = max(32 << 20,
                     min(int(0.9 * vmem_cap),
                         vmem_estimate(tile, resident_text) + (8 << 20)))

    kernel = functools.partial(_clip_loss_kernel,
                               emit_logits=return_logits,
                               resident_text=resident_text,
                               mask_pads=mask_pads)

    outs = pl.pallas_call(
        kernel,
        out_shape=tuple(out_shape),
        grid_spec=pltpu.PrefetchScalarGridSpec(
            num_scalar_prefetch=0,
            grid=grid,
            in_specs=in_specs,
            out_specs=tuple(out_specs),
            scratch_shapes=scratch_shapes),
        compiler_params=pltpu.CompilerParams(
            # Both axes carry resident state (column stats + scalar acc),
            # so both stay "arbitrary".
            # TODO(synk): v7x dual-TensorCore split (core-parallel i axis with
            # per-core column stats + a tiny merge epilogue) not implemented.
            dimension_semantics=("arbitrary", "arbitrary"),
            vmem_limit_bytes=int(vmem_limit),
        ),
        cost_estimate=cost,
    )(scale, n_arr, img_p, txt_p)

    loss = outs[0][0, 0]
    logits = outs[1][:n, :n] if return_logits else None
    labels = jnp.arange(n, dtype=jnp.int32)   # get_ground_truth (non-distributed)
    return loss, logits, labels


def make_synthetic_clip_model(key, c, h, w, vocab, embed_dim):
    """Deterministic tiny stand-in for the external CLIP model."""
    k1, k2, k3 = jax.random.split(key, 3)
    w_img = 0.02 * jax.random.normal(k1, (c * h * w, embed_dim), jnp.float32)
    tok_emb = 0.02 * jax.random.normal(k2, (vocab, embed_dim), jnp.float32)
    w_txt = 0.02 * jax.random.normal(k3, (embed_dim, embed_dim), jnp.float32)
    log_logit_scale = jnp.log(1.0 / 0.07)      # standard CLIP init

    def model(images, texts):
        b = images.shape[0]
        x = images.reshape(b, -1) @ w_img                                   # [B, D]
        image_features = x / jnp.linalg.norm(x, axis=-1, keepdims=True)
        t = jnp.take(tok_emb, texts, axis=0).mean(axis=1) @ w_txt           # [B, D]
        text_features = t / jnp.linalg.norm(t, axis=-1, keepdims=True)
        return {
            'image_features': image_features,
            'text_features': text_features,
            'logit_scale': jnp.exp(log_logit_scale),
        }

    return model


def openclip_loss_forward(model, data):
    """Equivalent of OpenClipLoss.forward (gather_distributed=False, reduction=True)."""
    images, texts = data
    results = model(images, texts)
    image_features = results['image_features']
    text_features = results['text_features']
    logit_scale = results['logit_scale']

    loss, logits, labels = openclip_sim_loss(image_features, text_features, logit_scale)

    # TODO(synk): track_lid / lid_mle (external, undefined dependency) and the
    # distributed all_gather path have no in-script definition; not reproduced.
    return {
        'loss': loss,
        'logits': logits,
        'labels': labels,
        'main_loss': loss,
        'logits_scale': logit_scale,
    }


def _reference_loss(image_features, text_features, logit_scale):
    """Pure-JAX reference of forward_sim_loss for a correctness check."""
    logits = logit_scale * image_features @ text_features.T
    n = logits.shape[0]
    labels = jnp.arange(n)

    def ce(lg):
        lse = jax.scipy.special.logsumexp(lg, axis=-1)
        return jnp.mean(lse - lg[jnp.arange(n), labels])

    return 0.5 * (ce(logits) + ce(logits.T))


if __name__ == "__main__":
    key = jax.random.PRNGKey(0)
    k_model, k_img, k_txt, k_fi, k_ft = jax.random.split(key, 5)

    B, C, H, W = 8, 4, 16, 16
    SEQ, VOCAB, EMBED = 8, 64, 32

    model = make_synthetic_clip_model(k_model, C, H, W, VOCAB, EMBED)

    images = jax.random.normal(k_img, (B, C, H, W), jnp.float32)   # NCHW, as PyTorch
    texts = jax.random.randint(k_txt, (B, SEQ), 0, VOCAB, jnp.int32)

    results = openclip_loss_forward(model, (images, texts))
    jax.block_until_ready(results['loss'])

    # Sanity check against a plain-JAX reference.
    feats = model(images, texts)
    ref = _reference_loss(feats['image_features'], feats['text_features'],
                          feats['logit_scale'])
    ref_logits = feats['logit_scale'] * feats['image_features'] @ feats['text_features'].T
    assert jnp.allclose(results['loss'], ref, atol=1e-4, rtol=1e-4), (results['loss'], ref)
    assert results['logits'].shape == (B, B)
    assert jnp.allclose(results['logits'], ref_logits, atol=1e-3, rtol=1e-3)
    assert results['labels'].shape == (B,)

    # Padding / masking path: batch not a multiple of the tile size.
    fi = jax.random.normal(k_fi, (5, 48), jnp.float32)
    ft = jax.random.normal(k_ft, (5, 48), jnp.float32)
    fi = fi / jnp.linalg.norm(fi, axis=-1, keepdims=True)
    ft = ft / jnp.linalg.norm(ft, axis=-1, keepdims=True)
    sc = jnp.float32(1.0 / 0.07)
    l2, lg2, lb2 = openclip_sim_loss(fi, ft, sc)
    jax.block_until_ready(l2)
    ref2 = _reference_loss(fi, ft, sc)
    assert jnp.allclose(l2, ref2, atol=1e-4, rtol=1e-4), (l2, ref2)
    assert lg2.shape == (5, 5) and lb2.shape == (5,)

    # Loss-only mode (no N^2 logits stream).
    l3, lg3, _ = openclip_sim_loss(fi, ft, sc, return_logits=False)
    jax.block_until_ready(l3)
    assert lg3 is None
    assert jnp.allclose(l3, ref2, atol=1e-4, rtol=1e-4), (l3, ref2)

    # No-padding fast path: batch already a multiple of the tile (mask skipped).
    k_gi, k_gt = jax.random.split(k_fi)
    gi = jax.random.normal(k_gi, (256, 32), jnp.float32)
    gt = jax.random.normal(k_gt, (256, 32), jnp.float32)
    gi = gi / jnp.linalg.norm(gi, axis=-1, keepdims=True)
    gt = gt / jnp.linalg.norm(gt, axis=-1, keepdims=True)
    l4, lg4, _ = openclip_sim_loss(gi, gt, sc, return_logits=False)
    jax.block_until_ready(l4)
    ref4 = _reference_loss(gi, gt, sc)
    assert lg4 is None
    assert jnp.allclose(l4, ref4, atol=1e-4, rtol=1e-4), (l4, ref4)

    print("KERNEL_OK")
</pallas_src>

<mosaic_0001>
module attributes {stable_mosaic.version = 11 : i64} {
  func.func @_clip_loss_kernel(%arg0: i32, %arg1: i32, %arg2: memref<1xf32, #tpu.memory_space<smem>>, %arg3: memref<1xi32, #tpu.memory_space<smem>>, %arg4: memref<256x128xf32, #tpu.memory_space<vmem>>, %arg5: memref<256x128xf32, #tpu.memory_space<any>>, %arg6: memref<1x1xf32, #tpu.memory_space<vmem>>, %arg7: memref<256x256xf32, #tpu.memory_space<vmem>>, %arg8: memref<256x128xf32, #tpu.memory_space<vmem>>, %arg9: memref<!tpu.dma_semaphore, #tpu.memory_space<semaphore_mem>>, %arg10: memref<256x1xf32, #tpu.memory_space<vmem>>, %arg11: memref<256x1xf32, #tpu.memory_space<vmem>>, %arg12: memref<1x256xf32, #tpu.memory_space<vmem>>, %arg13: memref<1x256xf32, #tpu.memory_space<vmem>>, %arg14: memref<1x1xf32, #tpu.memory_space<vmem>>) attributes {dimension_semantics = [#tpu.dimension_semantics<arbitrary>, #tpu.dimension_semantics<arbitrary>], iteration_bounds = array<i64: 1, 1>, scalar_prefetch = 0 : i64, scratch_operands = 7 : i64, tpu.core_type = #tpu.core_type<tc>, window_params = [{transform_indices = @transform_0, window_bounds = array<i64: 1>}, {transform_indices = @transform_1, window_bounds = array<i64: 1>}, {transform_indices = @transform_2, window_bounds = array<i64: 256, 128>}, {}, {pipeline_mode = #tpu.pipeline_mode<synchronous>, transform_indices = @transform_4, window_bounds = array<i64: 1, 1>}, {transform_indices = @transform_5, window_bounds = array<i64: 256, 256>}]} {
    %c0 = arith.constant 0 : index
    %0 = memref.load %arg2[%c0] : memref<1xf32, #tpu.memory_space<smem>>
    %c0_i32 = arith.constant 0 : i32
    %1 = arith.cmpi eq, %arg0, %c0_i32 : i32
    %c0_i32_0 = arith.constant 0 : i32
    %2 = arith.cmpi eq, %arg1, %c0_i32_0 : i32
    %3 = arith.andi %1, %2 : i1
    %4 = arith.extui %3 : i1 to i32
    %c0_i32_1 = arith.constant 0 : i32
    %5 = arith.cmpi ne, %4, %c0_i32_1 : i32
    scf.if %5 {
      %cst_40 = arith.constant 0.000000e+00 : f32
      %101 = vector.broadcast %cst_40 : f32 to vector<1x1xf32>
      %c0_41 = arith.constant 0 : index
      %c0_42 = arith.constant 0 : index
      %102 = vector.load %arg14[%c0_41, %c0_42] : memref<1x1xf32, #tpu.memory_space<vmem>>, vector<1x1xf32>
      tpu.vector_store %arg14[%c0_41, %c0_42], %101 {strides = array<i32>} : memref<1x1xf32, #tpu.memory_space<vmem>>, vector<1x1xf32>,
      %cst_43 = arith.constant 0.000000e+00 : f32
      %103 = vector.broadcast %cst_43 : f32 to vector<1x1xf32>
      %c0_44 = arith.constant 0 : index
      %c0_45 = arith.constant 0 : index
      %104 = vector.load %arg6[%c0_44, %c0_45] : memref<1x1xf32, #tpu.memory_space<vmem>>, vector<1x1xf32>
      tpu.vector_store %arg6[%c0_44, %c0_45], %103 {strides = array<i32>} : memref<1x1xf32, #tpu.memory_space<vmem>>, vector<1x1xf32>,
      tpu.enqueue_dma source(%arg5 : memref<256x128xf32, #tpu.memory_space<any>>) target(%arg8 : memref<256x128xf32, #tpu.memory_space<vmem>>) target_semaphore(%arg9 : memref<!tpu.dma_semaphore, #tpu.memory_space<semaphore_mem>>)
      tpu.wait_dma2 semaphore(%arg9 : memref<!tpu.dma_semaphore, #tpu.memory_space<semaphore_mem>>) src(%arg5 : memref<256x128xf32, #tpu.memory_space<any>>) dst(%arg8 : memref<256x128xf32, #tpu.memory_space<vmem>>)
    } else {
    }
    %c0_i32_2 = arith.constant 0 : i32
    %6 = arith.cmpi eq, %arg1, %c0_i32_2 : i32
    %7 = arith.extui %6 : i1 to i32
    %c0_i32_3 = arith.constant 0 : i32
    %8 = arith.cmpi ne, %7, %c0_i32_3 : i32
    scf.if %8 {
      %cst_40 = arith.constant -1.000000e+30 : f32
      %101 = vector.broadcast %cst_40 : f32 to vector<256x1xf32>
      %c0_41 = arith.constant 0 : index
      %c0_42 = arith.constant 0 : index
      %102 = vector.load %arg10[%c0_41, %c0_42] : memref<256x1xf32, #tpu.memory_space<vmem>>, vector<256x1xf32>
      tpu.vector_store %arg10[%c0_41, %c0_42], %101 {strides = array<i32>} : memref<256x1xf32, #tpu.memory_space<vmem>>, vector<256x1xf32>,
      %cst_43 = arith.constant 0.000000e+00 : f32
      %103 = vector.broadcast %cst_43 : f32 to vector<256x1xf32>
      %c0_44 = arith.constant 0 : index
      %c0_45 = arith.constant 0 : index
      %104 = vector.load %arg11[%c0_44, %c0_45] : memref<256x1xf32, #tpu.memory_space<vmem>>, vector<256x1xf32>
      tpu.vector_store %arg11[%c0_44, %c0_45], %103 {strides = array<i32>} : memref<256x1xf32, #tpu.memory_space<vmem>>, vector<256x1xf32>,
    } else {
    }
    %c0_i32_4 = arith.constant 0 : i32
    %9 = arith.cmpi eq, %arg0, %c0_i32_4 : i32
    %10 = arith.extui %9 : i1 to i32
    %c0_i32_5 = arith.constant 0 : i32
    %11 = arith.cmpi ne, %10, %c0_i32_5 : i32
    scf.if %11 {
      %cst_40 = arith.constant -1.000000e+30 : f32
      %101 = vector.broadcast %cst_40 : f32 to vector<1x256xf32>
      %102 = arith.index_cast %arg1 : i32 to index
      %c0_41 = arith.constant 0 : index
      %103 = vector.load %arg12[%102, %c0_41] : memref<1x256xf32, #tpu.memory_space<vmem>>, vector<1x256xf32>
      tpu.vector_store %arg12[%102, %c0_41], %101 {strides = array<i32>} : memref<1x256xf32, #tpu.memory_space<vmem>>, vector<1x256xf32>,
      %cst_42 = arith.constant 0.000000e+00 : f32
      %104 = vector.broadcast %cst_42 : f32 to vector<1x256xf32>
      %105 = arith.index_cast %arg1 : i32 to index
      %c0_43 = arith.constant 0 : index
      %106 = vector.load %arg13[%105, %c0_43] : memref<1x256xf32, #tpu.memory_space<vmem>>, vector<1x256xf32>
      tpu.vector_store %arg13[%105, %c0_43], %104 {strides = array<i32>} : memref<1x256xf32, #tpu.memory_space<vmem>>, vector<1x256xf32>,
    } else {
    }
    %c256_i32 = arith.constant 256 : i32
    %12 = arith.muli %arg1, %c256_i32 : i32
    %13 = tpu.assume_multiple %12, 256 : i32
    %14 = arith.index_cast %13 : i32 to index
    %c0_6 = arith.constant 0 : index
    %15 = vector.load %arg8[%14, %c0_6] : memref<256x128xf32, #tpu.memory_space<vmem>>, vector<256x128xf32>
    %c0_7 = arith.constant 0 : index
    %c0_8 = arith.constant 0 : index
    %16 = vector.load %arg4[%c0_7, %c0_8] : memref<256x128xf32, #tpu.memory_space<vmem>>, vector<256x128xf32>
    %cst = arith.constant dense<0.000000e+00> : vector<256x256xf32>
    %17 = tpu.matmul %16, %15, %cst {dimension_numbers = #tpu.dot_dimension_numbers<[1], [1], [0], [0], [0, 0, 1, 0], [], []>} : vector<256x128xf32>, vector<256x128xf32>, vector<256x256xf32> -> vector<256x256xf32>
    %18 = vector.broadcast %0 : f32 to vector<256x256xf32>
    %19 = arith.mulf %18, %17 : vector<256x256xf32>
    %c0_9 = arith.constant 0 : index
    %c0_10 = arith.constant 0 : index
    %20 = vector.load %arg7[%c0_9, %c0_10] : memref<256x256xf32, #tpu.memory_space<vmem>>, vector<256x256xf32>
    tpu.vector_store %arg7[%c0_9, %c0_10], %19 {strides = array<i32>} : memref<256x256xf32, #tpu.memory_space<vmem>>, vector<256x256xf32>,
    %c0_11 = arith.constant 0 : index
    %21 = memref.load %arg3[%c0_11] : memref<1xi32, #tpu.memory_space<smem>>
    %c256_i32_12 = arith.constant 256 : i32
    %22 = arith.muli %arg0, %c256_i32_12 : i32
    %23 = tpu.iota {dimensions = array<i32: 0>} : vector<256x1xi32>
    %24 = vector.broadcast %22 : i32 to vector<256x1xi32>
    %25 = arith.addi %24, %23 : vector<256x1xi32>
    %c256_i32_13 = arith.constant 256 : i32
    %26 = arith.muli %arg1, %c256_i32_13 : i32
    %27 = tpu.iota {dimensions = array<i32: 1>} : vector<1x256xi32>
    %28 = vector.broadcast %26 : i32 to vector<1x256xi32>
    %29 = arith.addi %28, %27 : vector<1x256xi32>
    %30 = vector.broadcast %21 : i32 to vector<256x1xi32>
    %31 = arith.cmpi slt, %25, %30 : vector<256x1xi32>
    %32 = vector.broadcast %21 : i32 to vector<1x256xi32>
    %33 = arith.cmpi slt, %29, %32 : vector<1x256xi32>
    %34 = vector.broadcast %31 : vector<256x1xi1> to vector<256x256xi1>
    %35 = vector.broadcast %33 : vector<1x256xi1> to vector<256x256xi1>
    %36 = arith.andi %34, %35 : vector<256x256xi1>
    %cst_14 = arith.constant -1.000000e+30 : f32
    %37 = vector.broadcast %cst_14 : f32 to vector<256x256xf32>
    %38 = arith.select %36, %19, %37 : vector<256x256xi1>, vector<256x256xf32>
    %cst_15 = arith.constant dense<0xFF800000> : vector<256xf32>
    %39 = vector.multi_reduction <maximumf>, %38, %cst_15 [1] : vector<256x256xf32> to vector<256xf32>
    %40 = vector.shape_cast %39 : vector<256xf32> to vector<256x1xf32>
    %cst_16 = arith.constant dense<0xFF800000> : vector<256xf32>
    %41 = vector.multi_reduction <maximumf>, %38, %cst_16 [0] : vector<256x256xf32> to vector<256xf32>
    %42 = vector.shape_cast %41 : vector<256xf32> to vector<1x256xf32>
    %43 = vector.shape_cast %40 : vector<256x1xf32> to vector<1x256x1xf32>
    %cst_17 = arith.constant dense<0xFF800000> : vector<1xf32>
    %44 = vector.multi_reduction <maximumf>, %43, %cst_17 [1, 2] : vector<1x256x1xf32> to vector<1xf32>
    %45 = vector.shape_cast %44 : vector<1xf32> to vector<1x1x1xf32>
    %46 = vector.extract %45[0, 0, 0] : f32 from vector<1x1x1xf32>
    %47 = vector.broadcast %46 : f32 to vector<1x1xf32>
    %48 = vector.broadcast %47 : vector<1x1xf32> to vector<256x256xf32>
    %49 = arith.subf %38, %48 : vector<256x256xf32>
    %50 = math.exp %49 : vector<256x256xf32>
    %cst_18 = arith.constant dense<0.000000e+00> : vector<256xf32>
    %51 = vector.multi_reduction <add>, %50, %cst_18 [1] : vector<256x256xf32> to vector<256xf32>
    %52 = vector.shape_cast %51 : vector<256xf32> to vector<256x1xf32>
    %cst_19 = arith.constant dense<0.000000e+00> : vector<256xf32>
    %53 = vector.multi_reduction <add>, %50, %cst_19 [0] : vector<256x256xf32> to vector<256xf32>
    %54 = vector.shape_cast %53 : vector<256xf32> to vector<1x256xf32>
    %c0_20 = arith.constant 0 : index
    %c0_21 = arith.constant 0 : index
    %55 = vector.load %arg10[%c0_20, %c0_21] : memref<256x1xf32, #tpu.memory_space<vmem>>, vector<256x1xf32>
    %56 = arith.maximumf %55, %40 : vector<256x1xf32>
    %c0_22 = arith.constant 0 : index
    %c0_23 = arith.constant 0 : index
    %57 = vector.load %arg11[%c0_22, %c0_23] : memref<256x1xf32, #tpu.memory_space<vmem>>, vector<256x1xf32>
    %58 = arith.subf %55, %56 : vector<256x1xf32>
    %59 = math.exp %58 : vector<256x1xf32>
    %60 = arith.mulf %57, %59 : vector<256x1xf32>
    %61 = vector.broadcast %47 : vector<1x1xf32> to vector<256x1xf32>
    %62 = arith.subf %61, %56 : vector<256x1xf32>
    %63 = math.log %52 : vector<256x1xf32>
    %64 = arith.addf %62, %63 : vector<256x1xf32>
    %65 = math.exp %64 : vector<256x1xf32>
    %66 = arith.addf %60, %65 : vector<256x1xf32>
    %c0_24 = arith.constant 0 : index
    %c0_25 = arith.constant 0 : index
    %67 = vector.load %arg11[%c0_24, %c0_25] : memref<256x1xf32, #tpu.memory_space<vmem>>, vector<256x1xf32>
    tpu.vector_store %arg11[%c0_24, %c0_25], %66 {strides = array<i32>} : memref<256x1xf32, #tpu.memory_space<vmem>>, vector<256x1xf32>,
    %c0_26 = arith.constant 0 : index
    %c0_27 = arith.constant 0 : index
    %68 = vector.load %arg10[%c0_26, %c0_27] : memref<256x1xf32, #tpu.memory_space<vmem>>, vector<256x1xf32>
    tpu.vector_store %arg10[%c0_26, %c0_27], %56 {strides = array<i32>} : memref<256x1xf32, #tpu.memory_space<vmem>>, vector<256x1xf32>,
    %69 = arith.index_cast %arg1 : i32 to index
    %c0_28 = arith.constant 0 : index
    %70 = vector.load %arg12[%69, %c0_28] : memref<1x256xf32, #tpu.memory_space<vmem>>, vector<1x256xf32>
    %71 = arith.maximumf %70, %42 : vector<1x256xf32>
    %72 = arith.index_cast %arg1 : i32 to index
    %c0_29 = arith.constant 0 : index
    %73 = vector.load %arg13[%72, %c0_29] : memref<1x256xf32, #tpu.memory_space<vmem>>, vector<1x256xf32>
    %74 = arith.subf %70, %71 : vector<1x256xf32>
    %75 = math.exp %74 : vector<1x256xf32>
    %76 = arith.mulf %73, %75 : vector<1x256xf32>
    %77 = vector.broadcast %47 : vector<1x1xf32> to vector<1x256xf32>
    %78 = arith.subf %77, %71 : vector<1x256xf32>
    %79 = math.log %54 : vector<1x256xf32>
    %80 = arith.addf %78, %79 : vector<1x256xf32>
    %81 = math.exp %80 : vector<1x256xf32>
    %82 = arith.addf %76, %81 : vector<1x256xf32>
    %83 = arith.index_cast %arg1 : i32 to index
    %c0_30 = arith.constant 0 : index
    %84 = vector.load %arg13[%83, %c0_30] : memref<1x256xf32, #tpu.memory_space<vmem>>, vector<1x256xf32>
    tpu.vector_store %arg13[%83, %c0_30], %82 {strides = array<i32>} : memref<1x256xf32, #tpu.memory_space<vmem>>, vector<1x256xf32>,
    %85 = arith.index_cast %arg1 : i32 to index
    %c0_31 = arith.constant 0 : index
    %86 = vector.load %arg12[%85, %c0_31] : memref<1x256xf32, #tpu.memory_space<vmem>>, vector<1x256xf32>
    tpu.vector_store %arg12[%85, %c0_31], %71 {strides = array<i32>} : memref<1x256xf32, #tpu.memory_space<vmem>>, vector<1x256xf32>,
    %87 = arith.cmpi eq, %arg0, %arg1 : i32
    %88 = arith.extui %87 : i1 to i32
    %c0_i32_32 = arith.constant 0 : i32
    %89 = arith.cmpi ne, %88, %c0_i32_32 : i32
    scf.if %89 {
      %101 = tpu.iota {dimensions = array<i32: 0>} : vector<256x256xi32>
      %102 = tpu.iota {dimensions = array<i32: 1>} : vector<256x256xi32>
      %103 = arith.cmpi eq, %101, %102 : vector<256x256xi32>
      %cst_40 = arith.constant 0.000000e+00 : f32
      %104 = vector.broadcast %cst_40 : f32 to vector<256x256xf32>
      %105 = arith.select %103, %38, %104 : vector<256x256xi1>, vector<256x256xf32>
      %cst_41 = arith.constant dense<0.000000e+00> : vector<256xf32>
      %106 = vector.multi_reduction <add>, %105, %cst_41 [1] : vector<256x256xf32> to vector<256xf32>
      %107 = vector.shape_cast %106 : vector<256xf32> to vector<256x1xf32>
      %cst_42 = arith.constant 0.000000e+00 : f32
      %108 = vector.broadcast %cst_42 : f32 to vector<256x1xf32>
      %109 = arith.select %31, %107, %108 : vector<256x1xi1>, vector<256x1xf32>
      %c0_43 = arith.constant 0 : index
      %c0_44 = arith.constant 0 : index
      %110 = vector.load %arg14[%c0_43, %c0_44] : memref<1x1xf32, #tpu.memory_space<vmem>>, vector<1x1xf32>
      %111 = vector.shape_cast %109 : vector<256x1xf32> to vector<1x256x1xf32>
      %cst_45 = arith.constant dense<0.000000e+00> : vector<1xf32>
      %112 = vector.multi_reduction <add>, %111, %cst_45 [1, 2] : vector<1x256x1xf32> to vector<1xf32>
      %113 = vector.shape_cast %112 : vector<1xf32> to vector<1x1x1xf32>
      %114 = vector.extract %113[0, 0, 0] : f32 from vector<1x1x1xf32>
      %115 = vector.broadcast %114 : f32 to vector<1x1xf32>
      %cst_46 = arith.constant -2.000000e+00 : f32
      %116 = vector.broadcast %cst_46 : f32 to vector<1x1xf32>
      %117 = arith.mulf %116, %115 : vector<1x1xf32>
      %118 = arith.addf %110, %117 : vector<1x1xf32>
      %c0_47 = arith.constant 0 : index
      %c0_48 = arith.constant 0 : index
      %119 = vector.load %arg14[%c0_47, %c0_48] : memref<1x1xf32, #tpu.memory_space<vmem>>, vector<1x1xf32>
      tpu.vector_store %arg14[%c0_47, %c0_48], %118 {strides = array<i32>} : memref<1x1xf32, #tpu.memory_space<vmem>>, vector<1x1xf32>,
    } else {
    }
    %c0_i32_33 = arith.constant 0 : i32
    %90 = arith.cmpi eq, %arg1, %c0_i32_33 : i32
    %91 = arith.extui %90 : i1 to i32
    %c0_i32_34 = arith.constant 0 : i32
    %92 = arith.cmpi ne, %91, %c0_i32_34 : i32
    scf.if %92 {
      %c0_40 = arith.constant 0 : index
      %c0_41 = arith.constant 0 : index
      %101 = vector.load %arg10[%c0_40, %c0_41] : memref<256x1xf32, #tpu.memory_space<vmem>>, vector<256x1xf32>
      %c0_42 = arith.constant 0 : index
      %c0_43 = arith.constant 0 : index
      %102 = vector.load %arg11[%c0_42, %c0_43] : memref<256x1xf32, #tpu.memory_space<vmem>>, vector<256x1xf32>
      %103 = math.log %102 : vector<256x1xf32>
      %104 = arith.addf %101, %103 : vector<256x1xf32>
      %cst_44 = arith.constant 0.000000e+00 : f32
      %105 = vector.broadcast %cst_44 : f32 to vector<256x1xf32>
      %106 = arith.select %31, %104, %105 : vector<256x1xi1>, vector<256x1xf32>
      %c0_45 = arith.constant 0 : index
      %c0_46 = arith.constant 0 : index
      %107 = vector.load %arg14[%c0_45, %c0_46] : memref<1x1xf32, #tpu.memory_space<vmem>>, vector<1x1xf32>
      %108 = vector.shape_cast %106 : vector<256x1xf32> to vector<1x256x1xf32>
      %cst_47 = arith.constant dense<0.000000e+00> : vector<1xf32>
      %109 = vector.multi_reduction <add>, %108, %cst_47 [1, 2] : vector<1x256x1xf32> to vector<1xf32>
      %110 = vector.shape_cast %109 : vector<1xf32> to vector<1x1x1xf32>
      %111 = vector.extract %110[0, 0, 0] : f32 from vector<1x1x1xf32>
      %112 = vector.broadcast %111 : f32 to vector<1x1xf32>
      %113 = arith.addf %107, %112 : vector<1x1xf32>
      %c0_48 = arith.constant 0 : index
      %c0_49 = arith.constant 0 : index
      %114 = vector.load %arg14[%c0_48, %c0_49] : memref<1x1xf32, #tpu.memory_space<vmem>>, vector<1x1xf32>
      tpu.vector_store %arg14[%c0_48, %c0_49], %113 {strides = array<i32>} : memref<1x1xf32, #tpu.memory_space<vmem>>, vector<1x1xf32>,
    } else {
    }
    %c0_i32_35 = arith.constant 0 : i32
    %93 = arith.cmpi eq, %arg0, %c0_i32_35 : i32
    %94 = arith.extui %93 : i1 to i32
    %c0_i32_36 = arith.constant 0 : i32
    %95 = arith.cmpi ne, %94, %c0_i32_36 : i32
    scf.if %95 {
      %101 = arith.index_cast %arg1 : i32 to index
      %c0_40 = arith.constant 0 : index
      %102 = vector.load %arg12[%101, %c0_40] : memref<1x256xf32, #tpu.memory_space<vmem>>, vector<1x256xf32>
      %103 = arith.index_cast %arg1 : i32 to index
      %c0_41 = arith.constant 0 : index
      %104 = vector.load %arg13[%103, %c0_41] : memref<1x256xf32, #tpu.memory_space<vmem>>, vector<1x256xf32>
      %105 = math.log %104 : vector<1x256xf32>
      %106 = arith.addf %102, %105 : vector<1x256xf32>
      %cst_42 = arith.constant 0.000000e+00 : f32
      %107 = vector.broadcast %cst_42 : f32 to vector<1x256xf32>
      %108 = arith.select %33, %106, %107 : vector<1x256xi1>, vector<1x256xf32>
      %c0_43 = arith.constant 0 : index
      %c0_44 = arith.constant 0 : index
      %109 = vector.load %arg14[%c0_43, %c0_44] : memref<1x1xf32, #tpu.memory_space<vmem>>, vector<1x1xf32>
      %110 = vector.shape_cast %108 : vector<1x256xf32> to vector<1x1x256xf32>
      %cst_45 = arith.constant dense<0.000000e+00> : vector<1xf32>
      %111 = vector.multi_reduction <add>, %110, %cst_45 [1, 2] : vector<1x1x256xf32> to vector<1xf32>
      %112 = vector.shape_cast %111 : vector<1xf32> to vector<1x1x1xf32>
      %113 = vector.extract %112[0, 0, 0] : f32 from vector<1x1x1xf32>
      %114 = vector.broadcast %113 : f32 to vector<1x1xf32>
      %115 = arith.addf %109, %114 : vector<1x1xf32>
      %c0_46 = arith.constant 0 : index
      %c0_47 = arith.constant 0 : index
      %116 = vector.load %arg14[%c0_46, %c0_47] : memref<1x1xf32, #tpu.memory_space<vmem>>, vector<1x1xf32>
      tpu.vector_store %arg14[%c0_46, %c0_47], %115 {strides = array<i32>} : memref<1x1xf32, #tpu.memory_space<vmem>>, vector<1x1xf32>,
    } else {
    }
    %c0_i32_37 = arith.constant 0 : i32
    %96 = arith.cmpi eq, %arg0, %c0_i32_37 : i32
    %c0_i32_38 = arith.constant 0 : i32
    %97 = arith.cmpi eq, %arg1, %c0_i32_38 : i32
    %98 = arith.andi %96, %97 : i1
    %99 = arith.extui %98 : i1 to i32
    %c0_i32_39 = arith.constant 0 : i32
    %100 = arith.cmpi ne, %99, %c0_i32_39 : i32
    scf.if %100 {
      %c0_40 = arith.constant 0 : index
      %101 = memref.load %arg3[%c0_40] : memref<1xi32, #tpu.memory_space<smem>>
      %102 = arith.sitofp %101 : i32 to f32
      %c0_41 = arith.constant 0 : index
      %c0_42 = arith.constant 0 : index
      %103 = vector.load %arg14[%c0_41, %c0_42] : memref<1x1xf32, #tpu.memory_space<vmem>>, vector<1x1xf32>
      %cst_43 = arith.constant 5.000000e-01 : f32
      %104 = arith.divf %cst_43, %102 : f32
      %105 = vector.broadcast %104 : f32 to vector<1x1xf32>
      %106 = arith.mulf %103, %105 : vector<1x1xf32>
      %c0_44 = arith.constant 0 : index
      %c0_45 = arith.constant 0 : index
      %107 = vector.load %arg6[%c0_44, %c0_45] : memref<1x1xf32, #tpu.memory_space<vmem>>, vector<1x1xf32>
      tpu.vector_store %arg6[%c0_44, %c0_45], %106 {strides = array<i32>} : memref<1x1xf32, #tpu.memory_space<vmem>>, vector<1x1xf32>,
    } else {
    }
    return
  }
  func.func @transform_0(%arg0: i32, %arg1: i32) -> i32 {
    %c0_i32 = arith.constant 0 : i32
    %c0_i32_0 = arith.constant 0 : i32
    return %c0_i32 : i32
  }
  func.func @transform_1(%arg0: i32, %arg1: i32) -> i32 {
    %c0_i32 = arith.constant 0 : i32
    %c0_i32_0 = arith.constant 0 : i32
    return %c0_i32 : i32
  }
  func.func @transform_2(%arg0: i32, %arg1: i32) -> (i32, i32) {
    %c0_i32 = arith.constant 0 : i32
    %c0_i32_0 = arith.constant 0 : i32
    return %arg0, %c0_i32 : i32, i32
  }
  func.func @transform_4(%arg0: i32, %arg1: i32) -> (i32, i32) {
    %c0_i32 = arith.constant 0 : i32
    %c0_i32_0 = arith.constant 0 : i32
    %c0_i32_1 = arith.constant 0 : i32
    return %c0_i32, %c0_i32_0 : i32, i32
  }
  func.func @transform_5(%arg0: i32, %arg1: i32) -> (i32, i32) {
    %c0_i32 = arith.constant 0 : i32
    return %arg0, %arg1 : i32, i32
  }
}

</mosaic_0001>

<llo_original>
// kernel: tpu_custom_call.1
$region0: #{tpu_custom_call.1}
  #allocation0 [shape = 'u32[]', space=smem, size = 0x4, offset = 0x4, fixed_abs, tag = 'smem constant byte address 0x4 - core index']
  #allocation1 [shape = 'u32[144,128]{1,0:T(1,128)}', space=vmem, size = 0x12000, scoped, tag = 'internal scratch']
  #allocation2 [shape = 'f32[256,128]{1,0:T(8,128)}', space=vmem, size = 0x20000, scoped, tag = 'scratch operand']
  #allocation3 [shape = 's32[1]{0}', space=sflag, size = 0x4, scoped, tag = 'scratch operand']
  #allocation4 [shape = 'f32[256,1]{1,0:T(8,128)}', space=vmem, size = 0x20000, scoped, tag = 'scratch operand']
  #allocation5 [shape = 'f32[256,1]{1,0:T(8,128)}', space=vmem, size = 0x20000, scoped, tag = 'scratch operand']
  #allocation6 [shape = 'f32[1,256]{1,0:T(1,128)}', space=vmem, size = 0x400, scoped, tag = 'scratch operand']
  #allocation7 [shape = 'f32[1,256]{1,0:T(1,128)}', space=vmem, size = 0x400, scoped, tag = 'scratch operand']
  #allocation8 [shape = 'f32[1,1]{1,0:T(1,128)}', space=vmem, size = 0x200, scoped, tag = 'scratch operand']
  #allocation9 [shape = 'f32[1]{0:T(128)S(6)}', space=smem, size = 0x200, scoped, tag = 'scoped memory for tpu_custom_call.1']
  #allocation10 [shape = 's32[1]{0:T(128)S(6)}', space=smem, size = 0x200, scoped, tag = 'scoped memory for tpu_custom_call.1']
  #allocation17 [shape = 's32[]', space=sflag, size = 0x4, offset = 0, fixed_abs, tag = 'sflag constant byte address 0x0 - dummy sync flag']
  #allocation18 [shape = 's32[]', space=sflag, size = 0x4, offset = 0, fixed_abs, tag = 'sflag constant byte address 0x0 - dummy sync flag']
  #allocation19 [shape = 'u32[]', space=smem, size = 0x4, offset = 0x44, fixed_abs, tag = 'smem constant byte address 0x44 - assertion arg 0']
  #allocation20 [shape = 'u32[]', space=smem, size = 0x4, offset = 0x48, fixed_abs, tag = 'smem constant byte address 0x48 - assertion arg 1']
  %s0 = inlined_call_operand.<no memory space> [shape: f32[1], index: 0, kind: input, shape index: {}]
  %s1 = inlined_call_operand.<no memory space> [shape: s32[1], index: 1, kind: input, shape index: {}]
  %s2 = inlined_call_operand.hbm [shape: f32[256,128], index: 2, kind: input, shape index: {}]
  %s3 = inlined_call_operand.hbm [shape: f32[256,128], index: 3, kind: input, shape index: {}]
  %s4 = inlined_call_operand.hbm [shape: f32[1,1], index: 4, kind: output, shape index: {0}]
  %s5 = inlined_call_operand.hbm [shape: f32[256,256], index: 5, kind: output, shape index: {1}]
  %6 = xla_tuple %s4, %s5
  %s7 = sld [smem:[#allocation0]]
  $region66: #{tpu_custom_call.1} parent=0
    _
  %s9 = ssub.s32 1, %s7
  %s10 = scalar_select 0, %s9, %s7
  %11 = sst [smem:[#allocation9]] %s0
  %12 = sst [smem:[#allocation10]] %s1
  $region1: #{tpu_custom_call.1} parent=0
    #allocation11 [shape = 'u8[131072]{0}', space=vmem, size = 0x20000, scoped, tag = 'input window, operand 2, single buffered']
    #allocation12 [shape = 's32[1]{0}', space=sflag, size = 0x4, scoped, tag = 'scoped memory for tpu_custom_call.1']
    #allocation13 [shape = 's32[1]{0}', space=sflag, size = 0x4, scoped, tag = 'scoped memory for tpu_custom_call.1']
    #allocation14 [shape = 'u8[512]{0}', space=vmem, size = 0x400, scoped, tag = 'output window, operand 0, single buffered']
    #allocation15 [shape = 'u8[262144]{0}', space=vmem, size = 0x40000, scoped, tag = 'output window, operand 1, single buffered']
    #allocation16 [shape = 's32[1]{0}', space=sflag, size = 0x4, scoped, tag = 'scoped memory for tpu_custom_call.1']
    %13 = vsyncpa [#allocation12], 0
    %14 = vsyncpa [#allocation13], 0
    %15 = vsyncpa [#allocation16], 0
    // Predicated region
    $region2: #{tpu_custom_call.1} parent=1 // pred_check
      _
    $region3: #{tpu_custom_call.1} parent=1 // pred_check_branch
      %17 = sbr.rel (0) target = $region5
    $region4: #{tpu_custom_call.1} parent=1 // pred_region
      _
    $region5: #{tpu_custom_call.1} parent=1 // pred_fallthru
      _
    // Predicated region
    $region6: #{tpu_custom_call.1} parent=1 // pred_check
      _
    $region7: #{tpu_custom_call.1} parent=1 // pred_check_branch
      %19 = sbr.rel (0) target = $region9
    $region8: #{tpu_custom_call.1} parent=1 // pred_region
      _
    $region9: #{tpu_custom_call.1} parent=1 // pred_fallthru
      _
    // Predicated region
    $region10: #{tpu_custom_call.1} parent=1 // pred_check
      _
    $region11: #{tpu_custom_call.1} parent=1 // pred_check_branch
      %21 = sbr.rel (0) target = $region13
    $region12: #{tpu_custom_call.1} parent=1 // pred_region
      %s23 = ssub.s32 4096, 4096
      %24 = vsyncadd [#allocation12], %s23
      %s25 = sshll.u32 [#allocation11], 4
      %s26 = int_to_ptr.vmem [resolvable:$true] %s25
      %31 = dma.hbm_to_vmem [thread:$0]  %s2, 4096, %s26, [#allocation12], 128, 128, 8
    $region13: #{tpu_custom_call.1} parent=1 // pred_fallthru
      _
    // Predicated region
    $region14: #{tpu_custom_call.1} parent=1 // pred_check
      _
    $region15: #{tpu_custom_call.1} parent=1 // pred_check_branch
      %33 = sbr.rel (0) target = $region17
    $region16: #{tpu_custom_call.1} parent=1 // pred_region
      %34 = dma.done [#allocation12], 4096
    $region17: #{tpu_custom_call.1} parent=1 // pred_fallthru
      _
    %s35 = sld [smem:[#allocation9]]
    %p36 = scmp.eq.s32.totalorder 0, 0
    %p37 = scmp.eq.s32.totalorder 0, 0
    %p38 = pnand %p36, %p37
    %p39 = pneg %p38
    // Predicated region
    $region18: #{tpu_custom_call.1} parent=1 // pred_check
      _
    $region19: #{tpu_custom_call.1} parent=1 // pred_check_branch
      %41 = sbr.rel (%p38) target = $region21
    $region20: #{tpu_custom_call.1} parent=1 // pred_region
      %vm42 = vcmask 0
      %43 = vst.msk [vmem:[#allocation8] sm:$0x1] %vm42, 0.0
      %44 = vst.msk [vmem:[#allocation14] sm:$0x1] %vm42, 0.0
      // Predicated region
      $region22: #{tpu_custom_call.1} parent=20 // pred_check
        _
      $region23: #{tpu_custom_call.1} parent=20 // pred_check_branch
        %46 = sbr.rel target = $region25
      $region24: #{tpu_custom_call.1} parent=20 // pred_region
        %47 = sst [smem:[#allocation19]] [#allocation18]
        %48 = sst [smem:[#allocation20]] [#allocation17]
      $region25: #{tpu_custom_call.1} parent=20 // pred_fallthru
        _
      %50 = shalt.err (0)
      %s52 = sshll.u32 [#allocation2], 4
      %s53 = int_to_ptr.vmem [resolvable:$true] %s52
      %55 = dma.hbm_to_vmem [thread:$0]  %s3, 4096, %s53, [#allocation3]
      %s56 = smul.u32 256, 1
      %s57 = sshll.u32 %s56, 4
      %58 = dma.done [#allocation3], %s57
    $region21: #{tpu_custom_call.1} parent=1 // pred_fallthru
      _
    // Predicated region
    $region26: #{tpu_custom_call.1} parent=1 // pred_check
      %p59 = pneg %p37
    $region27: #{tpu_custom_call.1} parent=1 // pred_check_branch
      %61 = sbr.rel (%p59) target = $region29
    $region28: #{tpu_custom_call.1} parent=1 // pred_region
      %vm62 = vcmask 7168
      %63 = vst.msk [vmem:[#allocation4] sm:$0xff] %vm62, -1e+30
      %64 = vst.msk [vmem:[#allocation4 + $0x8] sm:$0xff] %vm62, -1e+30
      %65 = vst.msk [vmem:[#allocation4 + $0x10] sm:$0xff] %vm62, -1e+30
      %66 = vst.msk [vmem:[#allocation4 + $0x18] sm:$0xff] %vm62, -1e+30
      %67 = vst.msk [vmem:[#allocation4 + $0x20] sm:$0xff] %vm62, -1e+30
      %68 = vst.msk [vmem:[#allocation4 + $0x28] sm:$0xff] %vm62, -1e+30
      %69 = vst.msk [vmem:[#allocation4 + $0x30] sm:$0xff] %vm62, -1e+30
      %70 = vst.msk [vmem:[#allocation4 + $0x38] sm:$0xff] %vm62, -1e+30
      %71 = vst.msk [vmem:[#allocation4 + $0x40] sm:$0xff] %vm62, -1e+30
      %72 = vst.msk [vmem:[#allocation4 + $0x48] sm:$0xff] %vm62, -1e+30
      %73 = vst.msk [vmem:[#allocation4 + $0x50] sm:$0xff] %vm62, -1e+30
      %74 = vst.msk [vmem:[#allocation4 + $0x58] sm:$0xff] %vm62, -1e+30
      %75 = vst.msk [vmem:[#allocation4 + $0x60] sm:$0xff] %vm62, -1e+30
      %76 = vst.msk [vmem:[#allocation4 + $0x68] sm:$0xff] %vm62, -1e+30
      %77 = vst.msk [vmem:[#allocation4 + $0x70] sm:$0xff] %vm62, -1e+30
      %78 = vst.msk [vmem:[#allocation4 + $0x78] sm:$0xff] %vm62, -1e+30
      %79 = vst.msk [vmem:[#allocation4 + $0x80] sm:$0xff] %vm62, -1e+30
      %80 = vst.msk [vmem:[#allocation4 + $0x88] sm:$0xff] %vm62, -1e+30
      %81 = vst.msk [vmem:[#allocation4 + $0x90] sm:$0xff] %vm62, -1e+30
      %82 = vst.msk [vmem:[#allocation4 + $0x98] sm:$0xff] %vm62, -1e+30
      %83 = vst.msk [vmem:[#allocation4 + $0xa0] sm:$0xff] %vm62, -1e+30
      %84 = vst.msk [vmem:[#allocation4 + $0xa8] sm:$0xff] %vm62, -1e+30
      %85 = vst.msk [vmem:[#allocation4 + $0xb0] sm:$0xff] %vm62, -1e+30
      %86 = vst.msk [vmem:[#allocation4 + $0xb8] sm:$0xff] %vm62, -1e+30
      %87 = vst.msk [vmem:[#allocation4 + $0xc0] sm:$0xff] %vm62, -1e+30
      %88 = vst.msk [vmem:[#allocation4 + $0xc8] sm:$0xff] %vm62, -1e+30
      %89 = vst.msk [vmem:[#allocation4 + $0xd0] sm:$0xff] %vm62, -1e+30
      %90 = vst.msk [vmem:[#allocation4 + $0xd8] sm:$0xff] %vm62, -1e+30
      %91 = vst.msk [vmem:[#allocation4 + $0xe0] sm:$0xff] %vm62, -1e+30
      %92 = vst.msk [vmem:[#allocation4 + $0xe8] sm:$0xff] %vm62, -1e+30
      %93 = vst.msk [vmem:[#allocation4 + $0xf0] sm:$0xff] %vm62, -1e+30
      %94 = vst.msk [vmem:[#allocation4 + $0xf8] sm:$0xff] %vm62, -1e+30
      %95 = vst.msk [vmem:[#allocation5] sm:$0xff] %vm62, 0.0
      %96 = vst.msk [vmem:[#allocation5 + $0x8] sm:$0xff] %vm62, 0.0
      %97 = vst.msk [vmem:[#allocation5 + $0x10] sm:$0xff] %vm62, 0.0
      %98 = vst.msk [vmem:[#allocation5 + $0x18] sm:$0xff] %vm62, 0.0
      %99 = vst.msk [vmem:[#allocation5 + $0x20] sm:$0xff] %vm62, 0.0
      %100 = vst.msk [vmem:[#allocation5 + $0x28] sm:$0xff] %vm62, 0.0
      %101 = vst.msk [vmem:[#allocation5 + $0x30] sm:$0xff] %vm62, 0.0
      %102 = vst.msk [vmem:[#allocation5 + $0x38] sm:$0xff] %vm62, 0.0
      %103 = vst.msk [vmem:[#allocation5 + $0x40] sm:$0xff] %vm62, 0.0
      %104 = vst.msk [vmem:[#allocation5 + $0x48] sm:$0xff] %vm62, 0.0
      %105 = vst.msk [vmem:[#allocation5 + $0x50] sm:$0xff] %vm62, 0.0
      %106 = vst.msk [vmem:[#allocation5 + $0x58] sm:$0xff] %vm62, 0.0
      %107 = vst.msk [vmem:[#allocation5 + $0x60] sm:$0xff] %vm62, 0.0
      %108 = vst.msk [vmem:[#allocation5 + $0x68] sm:$0xff] %vm62, 0.0
      %109 = vst.msk [vmem:[#allocation5 + $0x70] sm:$0xff] %vm62, 0.0
      %110 = vst.msk [vmem:[#allocation5 + $0x78] sm:$0xff] %vm62, 0.0
      %111 = vst.msk [vmem:[#allocation5 + $0x80] sm:$0xff] %vm62, 0.0
      %112 = vst.msk [vmem:[#allocation5 + $0x88] sm:$0xff] %vm62, 0.0
      %113 = vst.msk [vmem:[#allocation5 + $0x90] sm:$0xff] %vm62, 0.0
      %114 = vst.msk [vmem:[#allocation5 + $0x98] sm:$0xff] %vm62, 0.0
      %115 = vst.msk [vmem:[#allocation5 + $0xa0] sm:$0xff] %vm62, 0.0
      %116 = vst.msk [vmem:[#allocation5 + $0xa8] sm:$0xff] %vm62, 0.0
      %117 = vst.msk [vmem:[#allocation5 + $0xb0] sm:$0xff] %vm62, 0.0
      %118 = vst.msk [vmem:[#allocation5 + $0xb8] sm:$0xff] %vm62, 0.0
      %119 = vst.msk [vmem:[#allocation5 + $0xc0] sm:$0xff] %vm62, 0.0
      %120 = vst.msk [vmem:[#allocation5 + $0xc8] sm:$0xff] %vm62, 0.0
      %121 = vst.msk [vmem:[#allocation5 + $0xd0] sm:$0xff] %vm62, 0.0
      %122 = vst.msk [vmem:[#allocation5 + $0xd8] sm:$0xff] %vm62, 0.0
      %123 = vst.msk [vmem:[#allocation5 + $0xe0] sm:$0xff] %vm62, 0.0
      %124 = vst.msk [vmem:[#allocation5 + $0xe8] sm:$0xff] %vm62, 0.0
      %125 = vst.msk [vmem:[#allocation5 + $0xf0] sm:$0xff] %vm62, 0.0
      %126 = vst.msk [vmem:[#allocation5 + $0xf8] sm:$0xff] %vm62, 0.0
    $region29: #{tpu_custom_call.1} parent=1 // pred_fallthru
      _
    // Predicated region
    $region30: #{tpu_custom_call.1} parent=1 // pred_check
      %p127 = pneg %p36
    $region31: #{tpu_custom_call.1} parent=1 // pred_check_branch
      %129 = sbr.rel (%p127) target = $region33
    $region32: #{tpu_custom_call.1} parent=1 // pred_region
      %s130 = smul.u32 0, 2
      %s131 = scalar_lea.vmem [#allocation6], %s130
      %v132 = vlaneseq
      %vm133 = vcmp.ge.s32.totalorder %v132, 0
      %vm134 = vcmp.lt.s32.totalorder %v132, 256
      %vm135 = vmand %vm133, %vm134
      %136 = vst.msk [vmem:[%s131] sm:$0x3] %vm135, -1e+30
      %s137 = scalar_lea.vmem [#allocation7], %s130
      %138 = vst.msk [vmem:[%s137] sm:$0x3] %vm135, 0.0
    $region33: #{tpu_custom_call.1} parent=1 // pred_fallthru
      _
    %s139 = smul.u32 0, 256
    %s140 = scalar_lea.vmem [#allocation2], %s139
    %v141 = vld [vmem:[%s140] sm:$0xff]
    %v142 = vld [vmem:[%s140 + $0x8] sm:$0xff]
    %v143 = vld [vmem:[%s140 + $0x10] sm:$0xff]
    %v144 = vld [vmem:[%s140 + $0x18] sm:$0xff]
    %v145 = vld [vmem:[%s140 + $0x20] sm:$0xff]
    %v146 = vld [vmem:[%s140 + $0x28] sm:$0xff]
    %v147 = vld [vmem:[%s140 + $0x30] sm:$0xff]
    %v148 = vld [vmem:[%s140 + $0x38] sm:$0xff]
    %v149 = vld [vmem:[%s140 + $0x40] sm:$0xff]
    %v150 = vld [vmem:[%s140 + $0x48] sm:$0xff]
    %v151 = vld [vmem:[%s140 + $0x50] sm:$0xff]
    %v152 = vld [vmem:[%s140 + $0x58] sm:$0xff]
    %v153 = vld [vmem:[%s140 + $0x60] sm:$0xff]
    %v154 = vld [vmem:[%s140 + $0x68] sm:$0xff]
    %v155 = vld [vmem:[%s140 + $0x70] sm:$0xff]
    %v156 = vld [vmem:[%s140 + $0x78] sm:$0xff]
    %v157 = vld [vmem:[%s140 + $0x80] sm:$0xff]
    %v158 = vld [vmem:[%s140 + $0x88] sm:$0xff]
    %v159 = vld [vmem:[%s140 + $0x90] sm:$0xff]
    %v160 = vld [vmem:[%s140 + $0x98] sm:$0xff]
    %v161 = vld [vmem:[%s140 + $0xa0] sm:$0xff]
    %v162 = vld [vmem:[%s140 + $0xa8] sm:$0xff]
    %v163 = vld [vmem:[%s140 + $0xb0] sm:$0xff]
    %v164 = vld [vmem:[%s140 + $0xb8] sm:$0xff]
    %v165 = vld [vmem:[%s140 + $0xc0] sm:$0xff]
    %v166 = vld [vmem:[%s140 + $0xc8] sm:$0xff]
    %v167 = vld [vmem:[%s140 + $0xd0] sm:$0xff]
    %v168 = vld [vmem:[%s140 + $0xd8] sm:$0xff]
    %v169 = vld [vmem:[%s140 + $0xe0] sm:$0xff]
    %v170 = vld [vmem:[%s140 + $0xe8] sm:$0xff]
    %v171 = vld [vmem:[%s140 + $0xf0] sm:$0xff]
    %v172 = vld [vmem:[%s140 + $0xf8] sm:$0xff]
    %v173 = vld [vmem:[#allocation11] sm:$0xff]
    %v174 = vld [vmem:[#allocation11 + $0x8] sm:$0xff]
    %v175 = vld [vmem:[#allocation11 + $0x10] sm:$0xff]
    %v176 = vld [vmem:[#allocation11 + $0x18] sm:$0xff]
    %v177 = vld [vmem:[#allocation11 + $0x20] sm:$0xff]
    %v178 = vld [vmem:[#allocation11 + $0x28] sm:$0xff]
    %v179 = vld [vmem:[#allocation11 + $0x30] sm:$0xff]
    %v180 = vld [vmem:[#allocation11 + $0x38] sm:$0xff]
    %v181 = vld [vmem:[#allocation11 + $0x40] sm:$0xff]
    %v182 = vld [vmem:[#allocation11 + $0x48] sm:$0xff]
    %v183 = vld [vmem:[#allocation11 + $0x50] sm:$0xff]
    %v184 = vld [vmem:[#allocation11 + $0x58] sm:$0xff]
    %v185 = vld [vmem:[#allocation11 + $0x60] sm:$0xff]
    %v186 = vld [vmem:[#allocation11 + $0x68] sm:$0xff]
    %v187 = vld [vmem:[#allocation11 + $0x70] sm:$0xff]
    %v188 = vld [vmem:[#allocation11 + $0x78] sm:$0xff]
    %v189 = vld [vmem:[#allocation11 + $0x80] sm:$0xff]
    %v190 = vld [vmem:[#allocation11 + $0x88] sm:$0xff]
    %v191 = vld [vmem:[#allocation11 + $0x90] sm:$0xff]
    %v192 = vld [vmem:[#allocation11 + $0x98] sm:$0xff]
    %v193 = vld [vmem:[#allocation11 + $0xa0] sm:$0xff]
    %v194 = vld [vmem:[#allocation11 + $0xa8] sm:$0xff]
    %v195 = vld [vmem:[#allocation11 + $0xb0] sm:$0xff]
    %v196 = vld [vmem:[#allocation11 + $0xb8] sm:$0xff]
    %v197 = vld [vmem:[#allocation11 + $0xc0] sm:$0xff]
    %v198 = vld [vmem:[#allocation11 + $0xc8] sm:$0xff]
    %v199 = vld [vmem:[#allocation11 + $0xd0] sm:$0xff]
    %v200 = vld [vmem:[#allocation11 + $0xd8] sm:$0xff]
    %v201 = vld [vmem:[#allocation11 + $0xe0] sm:$0xff]
    %v202 = vld [vmem:[#allocation11 + $0xe8] sm:$0xff]
    %v203 = vld [vmem:[#allocation11 + $0xf0] sm:$0xff]
    %v204 = vld [vmem:[#allocation11 + $0xf8] sm:$0xff]
    %205 = vmatprep.subr.mxu0 0.0
    %206 = vmatpush1.xpose.msra.mxu0 %v141
    %207 = vmatprep.subr.mxu0 0.0
    %208 = vmatpush1.xpose.msra.mxu0 %v142
    %209 = vmatprep.subr.mxu0 0.0
    %210 = vmatpush1.xpose.msra.mxu0 %v143
    %211 = vmatprep.subr.mxu0 0.0
    %212 = vmatpush1.xpose.msra.mxu0 %v144
    %213 = vmatprep.subr.mxu0 0.0
    %214 = vmatpush1.xpose.msra.mxu0 %v145
    %215 = vmatprep.subr.mxu0 0.0
    %216 = vmatpush1.xpose.msra.mxu0 %v146
    %217 = vmatprep.subr.mxu0 0.0
    %218 = vmatpush1.xpose.msra.mxu0 %v147
    %219 = vmatprep.subr.mxu0 0.0
    %220 = vmatpush1.xpose.msra.mxu0 %v148
    %221 = vmatprep.subr.mxu0 0.0
    %222 = vmatpush1.xpose.msra.mxu0 %v149
    %223 = vmatprep.subr.mxu0 0.0
    %224 = vmatpush1.xpose.msra.mxu0 %v150
    %225 = vmatprep.subr.mxu0 0.0
    %226 = vmatpush1.xpose.msra.mxu0 %v151
    %227 = vmatprep.subr.mxu0 0.0
    %228 = vmatpush1.xpose.msra.mxu0 %v152
    %229 = vmatprep.subr.mxu0 0.0
    %230 = vmatpush1.xpose.msra.mxu0 %v153
    %231 = vmatprep.subr.mxu0 0.0
    %232 = vmatpush1.xpose.msra.mxu0 %v154
    %233 = vmatprep.subr.mxu0 0.0
    %234 = vmatpush1.xpose.msra.mxu0 %v155
    %235 = vmatprep.subr.mxu0 0.0
    %236 = vmatpush1.xpose.msra.mxu0 %v156
    %237 = vmatprep.subr.mxu0 0.0
    %238 = vmatpush1.xpose.msra.mxu0 %v157
    %239 = vmatprep.subr.mxu0 0.0
    %240 = vmatpush1.xpose.msra.mxu0 %v158
    %241 = vmatprep.subr.mxu0 0.0
    %242 = vmatpush1.xpose.msra.mxu0 %v159
    %243 = vmatprep.subr.mxu0 0.0
    %244 = vmatpush1.xpose.msra.mxu0 %v160
    %245 = vmatprep.subr.mxu0 0.0
    %246 = vmatpush1.xpose.msra.mxu0 %v161
    %247 = vmatprep.subr.mxu0 0.0
    %248 = vmatpush1.xpose.msra.mxu0 %v162
    %249 = vmatprep.subr.mxu0 0.0
    %250 = vmatpush1.xpose.msra.mxu0 %v163
    %251 = vmatprep.subr.mxu0 0.0
    %252 = vmatpush1.xpose.msra.mxu0 %v164
    %253 = vmatprep.subr.mxu0 0.0
    %254 = vmatpush1.xpose.msra.mxu0 %v165
    %255 = vmatprep.subr.mxu0 0.0
    %256 = vmatpush1.xpose.msra.mxu0 %v166
    %257 = vmatprep.subr.mxu0 0.0
    %258 = vmatpush1.xpose.msra.mxu0 %v167
    %259 = vmatprep.subr.mxu0 0.0
    %260 = vmatpush1.xpose.msra.mxu0 %v168
    %261 = vmatprep.subr.mxu0 0.0
    %262 = vmatpush1.xpose.msra.mxu0 %v169
    %263 = vmatprep.subr.mxu0 0.0
    %264 = vmatpush1.xpose.msra.mxu0 %v170
    %265 = vmatprep.subr.mxu0 0.0
    %266 = vmatpush1.xpose.msra.mxu0 %v171
    %267 = vmatprep.subr.mxu0 0.0
    %268 = vmatpush1.xpose.msra.mxu0 %v172
    %269 = vmatprep.mubr.f32.mxu0 0.0
    %270 = vmatmul.mubr.f32.gmra.mrb[0].mxu0 %v173
    %v271 = vpop.f32.mrb[0].mxu0
    %v272 = vadd.f32 0.0, %v271
    %v273 = vpop.f32.mrb[0].mxu0
    %v274 = vadd.f32 0.0, %v273
    %275 = vmatprep.mubr.f32.mxu0 0.0
    %276 = vmatmul.mubr.f32.gmra.mrb[0].mxu0 %v174
    %v277 = vpop.f32.mrb[0].mxu0
    %v278 = vadd.f32 0.0, %v277
    %v279 = vpop.f32.mrb[0].mxu0
    %v280 = vadd.f32 0.0, %v279
    %281 = vmatprep.mubr.f32.mxu0 0.0
    %282 = vmatmul.mubr.f32.gmra.mrb[0].mxu0 %v175
    %v283 = vpop.f32.mrb[0].mxu0
    %v284 = vadd.f32 0.0, %v283
    %v285 = vpop.f32.mrb[0].mxu0
    %v286 = vadd.f32 0.0, %v285
    %287 = vmatprep.mubr.f32.mxu0 0.0
    %288 = vmatmul.mubr.f32.gmra.mrb[0].mxu0 %v176
    %v289 = vpop.f32.mrb[0].mxu0
    %v290 = vadd.f32 0.0, %v289
    %v291 = vpop.f32.mrb[0].mxu0
    %v292 = vadd.f32 0.0, %v291
    %293 = vmatprep.mubr.f32.mxu0 0.0
    %294 = vmatmul.mubr.f32.gmra.mrb[0].mxu0 %v177
    %v295 = vpop.f32.mrb[0].mxu0
    %v296 = vadd.f32 0.0, %v295
    %v297 = vpop.f32.mrb[0].mxu0
    %v298 = vadd.f32 0.0, %v297
    %299 = vmatprep.mubr.f32.mxu0 0.0
    %300 = vmatmul.mubr.f32.gmra.mrb[0].mxu0 %v178
    %v301 = vpop.f32.mrb[0].mxu0
    %v302 = vadd.f32 0.0, %v301
    %v303 = vpop.f32.mrb[0].mxu0
    %v304 = vadd.f32 0.0, %v303
    %305 = vmatprep.mubr.f32.mxu0 0.0
    %306 = vmatmul.mubr.f32.gmra.mrb[0].mxu0 %v179
    %v307 = vpop.f32.mrb[0].mxu0
    %v308 = vadd.f32 0.0, %v307
    %v309 = vpop.f32.mrb[0].mxu0
    %v310 = vadd.f32 0.0, %v309
    %311 = vmatprep.mubr.f32.mxu0 0.0
    %312 = vmatmul.mubr.f32.gmra.mrb[0].mxu0 %v180
    %v313 = vpop.f32.mrb[0].mxu0
    %v314 = vadd.f32 0.0, %v313
    %v315 = vpop.f32.mrb[0].mxu0
    %v316 = vadd.f32 0.0, %v315
    %317 = vmatprep.mubr.f32.mxu0 0.0
    %318 = vmatmul.mubr.f32.gmra.mrb[0].mxu0 %v181
    %v319 = vpop.f32.mrb[0].mxu0
    %v320 = vadd.f32 0.0, %v319
    %v321 = vpop.f32.mrb[0].mxu0
    %v322 = vadd.f32 0.0, %v321
    %323 = vmatprep.mubr.f32.mxu0 0.0
    %324 = vmatmul.mubr.f32.gmra.mrb[0].mxu0 %v182
    %v325 = vpop.f32.mrb[0].mxu0
    %v326 = vadd.f32 0.0, %v325
    %v327 = vpop.f32.mrb[0].mxu0
    %v328 = vadd.f32 0.0, %v327
    %329 = vmatprep.mubr.f32.mxu0 0.0
    %330 = vmatmul.mubr.f32.gmra.mrb[0].mxu0 %v183
    %v331 = vpop.f32.mrb[0].mxu0
    %v332 = vadd.f32 0.0, %v331
    %v333 = vpop.f32.mrb[0].mxu0
    %v334 = vadd.f32 0.0, %v333
    %335 = vmatprep.mubr.f32.mxu0 0.0
    %336 = vmatmul.mubr.f32.gmra.mrb[0].mxu0 %v184
    %v337 = vpop.f32.mrb[0].mxu0
    %v338 = vadd.f32 0.0, %v337
    %v339 = vpop.f32.mrb[0].mxu0
    %v340 = vadd.f32 0.0, %v339
    %341 = vmatprep.mubr.f32.mxu0 0.0
    %342 = vmatmul.mubr.f32.gmra.mrb[0].mxu0 %v185
    %v343 = vpop.f32.mrb[0].mxu0
    %v344 = vadd.f32 0.0, %v343
    %v345 = vpop.f32.mrb[0].mxu0
    %v346 = vadd.f32 0.0, %v345
    %347 = vmatprep.mubr.f32.mxu0 0.0
    %348 = vmatmul.mubr.f32.gmra.mrb[0].mxu0 %v186
    %v349 = vpop.f32.mrb[0].mxu0
    %v350 = vadd.f32 0.0, %v349
    %v351 = vpop.f32.mrb[0].mxu0
    %v352 = vadd.f32 0.0, %v351
    %353 = vmatprep.mubr.f32.mxu0 0.0
    %354 = vmatmul.mubr.f32.gmra.mrb[0].mxu0 %v187
    %v355 = vpop.f32.mrb[0].mxu0
    %v356 = vadd.f32 0.0, %v355
    %v357 = vpop.f32.mrb[0].mxu0
    %v358 = vadd.f32 0.0, %v357
    %359 = vmatprep.mubr.f32.mxu0 0.0
    %360 = vmatmul.mubr.f32.gmra.mrb[0].mxu0 %v188
    %v361 = vpop.f32.mrb[0].mxu0
    %v362 = vadd.f32 0.0, %v361
    %v363 = vpop.f32.mrb[0].mxu0
    %v364 = vadd.f32 0.0, %v363
    %365 = vmatprep.mubr.f32.mxu0 0.0
    %366 = vmatmul.mubr.f32.gmra.mrb[0].mxu0 %v189
    %v367 = vpop.f32.mrb[0].mxu0
    %v368 = vadd.f32 0.0, %v367
    %v369 = vpop.f32.mrb[0].mxu0
    %v370 = vadd.f32 0.0, %v369
    %371 = vmatprep.mubr.f32.mxu0 0.0
    %372 = vmatmul.mubr.f32.gmra.mrb[0].mxu0 %v190
    %v373 = vpop.f32.mrb[0].mxu0
    %v374 = vadd.f32 0.0, %v373
    %v375 = vpop.f32.mrb[0].mxu0
    %v376 = vadd.f32 0.0, %v375
    %377 = vmatprep.mubr.f32.mxu0 0.0
    %378 = vmatmul.mubr.f32.gmra.mrb[0].mxu0 %v191
    %v379 = vpop.f32.mrb[0].mxu0
    %v380 = vadd.f32 0.0, %v379
    %v381 = vpop.f32.mrb[0].mxu0
    %v382 = vadd.f32 0.0, %v381
    %383 = vmatprep.mubr.f32.mxu0 0.0
    %384 = vmatmul.mubr.f32.gmra.mrb[0].mxu0 %v192
    %v385 = vpop.f32.mrb[0].mxu0
    %v386 = vadd.f32 0.0, %v385
    %v387 = vpop.f32.mrb[0].mxu0
    %v388 = vadd.f32 0.0, %v387
    %389 = vmatprep.mubr.f32.mxu0 0.0
    %390 = vmatmul.mubr.f32.gmra.mrb[0].mxu0 %v193
    %v391 = vpop.f32.mrb[0].mxu0
    %v392 = vadd.f32 0.0, %v391
    %v393 = vpop.f32.mrb[0].mxu0
    %v394 = vadd.f32 0.0, %v393
    %395 = vmatprep.mubr.f32.mxu0 0.0
    %396 = vmatmul.mubr.f32.gmra.mrb[0].mxu0 %v194
    %v397 = vpop.f32.mrb[0].mxu0
    %v398 = vadd.f32 0.0, %v397
    %v399 = vpop.f32.mrb[0].mxu0
    %v400 = vadd.f32 0.0, %v399
    %401 = vmatprep.mubr.f32.mxu0 0.0
    %402 = vmatmul.mubr.f32.gmra.mrb[0].mxu0 %v195
    %v403 = vpop.f32.mrb[0].mxu0
    %v404 = vadd.f32 0.0, %v403
    %v405 = vpop.f32.mrb[0].mxu0
    %v406 = vadd.f32 0.0, %v405
    %407 = vmatprep.mubr.f32.mxu0 0.0
    %408 = vmatmul.mubr.f32.gmra.mrb[0].mxu0 %v196
    %v409 = vpop.f32.mrb[0].mxu0
    %v410 = vadd.f32 0.0, %v409
    %v411 = vpop.f32.mrb[0].mxu0
    %v412 = vadd.f32 0.0, %v411
    %413 = vmatprep.mubr.f32.mxu0 0.0
    %414 = vmatmul.mubr.f32.gmra.mrb[0].mxu0 %v197
    %v415 = vpop.f32.mrb[0].mxu0
    %v416 = vadd.f32 0.0, %v415
    %v417 = vpop.f32.mrb[0].mxu0
    %v418 = vadd.f32 0.0, %v417
    %419 = vmatprep.mubr.f32.mxu0 0.0
    %420 = vmatmul.mubr.f32.gmra.mrb[0].mxu0 %v198
    %v421 = vpop.f32.mrb[0].mxu0
    %v422 = vadd.f32 0.0, %v421
    %v423 = vpop.f32.mrb[0].mxu0
    %v424 = vadd.f32 0.0, %v423
    %425 = vmatprep.mubr.f32.mxu0 0.0
    %426 = vmatmul.mubr.f32.gmra.mrb[0].mxu0 %v199
    %v427 = vpop.f32.mrb[0].mxu0
    %v428 = vadd.f32 0.0, %v427
    %v429 = vpop.f32.mrb[0].mxu0
    %v430 = vadd.f32 0.0, %v429
    %431 = vmatprep.mubr.f32.mxu0 0.0
    %432 = vmatmul.mubr.f32.gmra.mrb[0].mxu0 %v200
    %v433 = vpop.f32.mrb[0].mxu0
    %v434 = vadd.f32 0.0, %v433
    %v435 = vpop.f32.mrb[0].mxu0
    %v436 = vadd.f32 0.0, %v435
    %437 = vmatprep.mubr.f32.mxu0 0.0
    %438 = vmatmul.mubr.f32.gmra.mrb[0].mxu0 %v201
    %v439 = vpop.f32.mrb[0].mxu0
    %v440 = vadd.f32 0.0, %v439
    %v441 = vpop.f32.mrb[0].mxu0
    %v442 = vadd.f32 0.0, %v441
    %443 = vmatprep.mubr.f32.mxu0 0.0
    %444 = vmatmul.mubr.f32.gmra.mrb[0].mxu0 %v202
    %v445 = vpop.f32.mrb[0].mxu0
    %v446 = vadd.f32 0.0, %v445
    %v447 = vpop.f32.mrb[0].mxu0
    %v448 = vadd.f32 0.0, %v447
    %449 = vmatprep.mubr.f32.mxu0 0.0
    %450 = vmatmul.mubr.f32.gmra.mrb[0].mxu0 %v203
    %v451 = vpop.f32.mrb[0].mxu0
    %v452 = vadd.f32 0.0, %v451
    %v453 = vpop.f32.mrb[0].mxu0
    %v454 = vadd.f32 0.0, %v453
    %455 = vmatprep.mubr.f32.mxu0 0.0
    %456 = vmatmul.mubr.f32.gmra.mrb[0].mxu0 %v204
    %v457 = vpop.f32.mrb[0].mxu0
    %v458 = vadd.f32 0.0, %v457
    %v459 = vpop.f32.mrb[0].mxu0
    %v460 = vadd.f32 0.0, %v459
    %461 = vdwg.mxu0
    %v462 = vstv %s35
    %v463 = vmul.f32 %v462, %v272
    %v464 = vmul.f32 %v462, %v274
    %v465 = vmul.f32 %v462, %v278
    %v466 = vmul.f32 %v462, %v280
    %v467 = vmul.f32 %v462, %v284
    %v468 = vmul.f32 %v462, %v286
    %v469 = vmul.f32 %v462, %v290
    %v470 = vmul.f32 %v462, %v292
    %v471 = vmul.f32 %v462, %v296
    %v472 = vmul.f32 %v462, %v298
    %v473 = vmul.f32 %v462, %v302
    %v474 = vmul.f32 %v462, %v304
    %v475 = vmul.f32 %v462, %v308
    %v476 = vmul.f32 %v462, %v310
    %v477 = vmul.f32 %v462, %v314
    %v478 = vmul.f32 %v462, %v316
    %v479 = vmul.f32 %v462, %v320
    %v480 = vmul.f32 %v462, %v322
    %v481 = vmul.f32 %v462, %v326
    %v482 = vmul.f32 %v462, %v328
    %v483 = vmul.f32 %v462, %v332
    %v484 = vmul.f32 %v462, %v334
    %v485 = vmul.f32 %v462, %v338
    %v486 = vmul.f32 %v462, %v340
    %v487 = vmul.f32 %v462, %v344
    %v488 = vmul.f32 %v462, %v346
    %v489 = vmul.f32 %v462, %v350
    %v490 = vmul.f32 %v462, %v352
    %v491 = vmul.f32 %v462, %v356
    %v492 = vmul.f32 %v462, %v358
    %v493 = vmul.f32 %v462, %v362
    %v494 = vmul.f32 %v462, %v364
    %v495 = vmul.f32 %v462, %v368
    %v496 = vmul.f32 %v462, %v370
    %v497 = vmul.f32 %v462, %v374
    %v498 = vmul.f32 %v462, %v376
    %v499 = vmul.f32 %v462, %v380
    %v500 = vmul.f32 %v462, %v382
    %v501 = vmul.f32 %v462, %v386
    %v502 = vmul.f32 %v462, %v388
    %v503 = vmul.f32 %v462, %v392
    %v504 = vmul.f32 %v462, %v394
    %v505 = vmul.f32 %v462, %v398
    %v506 = vmul.f32 %v462, %v400
    %v507 = vmul.f32 %v462, %v404
    %v508 = vmul.f32 %v462, %v406
    %v509 = vmul.f32 %v462, %v410
    %v510 = vmul.f32 %v462, %v412
    %v511 = vmul.f32 %v462, %v416
    %v512 = vmul.f32 %v462, %v418
    %v513 = vmul.f32 %v462, %v422
    %v514 = vmul.f32 %v462, %v424
    %v515 = vmul.f32 %v462, %v428
    %v516 = vmul.f32 %v462, %v430
    %v517 = vmul.f32 %v462, %v434
    %v518 = vmul.f32 %v462, %v436
    %v519 = vmul.f32 %v462, %v440
    %v520 = vmul.f32 %v462, %v442
    %v521 = vmul.f32 %v462, %v446
    %v522 = vmul.f32 %v462, %v448
    %v523 = vmul.f32 %v462, %v452
    %v524 = vmul.f32 %v462, %v454
    %v525 = vmul.f32 %v462, %v458
    %v526 = vmul.f32 %v462, %v460
    %527 = vst [vmem:[#allocation15] sm:$0xff] %v463
    %528 = vst [vmem:[#allocation15 + $0x8] sm:$0xff] %v464
    %529 = vst [vmem:[#allocation15 + $0x10] sm:$0xff] %v465
    %530 = vst [vmem:[#allocation15 + $0x18] sm:$0xff] %v466
    %531 = vst [vmem:[#allocation15 + $0x20] sm:$0xff] %v467
    %532 = vst [vmem:[#allocation15 + $0x28] sm:$0xff] %v468
    %533 = vst [vmem:[#allocation15 + $0x30] sm:$0xff] %v469
    %534 = vst [vmem:[#allocation15 + $0x38] sm:$0xff] %v470
    %535 = vst [vmem:[#allocation15 + $0x40] sm:$0xff] %v471
    %536 = vst [vmem:[#allocation15 + $0x48] sm:$0xff] %v472
    %537 = vst [vmem:[#allocation15 + $0x50] sm:$0xff] %v473
    %538 = vst [vmem:[#allocation15 + $0x58] sm:$0xff] %v474
    %539 = vst [vmem:[#allocation15 + $0x60] sm:$0xff] %v475
    %540 = vst [vmem:[#allocation15 + $0x68] sm:$0xff] %v476
    %541 = vst [vmem:[#allocation15 + $0x70] sm:$0xff] %v477
    %542 = vst [vmem:[#allocation15 + $0x78] sm:$0xff] %v478
    %543 = vst [vmem:[#allocation15 + $0x80] sm:$0xff] %v479
    %544 = vst [vmem:[#allocation15 + $0x88] sm:$0xff] %v480
    %545 = vst [vmem:[#allocation15 + $0x90] sm:$0xff] %v481
    %546 = vst [vmem:[#allocation15 + $0x98] sm:$0xff] %v482
    %547 = vst [vmem:[#allocation15 + $0xa0] sm:$0xff] %v483
    %548 = vst [vmem:[#allocation15 + $0xa8] sm:$0xff] %v484
    %549 = vst [vmem:[#allocation15 + $0xb0] sm:$0xff] %v485
    %550 = vst [vmem:[#allocation15 + $0xb8] sm:$0xff] %v486
    %551 = vst [vmem:[#allocation15 + $0xc0] sm:$0xff] %v487
    %552 = vst [vmem:[#allocation15 + $0xc8] sm:$0xff] %v488
    %553 = vst [vmem:[#allocation15 + $0xd0] sm:$0xff] %v489
    %554 = vst [vmem:[#allocation15 + $0xd8] sm:$0xff] %v490
    %555 = vst [vmem:[#allocation15 + $0xe0] sm:$0xff] %v491
    %556 = vst [vmem:[#allocation15 + $0xe8] sm:$0xff] %v492
    %557 = vst [vmem:[#allocation15 + $0xf0] sm:$0xff] %v493
    %558 = vst [vmem:[#allocation15 + $0xf8] sm:$0xff] %v494
    %559 = vst [vmem:[#allocation15 + $0x100] sm:$0xff] %v495
    %560 = vst [vmem:[#allocation15 + $0x108] sm:$0xff] %v496
    %561 = vst [vmem:[#allocation15 + $0x110] sm:$0xff] %v497
    %562 = vst [vmem:[#allocation15 + $0x118] sm:$0xff] %v498
    %563 = vst [vmem:[#allocation15 + $0x120] sm:$0xff] %v499
    %564 = vst [vmem:[#allocation15 + $0x128] sm:$0xff] %v500
    %565 = vst [vmem:[#allocation15 + $0x130] sm:$0xff] %v501
    %566 = vst [vmem:[#allocation15 + $0x138] sm:$0xff] %v502
    %567 = vst [vmem:[#allocation15 + $0x140] sm:$0xff] %v503
    %568 = vst [vmem:[#allocation15 + $0x148] sm:$0xff] %v504
    %569 = vst [vmem:[#allocation15 + $0x150] sm:$0xff] %v505
    %570 = vst [vmem:[#allocation15 + $0x158] sm:$0xff] %v506
    %571 = vst [vmem:[#allocation15 + $0x160] sm:$0xff] %v507
    %572 = vst [vmem:[#allocation15 + $0x168] sm:$0xff] %v508
    %573 = vst [vmem:[#allocation15 + $0x170] sm:$0xff] %v509
    %574 = vst [vmem:[#allocation15 + $0x178] sm:$0xff] %v510
    %575 = vst [vmem:[#allocation15 + $0x180] sm:$0xff] %v511
    %576 = vst [vmem:[#allocation15 + $0x188] sm:$0xff] %v512
    %577 = vst [vmem:[#allocation15 + $0x190] sm:$0xff] %v513
    %578 = vst [vmem:[#allocation15 + $0x198] sm:$0xff] %v514
    %579 = vst [vmem:[#allocation15 + $0x1a0] sm:$0xff] %v515
    %580 = vst [vmem:[#allocation15 + $0x1a8] sm:$0xff] %v516
    %581 = vst [vmem:[#allocation15 + $0x1b0] sm:$0xff] %v517
    %582 = vst [vmem:[#allocation15 + $0x1b8] sm:$0xff] %v518
    %583 = vst [vmem:[#allocation15 + $0x1c0] sm:$0xff] %v519
    %584 = vst [vmem:[#allocation15 + $0x1c8] sm:$0xff] %v520
    %585 = vst [vmem:[#allocation15 + $0x1d0] sm:$0xff] %v521
    %586 = vst [vmem:[#allocation15 + $0x1d8] sm:$0xff] %v522
    %587 = vst [vmem:[#allocation15 + $0x1e0] sm:$0xff] %v523
    %588 = vst [vmem:[#allocation15 + $0x1e8] sm:$0xff] %v524
    %589 = vst [vmem:[#allocation15 + $0x1f0] sm:$0xff] %v525
    %590 = vst [vmem:[#allocation15 + $0x1f8] sm:$0xff] %v526
    %s591 = sld [smem:[#allocation10]]
    %s592 = smul.u32 0, 256
    %v593 = vlaneseq
    %v594 = vshrl.u32 %v593, 7
    %v595 = vadd.s32 %v594, 8
    %v596 = vadd.s32 %v594, 16
    %v597 = vadd.s32 %v594, 24
    %v598 = vadd.s32 %v594, 32
    %v599 = vadd.s32 %v594, 40
    %v600 = vadd.s32 %v594, 48
    %v601 = vadd.s32 %v594, 56
    %v602 = vadd.s32 %v594, 64
    %v603 = vadd.s32 %v594, 72
    %v604 = vadd.s32 %v594, 80
    %v605 = vadd.s32 %v594, 88
    %v606 = vadd.s32 %v594, 96
    %v607 = vadd.s32 %v594, 104
    %v608 = vadd.s32 %v594, 112
    %v609 = vadd.s32 %v594, 120
    %v610 = vadd.s32 %v594, 128
    %v611 = vadd.s32 %v594, 136
    %v612 = vadd.s32 %v594, 144
    %v613 = vadd.s32 %v594, 152
    %v614 = vadd.s32 %v594, 160
    %v615 = vadd.s32 %v594, 168
    %v616 = vadd.s32 %v594, 176
    %v617 = vadd.s32 %v594, 184
    %v618 = vadd.s32 %v594, 192
    %v619 = vadd.s32 %v594, 200
    %v620 = vadd.s32 %v594, 208
    %v621 = vadd.s32 %v594, 216
    %v622 = vadd.s32 %v594, 224
    %v623 = vadd.s32 %v594, 232
    %v624 = vadd.s32 %v594, 240
    %v625 = vadd.s32 %v594, 248
    %v626 = vstv %s592
    %v627 = vadd.s32 %v626, %v594
    %v628 = vadd.s32 %v626, %v595
    %v629 = vadd.s32 %v626, %v596
    %v630 = vadd.s32 %v626, %v597
    %v631 = vadd.s32 %v626, %v598
    %v632 = vadd.s32 %v626, %v599
    %v633 = vadd.s32 %v626, %v600
    %v634 = vadd.s32 %v626, %v601
    %v635 = vadd.s32 %v626, %v602
    %v636 = vadd.s32 %v626, %v603
    %v637 = vadd.s32 %v626, %v604
    %v638 = vadd.s32 %v626, %v605
    %v639 = vadd.s32 %v626, %v606
    %v640 = vadd.s32 %v626, %v607
    %v641 = vadd.s32 %v626, %v608
    %v642 = vadd.s32 %v626, %v609
    %v643 = vadd.s32 %v626, %v610
    %v644 = vadd.s32 %v626, %v611
    %v645 = vadd.s32 %v626, %v612
    %v646 = vadd.s32 %v626, %v613
    %v647 = vadd.s32 %v626, %v614
    %v648 = vadd.s32 %v626, %v615
    %v649 = vadd.s32 %v626, %v616
    %v650 = vadd.s32 %v626, %v617
    %v651 = vadd.s32 %v626, %v618
    %v652 = vadd.s32 %v626, %v619
    %v653 = vadd.s32 %v626, %v620
    %v654 = vadd.s32 %v626, %v621
    %v655 = vadd.s32 %v626, %v622
    %v656 = vadd.s32 %v626, %v623
    %v657 = vadd.s32 %v626, %v624
    %v658 = vadd.s32 %v626, %v625
    %v659 = vlaneseq
    %v660 = vand.u32 %v659, 127
    %v661 = vadd.s32 %v660, 128
    %v662 = vstv %s139
    %v663 = vadd.s32 %v662, %v660
    %v664 = vadd.s32 %v662, %v661
    %v665 = vstv %s591
    %vm666 = vcmp.lt.s32.totalorder %v627, %v665
    %vm667 = vcmp.lt.s32.totalorder %v628, %v665
    %vm668 = vcmp.lt.s32.totalorder %v629, %v665
    %vm669 = vcmp.lt.s32.totalorder %v630, %v665
    %vm670 = vcmp.lt.s32.totalorder %v631, %v665
    %vm671 = vcmp.lt.s32.totalorder %v632, %v665
    %vm672 = vcmp.lt.s32.totalorder %v633, %v665
    %vm673 = vcmp.lt.s32.totalorder %v634, %v665
    %vm674 = vcmp.lt.s32.totalorder %v635, %v665
    %vm675 = vcmp.lt.s32.totalorder %v636, %v665
    %vm676 = vcmp.lt.s32.totalorder %v637, %v665
    %vm677 = vcmp.lt.s32.totalorder %v638, %v665
    %vm678 = vcmp.lt.s32.totalorder %v639, %v665
    %vm679 = vcmp.lt.s32.totalorder %v640, %v665
    %vm680 = vcmp.lt.s32.totalorder %v641, %v665
    %vm681 = vcmp.lt.s32.totalorder %v642, %v665
    %vm682 = vcmp.lt.s32.totalorder %v643, %v665
    %vm683 = vcmp.lt.s32.totalorder %v644, %v665
    %vm684 = vcmp.lt.s32.totalorder %v645, %v665
    %vm685 = vcmp.lt.s32.totalorder %v646, %v665
    %vm686 = vcmp.lt.s32.totalorder %v647, %v665
    %vm687 = vcmp.lt.s32.totalorder %v648, %v665
    %vm688 = vcmp.lt.s32.totalorder %v649, %v665
    %vm689 = vcmp.lt.s32.totalorder %v650, %v665
    %vm690 = vcmp.lt.s32.totalorder %v651, %v665
    %vm691 = vcmp.lt.s32.totalorder %v652, %v665
    %vm692 = vcmp.lt.s32.totalorder %v653, %v665
    %vm693 = vcmp.lt.s32.totalorder %v654, %v665
    %vm694 = vcmp.lt.s32.totalorder %v655, %v665
    %vm695 = vcmp.lt.s32.totalorder %v656, %v665
    %vm696 = vcmp.lt.s32.totalorder %v657, %v665
    %vm697 = vcmp.lt.s32.totalorder %v658, %v665
    %vm698 = vcmp.lt.s32.totalorder %v663, %v665
    %vm699 = vcmp.lt.s32.totalorder %v664, %v665
    %v700 = vsel %vm666, 1, 0
    %v701 = vsel %vm667, 1, 0
    %v702 = vsel %vm668, 1, 0
    %v703 = vsel %vm669, 1, 0
    %v704 = vsel %vm670, 1, 0
    %v705 = vsel %vm671, 1, 0
    %v706 = vsel %vm672, 1, 0
    %v707 = vsel %vm673, 1, 0
    %v708 = vsel %vm674, 1, 0
    %v709 = vsel %vm675, 1, 0
    %v710 = vsel %vm676, 1, 0
    %v711 = vsel %vm677, 1, 0
    %v712 = vsel %vm678, 1, 0
    %v713 = vsel %vm679, 1, 0
    %v714 = vsel %vm680, 1, 0
    %v715 = vsel %vm681, 1, 0
    %v716 = vsel %vm682, 1, 0
    %v717 = vsel %vm683, 1, 0
    %v718 = vsel %vm684, 1, 0
    %v719 = vsel %vm685, 1, 0
    %v720 = vsel %vm686, 1, 0
    %v721 = vsel %vm687, 1, 0
    %v722 = vsel %vm688, 1, 0
    %v723 = vsel %vm689, 1, 0
    %v724 = vsel %vm690, 1, 0
    %v725 = vsel %vm691, 1, 0
    %v726 = vsel %vm692, 1, 0
    %v727 = vsel %vm693, 1, 0
    %v728 = vsel %vm694, 1, 0
    %v729 = vsel %vm695, 1, 0
    %v730 = vsel %vm696, 1, 0
    %v731 = vsel %vm697, 1, 0
    %vm732 = vcmp.eq.s32.totalorder %v700, 1
    %vm733 = vcmp.eq.s32.totalorder %v701, 1
    %vm734 = vcmp.eq.s32.totalorder %v702, 1
    %vm735 = vcmp.eq.s32.totalorder %v703, 1
    %vm736 = vcmp.eq.s32.totalorder %v704, 1
    %vm737 = vcmp.eq.s32.totalorder %v705, 1
    %vm738 = vcmp.eq.s32.totalorder %v706, 1
    %vm739 = vcmp.eq.s32.totalorder %v707, 1
    %vm740 = vcmp.eq.s32.totalorder %v708, 1
    %vm741 = vcmp.eq.s32.totalorder %v709, 1
    %vm742 = vcmp.eq.s32.totalorder %v710, 1
    %vm743 = vcmp.eq.s32.totalorder %v711, 1
    %vm744 = vcmp.eq.s32.totalorder %v712, 1
    %vm745 = vcmp.eq.s32.totalorder %v713, 1
    %vm746 = vcmp.eq.s32.totalorder %v714, 1
    %vm747 = vcmp.eq.s32.totalorder %v715, 1
    %vm748 = vcmp.eq.s32.totalorder %v716, 1
    %vm749 = vcmp.eq.s32.totalorder %v717, 1
    %vm750 = vcmp.eq.s32.totalorder %v718, 1
    %vm751 = vcmp.eq.s32.totalorder %v719, 1
    %vm752 = vcmp.eq.s32.totalorder %v720, 1
    %vm753 = vcmp.eq.s32.totalorder %v721, 1
    %vm754 = vcmp.eq.s32.totalorder %v722, 1
    %vm755 = vcmp.eq.s32.totalorder %v723, 1
    %vm756 = vcmp.eq.s32.totalorder %v724, 1
    %vm757 = vcmp.eq.s32.totalorder %v725, 1
    %vm758 = vcmp.eq.s32.totalorder %v726, 1
    %vm759 = vcmp.eq.s32.totalorder %v727, 1
    %vm760 = vcmp.eq.s32.totalorder %v728, 1
    %vm761 = vcmp.eq.s32.totalorder %v729, 1
    %vm762 = vcmp.eq.s32.totalorder %v730, 1
    %vm763 = vcmp.eq.s32.totalorder %v731, 1
    %v764 = vsel %vm698, 1, 0
    %v765 = vsel %vm699, 1, 0
    %vm766 = vcmp.eq.s32.totalorder %v764, 1
    %vm767 = vcmp.eq.s32.totalorder %v765, 1
    %vm768 = vmand %vm732, %vm766
    %vm769 = vmand %vm732, %vm767
    %vm770 = vmand %vm733, %vm766
    %vm771 = vmand %vm733, %vm767
    %vm772 = vmand %vm734, %vm766
    %vm773 = vmand %vm734, %vm767
    %vm774 = vmand %vm735, %vm766
    %vm775 = vmand %vm735, %vm767
    %vm776 = vmand %vm736, %vm766
    %vm777 = vmand %vm736, %vm767
    %vm778 = vmand %vm737, %vm766
    %vm779 = vmand %vm737, %vm767
    %vm780 = vmand %vm738, %vm766
    %vm781 = vmand %vm738, %vm767
    %vm782 = vmand %vm739, %vm766
    %vm783 = vmand %vm739, %vm767
    %vm784 = vmand %vm740, %vm766
    %vm785 = vmand %vm740, %vm767
    %vm786 = vmand %vm741, %vm766
    %vm787 = vmand %vm741, %vm767
    %vm788 = vmand %vm742, %vm766
    %vm789 = vmand %vm742, %vm767
    %vm790 = vmand %vm743, %vm766
    %vm791 = vmand %vm743, %vm767
    %vm792 = vmand %vm744, %vm766
    %vm793 = vmand %vm744, %vm767
    %vm794 = vmand %vm745, %vm766
    %vm795 = vmand %vm745, %vm767
    %vm796 = vmand %vm746, %vm766
    %vm797 = vmand %vm746, %vm767
    %vm798 = vmand %vm747, %vm766
    %vm799 = vmand %vm747, %vm767
    %vm800 = vmand %vm748, %vm766
    %vm801 = vmand %vm748, %vm767
    %vm802 = vmand %vm749, %vm766
    %vm803 = vmand %vm749, %vm767
    %vm804 = vmand %vm750, %vm766
    %vm805 = vmand %vm750, %vm767
    %vm806 = vmand %vm751, %vm766
    %vm807 = vmand %vm751, %vm767
    %vm808 = vmand %vm752, %vm766
    %vm809 = vmand %vm752, %vm767
    %vm810 = vmand %vm753, %vm766
    %vm811 = vmand %vm753, %vm767
    %vm812 = vmand %vm754, %vm766
    %vm813 = vmand %vm754, %vm767
    %vm814 = vmand %vm755, %vm766
    %vm815 = vmand %vm755, %vm767
    %vm816 = vmand %vm756, %vm766
    %vm817 = vmand %vm756, %vm767
    %vm818 = vmand %vm757, %vm766
    %vm819 = vmand %vm757, %vm767
    %vm820 = vmand %vm758, %vm766
    %vm821 = vmand %vm758, %vm767
    %vm822 = vmand %vm759, %vm766
    %vm823 = vmand %vm759, %vm767
    %vm824 = vmand %vm760, %vm766
    %vm825 = vmand %vm760, %vm767
    %vm826 = vmand %vm761, %vm766
    %vm827 = vmand %vm761, %vm767
    %vm828 = vmand %vm762, %vm766
    %vm829 = vmand %vm762, %vm767
    %vm830 = vmand %vm763, %vm766
    %vm831 = vmand %vm763, %vm767
    %v832 = vsel %vm768, %v463, -1e+30
    %v833 = vsel %vm769, %v464, -1e+30
    %v834 = vsel %vm770, %v465, -1e+30
    %v835 = vsel %vm771, %v466, -1e+30
    %v836 = vsel %vm772, %v467, -1e+30
    %v837 = vsel %vm773, %v468, -1e+30
    %v838 = vsel %vm774, %v469, -1e+30
    %v839 = vsel %vm775, %v470, -1e+30
    %v840 = vsel %vm776, %v471, -1e+30
    %v841 = vsel %vm777, %v472, -1e+30
    %v842 = vsel %vm778, %v473, -1e+30
    %v843 = vsel %vm779, %v474, -1e+30
    %v844 = vsel %vm780, %v475, -1e+30
    %v845 = vsel %vm781, %v476, -1e+30
    %v846 = vsel %vm782, %v477, -1e+30
    %v847 = vsel %vm783, %v478, -1e+30
    %v848 = vsel %vm784, %v479, -1e+30
    %v849 = vsel %vm785, %v480, -1e+30
    %v850 = vsel %vm786, %v481, -1e+30
    %v851 = vsel %vm787, %v482, -1e+30
    %v852 = vsel %vm788, %v483, -1e+30
    %v853 = vsel %vm789, %v484, -1e+30
    %v854 = vsel %vm790, %v485, -1e+30
    %v855 = vsel %vm791, %v486, -1e+30
    %v856 = vsel %vm792, %v487, -1e+30
    %v857 = vsel %vm793, %v488, -1e+30
    %v858 = vsel %vm794, %v489, -1e+30
    %v859 = vsel %vm795, %v490, -1e+30
    %v860 = vsel %vm796, %v491, -1e+30
    %v861 = vsel %vm797, %v492, -1e+30
    %v862 = vsel %vm798, %v493, -1e+30
    %v863 = vsel %vm799, %v494, -1e+30
    %v864 = vsel %vm800, %v495, -1e+30
    %v865 = vsel %vm801, %v496, -1e+30
    %v866 = vsel %vm802, %v497, -1e+30
    %v867 = vsel %vm803, %v498, -1e+30
    %v868 = vsel %vm804, %v499, -1e+30
    %v869 = vsel %vm805, %v500, -1e+30
    %v870 = vsel %vm806, %v501, -1e+30
    %v871 = vsel %vm807, %v502, -1e+30
    %v872 = vsel %vm808, %v503, -1e+30
    %v873 = vsel %vm809, %v504, -1e+30
    %v874 = vsel %vm810, %v505, -1e+30
    %v875 = vsel %vm811, %v506, -1e+30
    %v876 = vsel %vm812, %v507, -1e+30
    %v877 = vsel %vm813, %v508, -1e+30
    %v878 = vsel %vm814, %v509, -1e+30
    %v879 = vsel %vm815, %v510, -1e+30
    %v880 = vsel %vm816, %v511, -1e+30
    %v881 = vsel %vm817, %v512, -1e+30
    %v882 = vsel %vm818, %v513, -1e+30
    %v883 = vsel %vm819, %v514, -1e+30
    %v884 = vsel %vm820, %v515, -1e+30
    %v885 = vsel %vm821, %v516, -1e+30
    %v886 = vsel %vm822, %v517, -1e+30
    %v887 = vsel %vm823, %v518, -1e+30
    %v888 = vsel %vm824, %v519, -1e+30
    %v889 = vsel %vm825, %v520, -1e+30
    %v890 = vsel %vm826, %v521, -1e+30
    %v891 = vsel %vm827, %v522, -1e+30
    %v892 = vsel %vm828, %v523, -1e+30
    %v893 = vsel %vm829, %v524, -1e+30
    %v894 = vsel %vm830, %v525, -1e+30
    %v895 = vsel %vm831, %v526, -1e+30
    %v896 = vmax.f32 %v832, %v833
    %897 = vmax.xlane.f32.xlu0 %v896
    %v898 = vpop.xlane.xlu0 %897
    %v899 = vmax.f32 %v834, %v835
    %900 = vmax.xlane.f32.xlu0 %v899
    %v901 = vpop.xlane.xlu0 %900
    %v902 = vmax.f32 %v836, %v837
    %903 = vmax.xlane.f32.xlu0 %v902
    %v904 = vpop.xlane.xlu0 %903
    %v905 = vmax.f32 %v838, %v839
    %906 = vmax.xlane.f32.xlu0 %v905
    %v907 = vpop.xlane.xlu0 %906
    %v908 = vmax.f32 %v840, %v841
    %909 = vmax.xlane.f32.xlu0 %v908
    %v910 = vpop.xlane.xlu0 %909
    %v911 = vmax.f32 %v842, %v843
    %912 = vmax.xlane.f32.xlu0 %v911
    %v913 = vpop.xlane.xlu0 %912
    %v914 = vmax.f32 %v844, %v845
    %915 = vmax.xlane.f32.xlu0 %v914
    %v916 = vpop.xlane.xlu0 %915
    %v917 = vmax.f32 %v846, %v847
    %918 = vmax.xlane.f32.xlu0 %v917
    %v919 = vpop.xlane.xlu0 %918
    %v920 = vmax.f32 %v848, %v849
    %921 = vmax.xlane.f32.xlu0 %v920
    %v922 = vpop.xlane.xlu0 %921
    %v923 = vmax.f32 %v850, %v851
    %924 = vmax.xlane.f32.xlu0 %v923
    %v925 = vpop.xlane.xlu0 %924
    %v926 = vmax.f32 %v852, %v853
    %927 = vmax.xlane.f32.xlu0 %v926
    %v928 = vpop.xlane.xlu0 %927
    %v929 = vmax.f32 %v854, %v855
    %930 = vmax.xlane.f32.xlu0 %v929
    %v931 = vpop.xlane.xlu0 %930
    %v932 = vmax.f32 %v856, %v857
    %933 = vmax.xlane.f32.xlu0 %v932
    %v934 = vpop.xlane.xlu0 %933
    %v935 = vmax.f32 %v858, %v859
    %936 = vmax.xlane.f32.xlu0 %v935
    %v937 = vpop.xlane.xlu0 %936
    %v938 = vmax.f32 %v860, %v861
    %939 = vmax.xlane.f32.xlu0 %v938
    %v940 = vpop.xlane.xlu0 %939
    %v941 = vmax.f32 %v862, %v863
    %942 = vmax.xlane.f32.xlu0 %v941
    %v943 = vpop.xlane.xlu0 %942
    %v944 = vmax.f32 %v864, %v865
    %945 = vmax.xlane.f32.xlu0 %v944
    %v946 = vpop.xlane.xlu0 %945
    %v947 = vmax.f32 %v866, %v867
    %948 = vmax.xlane.f32.xlu0 %v947
    %v949 = vpop.xlane.xlu0 %948
    %v950 = vmax.f32 %v868, %v869
    %951 = vmax.xlane.f32.xlu0 %v950
    %v952 = vpop.xlane.xlu0 %951
    %v953 = vmax.f32 %v870, %v871
    %954 = vmax.xlane.f32.xlu0 %v953
    %v955 = vpop.xlane.xlu0 %954
    %v956 = vmax.f32 %v872, %v873
    %957 = vmax.xlane.f32.xlu0 %v956
    %v958 = vpop.xlane.xlu0 %957
    %v959 = vmax.f32 %v874, %v875
    %960 = vmax.xlane.f32.xlu0 %v959
    %v961 = vpop.xlane.xlu0 %960
    %v962 = vmax.f32 %v876, %v877
    %963 = vmax.xlane.f32.xlu0 %v962
    %v964 = vpop.xlane.xlu0 %963
    %v965 = vmax.f32 %v878, %v879
    %966 = vmax.xlane.f32.xlu0 %v965
    %v967 = vpop.xlane.xlu0 %966
    %v968 = vmax.f32 %v880, %v881
    %969 = vmax.xlane.f32.xlu0 %v968
    %v970 = vpop.xlane.xlu0 %969
    %v971 = vmax.f32 %v882, %v883
    %972 = vmax.xlane.f32.xlu0 %v971
    %v973 = vpop.xlane.xlu0 %972
    %v974 = vmax.f32 %v884, %v885
    %975 = vmax.xlane.f32.xlu0 %v974
    %v976 = vpop.xlane.xlu0 %975
    %v977 = vmax.f32 %v886, %v887
    %978 = vmax.xlane.f32.xlu0 %v977
    %v979 = vpop.xlane.xlu0 %978
    %v980 = vmax.f32 %v888, %v889
    %981 = vmax.xlane.f32.xlu0 %v980
    %v982 = vpop.xlane.xlu0 %981
    %v983 = vmax.f32 %v890, %v891
    %984 = vmax.xlane.f32.xlu0 %v983
    %v985 = vpop.xlane.xlu0 %984
    %v986 = vmax.f32 %v892, %v893
    %987 = vmax.xlane.f32.xlu0 %v986
    %v988 = vpop.xlane.xlu0 %987
    %v989 = vmax.f32 %v894, %v895
    %990 = vmax.xlane.f32.xlu0 %v989
    %v991 = vpop.xlane.xlu0 %990
    %v992 = vmax.f32 %v832, %v836
    %v993 = vmax.f32 %v834, %v838
    %v994 = vmax.f32 %v992, %v840
    %v995 = vmax.f32 %v993, %v842
    %v996 = vmax.f32 %v994, %v844
    %v997 = vmax.f32 %v995, %v846
    %v998 = vmax.f32 %v996, %v848
    %v999 = vmax.f32 %v997, %v850
    %v1000 = vmax.f32 %v998, %v852
    %v1001 = vmax.f32 %v999, %v854
    %v1002 = vmax.f32 %v1000, %v856
    %v1003 = vmax.f32 %v1001, %v858
    %v1004 = vmax.f32 %v1002, %v860
    %v1005 = vmax.f32 %v1003, %v862
    %v1006 = vmax.f32 %v1004, %v864
    %v1007 = vmax.f32 %v1005, %v866
    %v1008 = vmax.f32 %v1006, %v868
    %v1009 = vmax.f32 %v1007, %v870
    %v1010 = vmax.f32 %v1008, %v872
    %v1011 = vmax.f32 %v1009, %v874
    %v1012 = vmax.f32 %v1010, %v876
    %v1013 = vmax.f32 %v1011, %v878
    %v1014 = vmax.f32 %v1012, %v880
    %v1015 = vmax.f32 %v1013, %v882
    %v1016 = vmax.f32 %v1014, %v884
    %v1017 = vmax.f32 %v1015, %v886
    %v1018 = vmax.f32 %v1016, %v888
    %v1019 = vmax.f32 %v1017, %v890
    %v1020 = vmax.f32 %v1018, %v892
    %v1021 = vmax.f32 %v1019, %v894
    %v1022 = vmax.f32 %v1020, %v1021
    %v1023 = vrot.slane %v1022, 4
    %v1024 = vmax.f32 %v1022, %v1023
    %v1025 = vrot.slane %v1024, 2
    %v1026 = vmax.f32 %v1024, %v1025
    %v1027 = vrot.slane %v1026, 1
    %v1028 = vmax.f32 %v1026, %v1027
    %v1029 = vmax.f32 %v833, %v837
    %v1030 = vmax.f32 %v835, %v839
    %v1031 = vmax.f32 %v1029, %v841
    %v1032 = vmax.f32 %v1030, %v843
    %v1033 = vmax.f32 %v1031, %v845
    %v1034 = vmax.f32 %v1032, %v847
    %v1035 = vmax.f32 %v1033, %v849
    %v1036 = vmax.f32 %v1034, %v851
    %v1037 = vmax.f32 %v1035, %v853
    %v1038 = vmax.f32 %v1036, %v855
    %v1039 = vmax.f32 %v1037, %v857
    %v1040 = vmax.f32 %v1038, %v859
    %v1041 = vmax.f32 %v1039, %v861
    %v1042 = vmax.f32 %v1040, %v863
    %v1043 = vmax.f32 %v1041, %v865
    %v1044 = vmax.f32 %v1042, %v867
    %v1045 = vmax.f32 %v1043, %v869
    %v1046 = vmax.f32 %v1044, %v871
    %v1047 = vmax.f32 %v1045, %v873
    %v1048 = vmax.f32 %v1046, %v875
    %v1049 = vmax.f32 %v1047, %v877
    %v1050 = vmax.f32 %v1048, %v879
    %v1051 = vmax.f32 %v1049, %v881
    %v1052 = vmax.f32 %v1050, %v883
    %v1053 = vmax.f32 %v1051, %v885
    %v1054 = vmax.f32 %v1052, %v887
    %v1055 = vmax.f32 %v1053, %v889
    %v1056 = vmax.f32 %v1054, %v891
    %v1057 = vmax.f32 %v1055, %v893
    %v1058 = vmax.f32 %v1056, %v895
    %v1059 = vmax.f32 %v1057, %v1058
    %v1060 = vrot.slane %v1059, 4
    %v1061 = vmax.f32 %v1059, %v1060
    %v1062 = vrot.slane %v1061, 2
    %v1063 = vmax.f32 %v1061, %v1062
    %v1064 = vrot.slane %v1063, 1
    %v1065 = vmax.f32 %v1063, %v1064
    %v1066 = vmax.f32 %v898, %v910
    %v1067 = vmax.f32 %v901, %v913
    %v1068 = vmax.f32 %v904, %v916
    %v1069 = vmax.f32 %v907, %v919
    %v1070 = vmax.f32 %v1066, %v922
    %v1071 = vmax.f32 %v1067, %v925
    %v1072 = vmax.f32 %v1068, %v928
    %v1073 = vmax.f32 %v1069, %v931
    %v1074 = vmax.f32 %v1070, %v934
    %v1075 = vmax.f32 %v1071, %v937
    %v1076 = vmax.f32 %v1072, %v940
    %v1077 = vmax.f32 %v1073, %v943
    %v1078 = vmax.f32 %v1074, %v946
    %v1079 = vmax.f32 %v1075, %v949
    %v1080 = vmax.f32 %v1076, %v952
    %v1081 = vmax.f32 %v1077, %v955
    %v1082 = vmax.f32 %v1078, %v958
    %v1083 = vmax.f32 %v1079, %v961
    %v1084 = vmax.f32 %v1080, %v964
    %v1085 = vmax.f32 %v1081, %v967
    %v1086 = vmax.f32 %v1082, %v970
    %v1087 = vmax.f32 %v1083, %v973
    %v1088 = vmax.f32 %v1084, %v976
    %v1089 = vmax.f32 %v1085, %v979
    %v1090 = vmax.f32 %v1086, %v982
    %v1091 = vmax.f32 %v1087, %v985
    %v1092 = vmax.f32 %v1088, %v988
    %v1093 = vmax.f32 %v1089, %v991
    %v1094 = vmax.f32 %v1090, %v1091
    %v1095 = vmax.f32 %v1092, %v1093
    %v1096 = vmax.f32 %v1094, %v1095
    %v1097 = vrot.slane %v1096, 4
    %v1098 = vmax.f32 %v1096, %v1097
    %v1099 = vrot.slane %v1098, 2
    %v1100 = vmax.f32 %v1098, %v1099
    %v1101 = vrot.slane %v1100, 1
    %v1102 = vmax.f32 %v1100, %v1101
    %s1103 = vtos %v1102
    %v1104 = vstv %s1103
    %v1105 = vsub.f32 %v832, %v1104
    %v1106 = vsub.f32 %v833, %v1104
    %v1107 = vsub.f32 %v834, %v1104
    %v1108 = vsub.f32 %v835, %v1104
    %v1109 = vsub.f32 %v836, %v1104
    %v1110 = vsub.f32 %v837, %v1104
    %v1111 = vsub.f32 %v838, %v1104
    %v1112 = vsub.f32 %v839, %v1104
    %v1113 = vsub.f32 %v840, %v1104
    %v1114 = vsub.f32 %v841, %v1104
    %v1115 = vsub.f32 %v842, %v1104
    %v1116 = vsub.f32 %v843, %v1104
    %v1117 = vsub.f32 %v844, %v1104
    %v1118 = vsub.f32 %v845, %v1104
    %v1119 = vsub.f32 %v846, %v1104
    %v1120 = vsub.f32 %v847, %v1104
    %v1121 = vsub.f32 %v848, %v1104
    %v1122 = vsub.f32 %v849, %v1104
    %v1123 = vsub.f32 %v850, %v1104
    %v1124 = vsub.f32 %v851, %v1104
    %v1125 = vsub.f32 %v852, %v1104
    %v1126 = vsub.f32 %v853, %v1104
    %v1127 = vsub.f32 %v854, %v1104
    %v1128 = vsub.f32 %v855, %v1104
    %v1129 = vsub.f32 %v856, %v1104
    %v1130 = vsub.f32 %v857, %v1104
    %v1131 = vsub.f32 %v858, %v1104
    %v1132 = vsub.f32 %v859, %v1104
    %v1133 = vsub.f32 %v860, %v1104
    %v1134 = vsub.f32 %v861, %v1104
    %v1135 = vsub.f32 %v862, %v1104
    %v1136 = vsub.f32 %v863, %v1104
    %v1137 = vsub.f32 %v864, %v1104
    %v1138 = vsub.f32 %v865, %v1104
    %v1139 = vsub.f32 %v866, %v1104
    %v1140 = vsub.f32 %v867, %v1104
    %v1141 = vsub.f32 %v868, %v1104
    %v1142 = vsub.f32 %v869, %v1104
    %v1143 = vsub.f32 %v870, %v1104
    %v1144 = vsub.f32 %v871, %v1104
    %v1145 = vsub.f32 %v872, %v1104
    %v1146 = vsub.f32 %v873, %v1104
    %v1147 = vsub.f32 %v874, %v1104
    %v1148 = vsub.f32 %v875, %v1104
    %v1149 = vsub.f32 %v876, %v1104
    %v1150 = vsub.f32 %v877, %v1104
    %v1151 = vsub.f32 %v878, %v1104
    %v1152 = vsub.f32 %v879, %v1104
    %v1153 = vsub.f32 %v880, %v1104
    %v1154 = vsub.f32 %v881, %v1104
    %v1155 = vsub.f32 %v882, %v1104
    %v1156 = vsub.f32 %v883, %v1104
    %v1157 = vsub.f32 %v884, %v1104
    %v1158 = vsub.f32 %v885, %v1104
    %v1159 = vsub.f32 %v886, %v1104
    %v1160 = vsub.f32 %v887, %v1104
    %v1161 = vsub.f32 %v888, %v1104
    %v1162 = vsub.f32 %v889, %v1104
    %v1163 = vsub.f32 %v890, %v1104
    %v1164 = vsub.f32 %v891, %v1104
    %v1165 = vsub.f32 %v892, %v1104
    %v1166 = vsub.f32 %v893, %v1104
    %v1167 = vsub.f32 %v894, %v1104
    %v1168 = vsub.f32 %v895, %v1104
    %v1169 = vmul.f32 %v1105, 1.442695
    %v1170 = vpow.pop %v1169
    %v1171 = vmul.f32 %v1106, 1.442695
    %v1172 = vpow.pop %v1171
    %v1173 = vmul.f32 %v1107, 1.442695
    %v1174 = vpow.pop %v1173
    %v1175 = vmul.f32 %v1108, 1.442695
    %v1176 = vpow.pop %v1175
    %v1177 = vmul.f32 %v1109, 1.442695
    %v1178 = vpow.pop %v1177
    %v1179 = vmul.f32 %v1110, 1.442695
    %v1180 = vpow.pop %v1179
    %v1181 = vmul.f32 %v1111, 1.442695
    %v1182 = vpow.pop %v1181
    %v1183 = vmul.f32 %v1112, 1.442695
    %v1184 = vpow.pop %v1183
    %v1185 = vmul.f32 %v1113, 1.442695
    %v1186 = vpow.pop %v1185
    %v1187 = vmul.f32 %v1114, 1.442695
    %v1188 = vpow.pop %v1187
    %v1189 = vmul.f32 %v1115, 1.442695
    %v1190 = vpow.pop %v1189
    %v1191 = vmul.f32 %v1116, 1.442695
    %v1192 = vpow.pop %v1191
    %v1193 = vmul.f32 %v1117, 1.442695
    %v1194 = vpow.pop %v1193
    %v1195 = vmul.f32 %v1118, 1.442695
    %v1196 = vpow.pop %v1195
    %v1197 = vmul.f32 %v1119, 1.442695
    %v1198 = vpow.pop %v1197
    %v1199 = vmul.f32 %v1120, 1.442695
    %v1200 = vpow.pop %v1199
    %v1201 = vmul.f32 %v1121, 1.442695
    %v1202 = vpow.pop %v1201
    %v1203 = vmul.f32 %v1122, 1.442695
    %v1204 = vpow.pop %v1203
    %v1205 = vmul.f32 %v1123, 1.442695
    %v1206 = vpow.pop %v1205
    %v1207 = vmul.f32 %v1124, 1.442695
    %v1208 = vpow.pop %v1207
    %v1209 = vmul.f32 %v1125, 1.442695
    %v1210 = vpow.pop %v1209
    %v1211 = vmul.f32 %v1126, 1.442695
    %v1212 = vpow.pop %v1211
    %v1213 = vmul.f32 %v1127, 1.442695
    %v1214 = vpow.pop %v1213
    %v1215 = vmul.f32 %v1128, 1.442695
    %v1216 = vpow.pop %v1215
    %v1217 = vmul.f32 %v1129, 1.442695
    %v1218 = vpow.pop %v1217
    %v1219 = vmul.f32 %v1130, 1.442695
    %v1220 = vpow.pop %v1219
    %v1221 = vmul.f32 %v1131, 1.442695
    %v1222 = vpow.pop %v1221
    %v1223 = vmul.f32 %v1132, 1.442695
    %v1224 = vpow.pop %v1223
    %v1225 = vmul.f32 %v1133, 1.442695
    %v1226 = vpow.pop %v1225
    %v1227 = vmul.f32 %v1134, 1.442695
    %v1228 = vpow.pop %v1227
    %v1229 = vmul.f32 %v1135, 1.442695
    %v1230 = vpow.pop %v1229
    %v1231 = vmul.f32 %v1136, 1.442695
    %v1232 = vpow.pop %v1231
    %v1233 = vmul.f32 %v1137, 1.442695
    %v1234 = vpow.pop %v1233
    %v1235 = vmul.f32 %v1138, 1.442695
    %v1236 = vpow.pop %v1235
    %v1237 = vmul.f32 %v1139, 1.442695
    %v1238 = vpow.pop %v1237
    %v1239 = vmul.f32 %v1140, 1.442695
    %v1240 = vpow.pop %v1239
    %v1241 = vmul.f32 %v1141, 1.442695
    %v1242 = vpow.pop %v1241
    %v1243 = vmul.f32 %v1142, 1.442695
    %v1244 = vpow.pop %v1243
    %v1245 = vmul.f32 %v1143, 1.442695
    %v1246 = vpow.pop %v1245
    %v1247 = vmul.f32 %v1144, 1.442695
    %v1248 = vpow.pop %v1247
    %v1249 = vmul.f32 %v1145, 1.442695
    %v1250 = vpow.pop %v1249
    %v1251 = vmul.f32 %v1146, 1.442695
    %v1252 = vpow.pop %v1251
    %v1253 = vmul.f32 %v1147, 1.442695
    %v1254 = vpow.pop %v1253
    %v1255 = vmul.f32 %v1148, 1.442695
    %v1256 = vpow.pop %v1255
    %v1257 = vmul.f32 %v1149, 1.442695
    %v1258 = vpow.pop %v1257
    %v1259 = vmul.f32 %v1150, 1.442695
    %v1260 = vpow.pop %v1259
    %v1261 = vmul.f32 %v1151, 1.442695
    %v1262 = vpow.pop %v1261
    %v1263 = vmul.f32 %v1152, 1.442695
    %v1264 = vpow.pop %v1263
    %v1265 = vmul.f32 %v1153, 1.442695
    %v1266 = vpow.pop %v1265
    %v1267 = vmul.f32 %v1154, 1.442695
    %v1268 = vpow.pop %v1267
    %v1269 = vmul.f32 %v1155, 1.442695
    %v1270 = vpow.pop %v1269
    %v1271 = vmul.f32 %v1156, 1.442695
    %v1272 = vpow.pop %v1271
    %v1273 = vmul.f32 %v1157, 1.442695
    %v1274 = vpow.pop %v1273
    %v1275 = vmul.f32 %v1158, 1.442695
    %v1276 = vpow.pop %v1275
    %v1277 = vmul.f32 %v1159, 1.442695
    %v1278 = vpow.pop %v1277
    %v1279 = vmul.f32 %v1160, 1.442695
    %v1280 = vpow.pop %v1279
    %v1281 = vmul.f32 %v1161, 1.442695
    %v1282 = vpow.pop %v1281
    %v1283 = vmul.f32 %v1162, 1.442695
    %v1284 = vpow.pop %v1283
    %v1285 = vmul.f32 %v1163, 1.442695
    %v1286 = vpow.pop %v1285
    %v1287 = vmul.f32 %v1164, 1.442695
    %v1288 = vpow.pop %v1287
    %v1289 = vmul.f32 %v1165, 1.442695
    %v1290 = vpow.pop %v1289
    %v1291 = vmul.f32 %v1166, 1.442695
    %v1292 = vpow.pop %v1291
    %v1293 = vmul.f32 %v1167, 1.442695
    %v1294 = vpow.pop %v1293
    %v1295 = vmul.f32 %v1168, 1.442695
    %v1296 = vpow.pop %v1295
    %v1297 = vadd.f32 %v1170, %v1172
    %1298 = vadd.xlane.f32.xlu0 %v1297
    %v1299 = vpop.xlane.xlu0 %1298
    %v1300 = vadd.f32 %v1174, %v1176
    %1301 = vadd.xlane.f32.xlu0 %v1300
    %v1302 = vpop.xlane.xlu0 %1301
    %v1303 = vadd.f32 %v1178, %v1180
    %1304 = vadd.xlane.f32.xlu0 %v1303
    %v1305 = vpop.xlane.xlu0 %1304
    %v1306 = vadd.f32 %v1182, %v1184
    %1307 = vadd.xlane.f32.xlu0 %v1306
    %v1308 = vpop.xlane.xlu0 %1307
    %v1309 = vadd.f32 %v1186, %v1188
    %1310 = vadd.xlane.f32.xlu0 %v1309
    %v1311 = vpop.xlane.xlu0 %1310
    %v1312 = vadd.f32 %v1190, %v1192
    %1313 = vadd.xlane.f32.xlu0 %v1312
    %v1314 = vpop.xlane.xlu0 %1313
    %v1315 = vadd.f32 %v1194, %v1196
    %1316 = vadd.xlane.f32.xlu0 %v1315
    %v1317 = vpop.xlane.xlu0 %1316
    %v1318 = vadd.f32 %v1198, %v1200
    %1319 = vadd.xlane.f32.xlu0 %v1318
    %v1320 = vpop.xlane.xlu0 %1319
    %v1321 = vadd.f32 %v1202, %v1204
    %1322 = vadd.xlane.f32.xlu0 %v1321
    %v1323 = vpop.xlane.xlu0 %1322
    %v1324 = vadd.f32 %v1206, %v1208
    %1325 = vadd.xlane.f32.xlu0 %v1324
    %v1326 = vpop.xlane.xlu0 %1325
    %v1327 = vadd.f32 %v1210, %v1212
    %1328 = vadd.xlane.f32.xlu0 %v1327
    %v1329 = vpop.xlane.xlu0 %1328
    %v1330 = vadd.f32 %v1214, %v1216
    %1331 = vadd.xlane.f32.xlu0 %v1330
    %v1332 = vpop.xlane.xlu0 %1331
    %v1333 = vadd.f32 %v1218, %v1220
    %1334 = vadd.xlane.f32.xlu0 %v1333
    %v1335 = vpop.xlane.xlu0 %1334
    %v1336 = vadd.f32 %v1222, %v1224
    %1337 = vadd.xlane.f32.xlu0 %v1336
    %v1338 = vpop.xlane.xlu0 %1337
    %v1339 = vadd.f32 %v1226, %v1228
    %1340 = vadd.xlane.f32.xlu0 %v1339
    %v1341 = vpop.xlane.xlu0 %1340
    %v1342 = vadd.f32 %v1230, %v1232
    %1343 = vadd.xlane.f32.xlu0 %v1342
    %v1344 = vpop.xlane.xlu0 %1343
    %v1345 = vadd.f32 %v1234, %v1236
    %1346 = vadd.xlane.f32.xlu0 %v1345
    %v1347 = vpop.xlane.xlu0 %1346
    %v1348 = vadd.f32 %v1238, %v1240
    %1349 = vadd.xlane.f32.xlu0 %v1348
    %v1350 = vpop.xlane.xlu0 %1349
    %v1351 = vadd.f32 %v1242, %v1244
    %1352 = vadd.xlane.f32.xlu0 %v1351
    %v1353 = vpop.xlane.xlu0 %1352
    %v1354 = vadd.f32 %v1246, %v1248
    %1355 = vadd.xlane.f32.xlu0 %v1354
    %v1356 = vpop.xlane.xlu0 %1355
    %v1357 = vadd.f32 %v1250, %v1252
    %1358 = vadd.xlane.f32.xlu0 %v1357
    %v1359 = vpop.xlane.xlu0 %1358
    %v1360 = vadd.f32 %v1254, %v1256
    %1361 = vadd.xlane.f32.xlu0 %v1360
    %v1362 = vpop.xlane.xlu0 %1361
    %v1363 = vadd.f32 %v1258, %v1260
    %1364 = vadd.xlane.f32.xlu0 %v1363
    %v1365 = vpop.xlane.xlu0 %1364
    %v1366 = vadd.f32 %v1262, %v1264
    %1367 = vadd.xlane.f32.xlu0 %v1366
    %v1368 = vpop.xlane.xlu0 %1367
    %v1369 = vadd.f32 %v1266, %v1268
    %1370 = vadd.xlane.f32.xlu0 %v1369
    %v1371 = vpop.xlane.xlu0 %1370
    %v1372 = vadd.f32 %v1270, %v1272
    %1373 = vadd.xlane.f32.xlu0 %v1372
    %v1374 = vpop.xlane.xlu0 %1373
    %v1375 = vadd.f32 %v1274, %v1276
    %1376 = vadd.xlane.f32.xlu0 %v1375
    %v1377 = vpop.xlane.xlu0 %1376
    %v1378 = vadd.f32 %v1278, %v1280
    %1379 = vadd.xlane.f32.xlu0 %v1378
    %v1380 = vpop.xlane.xlu0 %1379
    %v1381 = vadd.f32 %v1282, %v1284
    %1382 = vadd.xlane.f32.xlu0 %v1381
    %v1383 = vpop.xlane.xlu0 %1382
    %v1384 = vadd.f32 %v1286, %v1288
    %1385 = vadd.xlane.f32.xlu0 %v1384
    %v1386 = vpop.xlane.xlu0 %1385
    %v1387 = vadd.f32 %v1290, %v1292
    %1388 = vadd.xlane.f32.xlu0 %v1387
    %v1389 = vpop.xlane.xlu0 %1388
    %v1390 = vadd.f32 %v1294, %v1296
    %1391 = vadd.xlane.f32.xlu0 %v1390
    %v1392 = vpop.xlane.xlu0 %1391
    %v1393 = vadd.f32 %v1170, %v1174
    %v1394 = vadd.f32 %v1393, %v1178
    %v1395 = vadd.f32 %v1394, %v1182
    %v1396 = vadd.f32 %v1395, %v1186
    %v1397 = vadd.f32 %v1396, %v1190
    %v1398 = vadd.f32 %v1397, %v1194
    %v1399 = vadd.f32 %v1398, %v1198
    %v1400 = vadd.f32 %v1399, %v1202
    %v1401 = vadd.f32 %v1400, %v1206
    %v1402 = vadd.f32 %v1401, %v1210
    %v1403 = vadd.f32 %v1402, %v1214
    %v1404 = vadd.f32 %v1403, %v1218
    %v1405 = vadd.f32 %v1404, %v1222
    %v1406 = vadd.f32 %v1405, %v1226
    %v1407 = vadd.f32 %v1406, %v1230
    %v1408 = vadd.f32 %v1407, %v1234
    %v1409 = vadd.f32 %v1408, %v1238
    %v1410 = vadd.f32 %v1409, %v1242
    %v1411 = vadd.f32 %v1410, %v1246
    %v1412 = vadd.f32 %v1411, %v1250
    %v1413 = vadd.f32 %v1412, %v1254
    %v1414 = vadd.f32 %v1413, %v1258
    %v1415 = vadd.f32 %v1414, %v1262
    %v1416 = vadd.f32 %v1415, %v1266
    %v1417 = vadd.f32 %v1416, %v1270
    %v1418 = vadd.f32 %v1417, %v1274
    %v1419 = vadd.f32 %v1418, %v1278
    %v1420 = vadd.f32 %v1419, %v1282
    %v1421 = vadd.f32 %v1420, %v1286
    %v1422 = vadd.f32 %v1421, %v1290
    %v1423 = vadd.f32 %v1422, %v1294
    %v1424 = vrot.slane %v1423, 4
    %v1425 = vadd.f32 %v1423, %v1424
    %v1426 = vrot.slane %v1425, 2
    %v1427 = vadd.f32 %v1425, %v1426
    %v1428 = vrot.slane %v1427, 1
    %v1429 = vadd.f32 %v1427, %v1428
    %v1430 = vadd.f32 %v1172, %v1176
    %v1431 = vadd.f32 %v1430, %v1180
    %v1432 = vadd.f32 %v1431, %v1184
    %v1433 = vadd.f32 %v1432, %v1188
    %v1434 = vadd.f32 %v1433, %v1192
    %v1435 = vadd.f32 %v1434, %v1196
    %v1436 = vadd.f32 %v1435, %v1200
    %v1437 = vadd.f32 %v1436, %v1204
    %v1438 = vadd.f32 %v1437, %v1208
    %v1439 = vadd.f32 %v1438, %v1212
    %v1440 = vadd.f32 %v1439, %v1216
    %v1441 = vadd.f32 %v1440, %v1220
    %v1442 = vadd.f32 %v1441, %v1224
    %v1443 = vadd.f32 %v1442, %v1228
    %v1444 = vadd.f32 %v1443, %v1232
    %v1445 = vadd.f32 %v1444, %v1236
    %v1446 = vadd.f32 %v1445, %v1240
    %v1447 = vadd.f32 %v1446, %v1244
    %v1448 = vadd.f32 %v1447, %v1248
    %v1449 = vadd.f32 %v1448, %v1252
    %v1450 = vadd.f32 %v1449, %v1256
    %v1451 = vadd.f32 %v1450, %v1260
    %v1452 = vadd.f32 %v1451, %v1264
    %v1453 = vadd.f32 %v1452, %v1268
    %v1454 = vadd.f32 %v1453, %v1272
    %v1455 = vadd.f32 %v1454, %v1276
    %v1456 = vadd.f32 %v1455, %v1280
    %v1457 = vadd.f32 %v1456, %v1284
    %v1458 = vadd.f32 %v1457, %v1288
    %v1459 = vadd.f32 %v1458, %v1292
    %v1460 = vadd.f32 %v1459, %v1296
    %v1461 = vrot.slane %v1460, 4
    %v1462 = vadd.f32 %v1460, %v1461
    %v1463 = vrot.slane %v1462, 2
    %v1464 = vadd.f32 %v1462, %v1463
    %v1465 = vrot.slane %v1464, 1
    %v1466 = vadd.f32 %v1464, %v1465
    %v1467 = vld [vmem:[#allocation4] sm:$0xff]
    %v1468 = vld [vmem:[#allocation4 + $0x8] sm:$0xff]
    %v1469 = vld [vmem:[#allocation4 + $0x10] sm:$0xff]
    %v1470 = vld [vmem:[#allocation4 + $0x18] sm:$0xff]
    %v1471 = vld [vmem:[#allocation4 + $0x20] sm:$0xff]
    %v1472 = vld [vmem:[#allocation4 + $0x28] sm:$0xff]
    %v1473 = vld [vmem:[#allocation4 + $0x30] sm:$0xff]
    %v1474 = vld [vmem:[#allocation4 + $0x38] sm:$0xff]
    %v1475 = vld [vmem:[#allocation4 + $0x40] sm:$0xff]
    %v1476 = vld [vmem:[#allocation4 + $0x48] sm:$0xff]
    %v1477 = vld [vmem:[#allocation4 + $0x50] sm:$0xff]
    %v1478 = vld [vmem:[#allocation4 + $0x58] sm:$0xff]
    %v1479 = vld [vmem:[#allocation4 + $0x60] sm:$0xff]
    %v1480 = vld [vmem:[#allocation4 + $0x68] sm:$0xff]
    %v1481 = vld [vmem:[#allocation4 + $0x70] sm:$0xff]
    %v1482 = vld [vmem:[#allocation4 + $0x78] sm:$0xff]
    %v1483 = vld [vmem:[#allocation4 + $0x80] sm:$0xff]
    %v1484 = vld [vmem:[#allocation4 + $0x88] sm:$0xff]
    %v1485 = vld [vmem:[#allocation4 + $0x90] sm:$0xff]
    %v1486 = vld [vmem:[#allocation4 + $0x98] sm:$0xff]
    %v1487 = vld [vmem:[#allocation4 + $0xa0] sm:$0xff]
    %v1488 = vld [vmem:[#allocation4 + $0xa8] sm:$0xff]
    %v1489 = vld [vmem:[#allocation4 + $0xb0] sm:$0xff]
    %v1490 = vld [vmem:[#allocation4 + $0xb8] sm:$0xff]
    %v1491 = vld [vmem:[#allocation4 + $0xc0] sm:$0xff]
    %v1492 = vld [vmem:[#allocation4 + $0xc8] sm:$0xff]
    %v1493 = vld [vmem:[#allocation4 + $0xd0] sm:$0xff]
    %v1494 = vld [vmem:[#allocation4 + $0xd8] sm:$0xff]
    %v1495 = vld [vmem:[#allocation4 + $0xe0] sm:$0xff]
    %v1496 = vld [vmem:[#allocation4 + $0xe8] sm:$0xff]
    %v1497 = vld [vmem:[#allocation4 + $0xf0] sm:$0xff]
    %v1498 = vld [vmem:[#allocation4 + $0xf8] sm:$0xff]
    %v1499 = vmax.f32 %v1467, %v898
    %v1500 = vmax.f32 %v1468, %v901
    %v1501 = vmax.f32 %v1469, %v904
    %v1502 = vmax.f32 %v1470, %v907
    %v1503 = vmax.f32 %v1471, %v910
    %v1504 = vmax.f32 %v1472, %v913
    %v1505 = vmax.f32 %v1473, %v916
    %v1506 = vmax.f32 %v1474, %v919
    %v1507 = vmax.f32 %v1475, %v922
    %v1508 = vmax.f32 %v1476, %v925
    %v1509 = vmax.f32 %v1477, %v928
    %v1510 = vmax.f32 %v1478, %v931
    %v1511 = vmax.f32 %v1479, %v934
    %v1512 = vmax.f32 %v1480, %v937
    %v1513 = vmax.f32 %v1481, %v940
    %v1514 = vmax.f32 %v1482, %v943
    %v1515 = vmax.f32 %v1483, %v946
    %v1516 = vmax.f32 %v1484, %v949
    %v1517 = vmax.f32 %v1485, %v952
    %v1518 = vmax.f32 %v1486, %v955
    %v1519 = vmax.f32 %v1487, %v958
    %v1520 = vmax.f32 %v1488, %v961
    %v1521 = vmax.f32 %v1489, %v964
    %v1522 = vmax.f32 %v1490, %v967
    %v1523 = vmax.f32 %v1491, %v970
    %v1524 = vmax.f32 %v1492, %v973
    %v1525 = vmax.f32 %v1493, %v976
    %v1526 = vmax.f32 %v1494, %v979
    %v1527 = vmax.f32 %v1495, %v982
    %v1528 = vmax.f32 %v1496, %v985
    %v1529 = vmax.f32 %v1497, %v988
    %v1530 = vmax.f32 %v1498, %v991
    %v1531 = vld [vmem:[#allocation5] sm:$0xff]
    %v1532 = vld [vmem:[#allocation5 + $0x8] sm:$0xff]
    %v1533 = vld [vmem:[#allocation5 + $0x10] sm:$0xff]
    %v1534 = vld [vmem:[#allocation5 + $0x18] sm:$0xff]
    %v1535 = vld [vmem:[#allocation5 + $0x20] sm:$0xff]
    %v1536 = vld [vmem:[#allocation5 + $0x28] sm:$0xff]
    %v1537 = vld [vmem:[#allocation5 + $0x30] sm:$0xff]
    %v1538 = vld [vmem:[#allocation5 + $0x38] sm:$0xff]
    %v1539 = vld [vmem:[#allocation5 + $0x40] sm:$0xff]
    %v1540 = vld [vmem:[#allocation5 + $0x48] sm:$0xff]
    %v1541 = vld [vmem:[#allocation5 + $0x50] sm:$0xff]
    %v1542 = vld [vmem:[#allocation5 + $0x58] sm:$0xff]
    %v1543 = vld [vmem:[#allocation5 + $0x60] sm:$0xff]
    %v1544 = vld [vmem:[#allocation5 + $0x68] sm:$0xff]
    %v1545 = vld [vmem:[#allocation5 + $0x70] sm:$0xff]
    %v1546 = vld [vmem:[#allocation5 + $0x78] sm:$0xff]
    %v1547 = vld [vmem:[#allocation5 + $0x80] sm:$0xff]
    %v1548 = vld [vmem:[#allocation5 + $0x88] sm:$0xff]
    %v1549 = vld [vmem:[#allocation5 + $0x90] sm:$0xff]
    %v1550 = vld [vmem:[#allocation5 + $0x98] sm:$0xff]
    %v1551 = vld [vmem:[#allocation5 + $0xa0] sm:$0xff]
    %v1552 = vld [vmem:[#allocation5 + $0xa8] sm:$0xff]
    %v1553 = vld [vmem:[#allocation5 + $0xb0] sm:$0xff]
    %v1554 = vld [vmem:[#allocation5 + $0xb8] sm:$0xff]
    %v1555 = vld [vmem:[#allocation5 + $0xc0] sm:$0xff]
    %v1556 = vld [vmem:[#allocation5 + $0xc8] sm:$0xff]
    %v1557 = vld [vmem:[#allocation5 + $0xd0] sm:$0xff]
    %v1558 = vld [vmem:[#allocation5 + $0xd8] sm:$0xff]
    %v1559 = vld [vmem:[#allocation5 + $0xe0] sm:$0xff]
    %v1560 = vld [vmem:[#allocation5 + $0xe8] sm:$0xff]
    %v1561 = vld [vmem:[#allocation5 + $0xf0] sm:$0xff]
    %v1562 = vld [vmem:[#allocation5 + $0xf8] sm:$0xff]
    %v1563 = vsub.f32 %v1467, %v1499
    %v1564 = vsub.f32 %v1468, %v1500
    %v1565 = vsub.f32 %v1469, %v1501
    %v1566 = vsub.f32 %v1470, %v1502
    %v1567 = vsub.f32 %v1471, %v1503
    %v1568 = vsub.f32 %v1472, %v1504
    %v1569 = vsub.f32 %v1473, %v1505
    %v1570 = vsub.f32 %v1474, %v1506
    %v1571 = vsub.f32 %v1475, %v1507
    %v1572 = vsub.f32 %v1476, %v1508
    %v1573 = vsub.f32 %v1477, %v1509
    %v1574 = vsub.f32 %v1478, %v1510
    %v1575 = vsub.f32 %v1479, %v1511
    %v1576 = vsub.f32 %v1480, %v1512
    %v1577 = vsub.f32 %v1481, %v1513
    %v1578 = vsub.f32 %v1482, %v1514
    %v1579 = vsub.f32 %v1483, %v1515
    %v1580 = vsub.f32 %v1484, %v1516
    %v1581 = vsub.f32 %v1485, %v1517
    %v1582 = vsub.f32 %v1486, %v1518
    %v1583 = vsub.f32 %v1487, %v1519
    %v1584 = vsub.f32 %v1488, %v1520
    %v1585 = vsub.f32 %v1489, %v1521
    %v1586 = vsub.f32 %v1490, %v1522
    %v1587 = vsub.f32 %v1491, %v1523
    %v1588 = vsub.f32 %v1492, %v1524
    %v1589 = vsub.f32 %v1493, %v1525
    %v1590 = vsub.f32 %v1494, %v1526
    %v1591 = vsub.f32 %v1495, %v1527
    %v1592 = vsub.f32 %v1496, %v1528
    %v1593 = vsub.f32 %v1497, %v1529
    %v1594 = vsub.f32 %v1498, %v1530
    %v1595 = vmul.f32 %v1563, 1.442695
    %v1596 = vpow.pop %v1595
    %v1597 = vmul.f32 %v1564, 1.442695
    %v1598 = vpow.pop %v1597
    %v1599 = vmul.f32 %v1565, 1.442695
    %v1600 = vpow.pop %v1599
    %v1601 = vmul.f32 %v1566, 1.442695
    %v1602 = vpow.pop %v1601
    %v1603 = vmul.f32 %v1567, 1.442695
    %v1604 = vpow.pop %v1603
    %v1605 = vmul.f32 %v1568, 1.442695
    %v1606 = vpow.pop %v1605
    %v1607 = vmul.f32 %v1569, 1.442695
    %v1608 = vpow.pop %v1607
    %v1609 = vmul.f32 %v1570, 1.442695
    %v1610 = vpow.pop %v1609
    %v1611 = vmul.f32 %v1571, 1.442695
    %v1612 = vpow.pop %v1611
    %v1613 = vmul.f32 %v1572, 1.442695
    %v1614 = vpow.pop %v1613
    %v1615 = vmul.f32 %v1573, 1.442695
    %v1616 = vpow.pop %v1615
    %v1617 = vmul.f32 %v1574, 1.442695
    %v1618 = vpow.pop %v1617
    %v1619 = vmul.f32 %v1575, 1.442695
    %v1620 = vpow.pop %v1619
    %v1621 = vmul.f32 %v1576, 1.442695
    %v1622 = vpow.pop %v1621
    %v1623 = vmul.f32 %v1577, 1.442695
    %v1624 = vpow.pop %v1623
    %v1625 = vmul.f32 %v1578, 1.442695
    %v1626 = vpow.pop %v1625
    %v1627 = vmul.f32 %v1579, 1.442695
    %v1628 = vpow.pop %v1627
    %v1629 = vmul.f32 %v1580, 1.442695
    %v1630 = vpow.pop %v1629
    %v1631 = vmul.f32 %v1581, 1.442695
    %v1632 = vpow.pop %v1631
    %v1633 = vmul.f32 %v1582, 1.442695
    %v1634 = vpow.pop %v1633
    %v1635 = vmul.f32 %v1583, 1.442695
    %v1636 = vpow.pop %v1635
    %v1637 = vmul.f32 %v1584, 1.442695
    %v1638 = vpow.pop %v1637
    %v1639 = vmul.f32 %v1585, 1.442695
    %v1640 = vpow.pop %v1639
    %v1641 = vmul.f32 %v1586, 1.442695
    %v1642 = vpow.pop %v1641
    %v1643 = vmul.f32 %v1587, 1.442695
    %v1644 = vpow.pop %v1643
    %v1645 = vmul.f32 %v1588, 1.442695
    %v1646 = vpow.pop %v1645
    %v1647 = vmul.f32 %v1589, 1.442695
    %v1648 = vpow.pop %v1647
    %v1649 = vmul.f32 %v1590, 1.442695
    %v1650 = vpow.pop %v1649
    %v1651 = vmul.f32 %v1591, 1.442695
    %v1652 = vpow.pop %v1651
    %v1653 = vmul.f32 %v1592, 1.442695
    %v1654 = vpow.pop %v1653
    %v1655 = vmul.f32 %v1593, 1.442695
    %v1656 = vpow.pop %v1655
    %v1657 = vmul.f32 %v1594, 1.442695
    %v1658 = vpow.pop %v1657
    %v1659 = vmul.f32 %v1531, %v1596
    %v1660 = vmul.f32 %v1532, %v1598
    %v1661 = vmul.f32 %v1533, %v1600
    %v1662 = vmul.f32 %v1534, %v1602
    %v1663 = vmul.f32 %v1535, %v1604
    %v1664 = vmul.f32 %v1536, %v1606
    %v1665 = vmul.f32 %v1537, %v1608
    %v1666 = vmul.f32 %v1538, %v1610
    %v1667 = vmul.f32 %v1539, %v1612
    %v1668 = vmul.f32 %v1540, %v1614
    %v1669 = vmul.f32 %v1541, %v1616
    %v1670 = vmul.f32 %v1542, %v1618
    %v1671 = vmul.f32 %v1543, %v1620
    %v1672 = vmul.f32 %v1544, %v1622
    %v1673 = vmul.f32 %v1545, %v1624
    %v1674 = vmul.f32 %v1546, %v1626
    %v1675 = vmul.f32 %v1547, %v1628
    %v1676 = vmul.f32 %v1548, %v1630
    %v1677 = vmul.f32 %v1549, %v1632
    %v1678 = vmul.f32 %v1550, %v1634
    %v1679 = vmul.f32 %v1551, %v1636
    %v1680 = vmul.f32 %v1552, %v1638
    %v1681 = vmul.f32 %v1553, %v1640
    %v1682 = vmul.f32 %v1554, %v1642
    %v1683 = vmul.f32 %v1555, %v1644
    %v1684 = vmul.f32 %v1556, %v1646
    %v1685 = vmul.f32 %v1557, %v1648
    %v1686 = vmul.f32 %v1558, %v1650
    %v1687 = vmul.f32 %v1559, %v1652
    %v1688 = vmul.f32 %v1560, %v1654
    %v1689 = vmul.f32 %v1561, %v1656
    %v1690 = vmul.f32 %v1562, %v1658
    %v1691 = vsub.f32 %v1104, %v1499
    %v1692 = vsub.f32 %v1104, %v1500
    %v1693 = vsub.f32 %v1104, %v1501
    %v1694 = vsub.f32 %v1104, %v1502
    %v1695 = vsub.f32 %v1104, %v1503
    %v1696 = vsub.f32 %v1104, %v1504
    %v1697 = vsub.f32 %v1104, %v1505
    %v1698 = vsub.f32 %v1104, %v1506
    %v1699 = vsub.f32 %v1104, %v1507
    %v1700 = vsub.f32 %v1104, %v1508
    %v1701 = vsub.f32 %v1104, %v1509
    %v1702 = vsub.f32 %v1104, %v1510
    %v1703 = vsub.f32 %v1104, %v1511
    %v1704 = vsub.f32 %v1104, %v1512
    %v1705 = vsub.f32 %v1104, %v1513
    %v1706 = vsub.f32 %v1104, %v1514
    %v1707 = vsub.f32 %v1104, %v1515
    %v1708 = vsub.f32 %v1104, %v1516
    %v1709 = vsub.f32 %v1104, %v1517
    %v1710 = vsub.f32 %v1104, %v1518
    %v1711 = vsub.f32 %v1104, %v1519
    %v1712 = vsub.f32 %v1104, %v1520
    %v1713 = vsub.f32 %v1104, %v1521
    %v1714 = vsub.f32 %v1104, %v1522
    %v1715 = vsub.f32 %v1104, %v1523
    %v1716 = vsub.f32 %v1104, %v1524
    %v1717 = vsub.f32 %v1104, %v1525
    %v1718 = vsub.f32 %v1104, %v1526
    %v1719 = vsub.f32 %v1104, %v1527
    %v1720 = vsub.f32 %v1104, %v1528
    %v1721 = vsub.f32 %v1104, %v1529
    %v1722 = vsub.f32 %v1104, %v1530
    %v1723 = vlog2.pop %v1299
    %v1724 = vmul.f32 %v1723, 0.6931472
    %v1725 = vlog2.pop %v1302
    %v1726 = vmul.f32 %v1725, 0.6931472
    %v1727 = vlog2.pop %v1305
    %v1728 = vmul.f32 %v1727, 0.6931472
    %v1729 = vlog2.pop %v1308
    %v1730 = vmul.f32 %v1729, 0.6931472
    %v1731 = vlog2.pop %v1311
    %v1732 = vmul.f32 %v1731, 0.6931472
    %v1733 = vlog2.pop %v1314
    %v1734 = vmul.f32 %v1733, 0.6931472
    %v1735 = vlog2.pop %v1317
    %v1736 = vmul.f32 %v1735, 0.6931472
    %v1737 = vlog2.pop %v1320
    %v1738 = vmul.f32 %v1737, 0.6931472
    %v1739 = vlog2.pop %v1323
    %v1740 = vmul.f32 %v1739, 0.6931472
    %v1741 = vlog2.pop %v1326
    %v1742 = vmul.f32 %v1741, 0.6931472
    %v1743 = vlog2.pop %v1329
    %v1744 = vmul.f32 %v1743, 0.6931472
    %v1745 = vlog2.pop %v1332
    %v1746 = vmul.f32 %v1745, 0.6931472
    %v1747 = vlog2.pop %v1335
    %v1748 = vmul.f32 %v1747, 0.6931472
    %v1749 = vlog2.pop %v1338
    %v1750 = vmul.f32 %v1749, 0.6931472
    %v1751 = vlog2.pop %v1341
    %v1752 = vmul.f32 %v1751, 0.6931472
    %v1753 = vlog2.pop %v1344
    %v1754 = vmul.f32 %v1753, 0.6931472
    %v1755 = vlog2.pop %v1347
    %v1756 = vmul.f32 %v1755, 0.6931472
    %v1757 = vlog2.pop %v1350
    %v1758 = vmul.f32 %v1757, 0.6931472
    %v1759 = vlog2.pop %v1353
    %v1760 = vmul.f32 %v1759, 0.6931472
    %v1761 = vlog2.pop %v1356
    %v1762 = vmul.f32 %v1761, 0.6931472
    %v1763 = vlog2.pop %v1359
    %v1764 = vmul.f32 %v1763, 0.6931472
    %v1765 = vlog2.pop %v1362
    %v1766 = vmul.f32 %v1765, 0.6931472
    %v1767 = vlog2.pop %v1365
    %v1768 = vmul.f32 %v1767, 0.6931472
    %v1769 = vlog2.pop %v1368
    %v1770 = vmul.f32 %v1769, 0.6931472
    %v1771 = vlog2.pop %v1371
    %v1772 = vmul.f32 %v1771, 0.6931472
    %v1773 = vlog2.pop %v1374
    %v1774 = vmul.f32 %v1773, 0.6931472
    %v1775 = vlog2.pop %v1377
    %v1776 = vmul.f32 %v1775, 0.6931472
    %v1777 = vlog2.pop %v1380
    %v1778 = vmul.f32 %v1777, 0.6931472
    %v1779 = vlog2.pop %v1383
    %v1780 = vmul.f32 %v1779, 0.6931472
    %v1781 = vlog2.pop %v1386
    %v1782 = vmul.f32 %v1781, 0.6931472
    %v1783 = vlog2.pop %v1389
    %v1784 = vmul.f32 %v1783, 0.6931472
    %v1785 = vlog2.pop %v1392
    %v1786 = vmul.f32 %v1785, 0.6931472
    %v1787 = vadd.f32 %v1691, %v1724
    %v1788 = vadd.f32 %v1692, %v1726
    %v1789 = vadd.f32 %v1693, %v1728
    %v1790 = vadd.f32 %v1694, %v1730
    %v1791 = vadd.f32 %v1695, %v1732
    %v1792 = vadd.f32 %v1696, %v1734
    %v1793 = vadd.f32 %v1697, %v1736
    %v1794 = vadd.f32 %v1698, %v1738
    %v1795 = vadd.f32 %v1699, %v1740
    %v1796 = vadd.f32 %v1700, %v1742
    %v1797 = vadd.f32 %v1701, %v1744
    %v1798 = vadd.f32 %v1702, %v1746
    %v1799 = vadd.f32 %v1703, %v1748
    %v1800 = vadd.f32 %v1704, %v1750
    %v1801 = vadd.f32 %v1705, %v1752
    %v1802 = vadd.f32 %v1706, %v1754
    %v1803 = vadd.f32 %v1707, %v1756
    %v1804 = vadd.f32 %v1708, %v1758
    %v1805 = vadd.f32 %v1709, %v1760
    %v1806 = vadd.f32 %v1710, %v1762
    %v1807 = vadd.f32 %v1711, %v1764
    %v1808 = vadd.f32 %v1712, %v1766
    %v1809 = vadd.f32 %v1713, %v1768
    %v1810 = vadd.f32 %v1714, %v1770
    %v1811 = vadd.f32 %v1715, %v1772
    %v1812 = vadd.f32 %v1716, %v1774
    %v1813 = vadd.f32 %v1717, %v1776
    %v1814 = vadd.f32 %v1718, %v1778
    %v1815 = vadd.f32 %v1719, %v1780
    %v1816 = vadd.f32 %v1720, %v1782
    %v1817 = vadd.f32 %v1721, %v1784
    %v1818 = vadd.f32 %v1722, %v1786
    %v1819 = vmul.f32 %v1787, 1.442695
    %v1820 = vpow.pop %v1819
    %v1821 = vmul.f32 %v1788, 1.442695
    %v1822 = vpow.pop %v1821
    %v1823 = vmul.f32 %v1789, 1.442695
    %v1824 = vpow.pop %v1823
    %v1825 = vmul.f32 %v1790, 1.442695
    %v1826 = vpow.pop %v1825
    %v1827 = vmul.f32 %v1791, 1.442695
    %v1828 = vpow.pop %v1827
    %v1829 = vmul.f32 %v1792, 1.442695
    %v1830 = vpow.pop %v1829
    %v1831 = vmul.f32 %v1793, 1.442695
    %v1832 = vpow.pop %v1831
    %v1833 = vmul.f32 %v1794, 1.442695
    %v1834 = vpow.pop %v1833
    %v1835 = vmul.f32 %v1795, 1.442695
    %v1836 = vpow.pop %v1835
    %v1837 = vmul.f32 %v1796, 1.442695
    %v1838 = vpow.pop %v1837
    %v1839 = vmul.f32 %v1797, 1.442695
    %v1840 = vpow.pop %v1839
    %v1841 = vmul.f32 %v1798, 1.442695
    %v1842 = vpow.pop %v1841
    %v1843 = vmul.f32 %v1799, 1.442695
    %v1844 = vpow.pop %v1843
    %v1845 = vmul.f32 %v1800, 1.442695
    %v1846 = vpow.pop %v1845
    %v1847 = vmul.f32 %v1801, 1.442695
    %v1848 = vpow.pop %v1847
    %v1849 = vmul.f32 %v1802, 1.442695
    %v1850 = vpow.pop %v1849
    %v1851 = vmul.f32 %v1803, 1.442695
    %v1852 = vpow.pop %v1851
    %v1853 = vmul.f32 %v1804, 1.442695
    %v1854 = vpow.pop %v1853
    %v1855 = vmul.f32 %v1805, 1.442695
    %v1856 = vpow.pop %v1855
    %v1857 = vmul.f32 %v1806, 1.442695
    %v1858 = vpow.pop %v1857
    %v1859 = vmul.f32 %v1807, 1.442695
    %v1860 = vpow.pop %v1859
    %v1861 = vmul.f32 %v1808, 1.442695
    %v1862 = vpow.pop %v1861
    %v1863 = vmul.f32 %v1809, 1.442695
    %v1864 = vpow.pop %v1863
    %v1865 = vmul.f32 %v1810, 1.442695
    %v1866 = vpow.pop %v1865
    %v1867 = vmul.f32 %v1811, 1.442695
    %v1868 = vpow.pop %v1867
    %v1869 = vmul.f32 %v1812, 1.442695
    %v1870 = vpow.pop %v1869
    %v1871 = vmul.f32 %v1813, 1.442695
    %v1872 = vpow.pop %v1871
    %v1873 = vmul.f32 %v1814, 1.442695
    %v1874 = vpow.pop %v1873
    %v1875 = vmul.f32 %v1815, 1.442695
    %v1876 = vpow.pop %v1875
    %v1877 = vmul.f32 %v1816, 1.442695
    %v1878 = vpow.pop %v1877
    %v1879 = vmul.f32 %v1817, 1.442695
    %v1880 = vpow.pop %v1879
    %v1881 = vmul.f32 %v1818, 1.442695
    %v1882 = vpow.pop %v1881
    %v1883 = vadd.f32 %v1659, %v1820
    %v1884 = vadd.f32 %v1660, %v1822
    %v1885 = vadd.f32 %v1661, %v1824
    %v1886 = vadd.f32 %v1662, %v1826
    %v1887 = vadd.f32 %v1663, %v1828
    %v1888 = vadd.f32 %v1664, %v1830
    %v1889 = vadd.f32 %v1665, %v1832
    %v1890 = vadd.f32 %v1666, %v1834
    %v1891 = vadd.f32 %v1667, %v1836
    %v1892 = vadd.f32 %v1668, %v1838
    %v1893 = vadd.f32 %v1669, %v1840
    %v1894 = vadd.f32 %v1670, %v1842
    %v1895 = vadd.f32 %v1671, %v1844
    %v1896 = vadd.f32 %v1672, %v1846
    %v1897 = vadd.f32 %v1673, %v1848
    %v1898 = vadd.f32 %v1674, %v1850
    %v1899 = vadd.f32 %v1675, %v1852
    %v1900 = vadd.f32 %v1676, %v1854
    %v1901 = vadd.f32 %v1677, %v1856
    %v1902 = vadd.f32 %v1678, %v1858
    %v1903 = vadd.f32 %v1679, %v1860
    %v1904 = vadd.f32 %v1680, %v1862
    %v1905 = vadd.f32 %v1681, %v1864
    %v1906 = vadd.f32 %v1682, %v1866
    %v1907 = vadd.f32 %v1683, %v1868
    %v1908 = vadd.f32 %v1684, %v1870
    %v1909 = vadd.f32 %v1685, %v1872
    %v1910 = vadd.f32 %v1686, %v1874
    %v1911 = vadd.f32 %v1687, %v1876
    %v1912 = vadd.f32 %v1688, %v1878
    %v1913 = vadd.f32 %v1689, %v1880
    %v1914 = vadd.f32 %v1690, %v1882
    %vm1915 = vcmask 7168
    %1916 = vst.msk [vmem:[#allocation5] sm:$0xff] %vm1915, %v1883
    %1917 = vst.msk [vmem:[#allocation5 + $0x8] sm:$0xff] %vm1915, %v1884
    %1918 = vst.msk [vmem:[#allocation5 + $0x10] sm:$0xff] %vm1915, %v1885
    %1919 = vst.msk [vmem:[#allocation5 + $0x18] sm:$0xff] %vm1915, %v1886
    %1920 = vst.msk [vmem:[#allocation5 + $0x20] sm:$0xff] %vm1915, %v1887
    %1921 = vst.msk [vmem:[#allocation5 + $0x28] sm:$0xff] %vm1915, %v1888
    %1922 = vst.msk [vmem:[#allocation5 + $0x30] sm:$0xff] %vm1915, %v1889
    %1923 = vst.msk [vmem:[#allocation5 + $0x38] sm:$0xff] %vm1915, %v1890
    %1924 = vst.msk [vmem:[#allocation5 + $0x40] sm:$0xff] %vm1915, %v1891
    %1925 = vst.msk [vmem:[#allocation5 + $0x48] sm:$0xff] %vm1915, %v1892
    %1926 = vst.msk [vmem:[#allocation5 + $0x50] sm:$0xff] %vm1915, %v1893
    %1927 = vst.msk [vmem:[#allocation5 + $0x58] sm:$0xff] %vm1915, %v1894
    %1928 = vst.msk [vmem:[#allocation5 + $0x60] sm:$0xff] %vm1915, %v1895
    %1929 = vst.msk [vmem:[#allocation5 + $0x68] sm:$0xff] %vm1915, %v1896
    %1930 = vst.msk [vmem:[#allocation5 + $0x70] sm:$0xff] %vm1915, %v1897
    %1931 = vst.msk [vmem:[#allocation5 + $0x78] sm:$0xff] %vm1915, %v1898
    %1932 = vst.msk [vmem:[#allocation5 + $0x80] sm:$0xff] %vm1915, %v1899
    %1933 = vst.msk [vmem:[#allocation5 + $0x88] sm:$0xff] %vm1915, %v1900
    %1934 = vst.msk [vmem:[#allocation5 + $0x90] sm:$0xff] %vm1915, %v1901
    %1935 = vst.msk [vmem:[#allocation5 + $0x98] sm:$0xff] %vm1915, %v1902
    %1936 = vst.msk [vmem:[#allocation5 + $0xa0] sm:$0xff] %vm1915, %v1903
    %1937 = vst.msk [vmem:[#allocation5 + $0xa8] sm:$0xff] %vm1915, %v1904
    %1938 = vst.msk [vmem:[#allocation5 + $0xb0] sm:$0xff] %vm1915, %v1905
    %1939 = vst.msk [vmem:[#allocation5 + $0xb8] sm:$0xff] %vm1915, %v1906
    %1940 = vst.msk [vmem:[#allocation5 + $0xc0] sm:$0xff] %vm1915, %v1907
    %1941 = vst.msk [vmem:[#allocation5 + $0xc8] sm:$0xff] %vm1915, %v1908
    %1942 = vst.msk [vmem:[#allocation5 + $0xd0] sm:$0xff] %vm1915, %v1909
    %1943 = vst.msk [vmem:[#allocation5 + $0xd8] sm:$0xff] %vm1915, %v1910
    %1944 = vst.msk [vmem:[#allocation5 + $0xe0] sm:$0xff] %vm1915, %v1911
    %1945 = vst.msk [vmem:[#allocation5 + $0xe8] sm:$0xff] %vm1915, %v1912
    %1946 = vst.msk [vmem:[#allocation5 + $0xf0] sm:$0xff] %vm1915, %v1913
    %1947 = vst.msk [vmem:[#allocation5 + $0xf8] sm:$0xff] %vm1915, %v1914
    %1948 = vst.msk [vmem:[#allocation4] sm:$0xff] %vm1915, %v1499
    %1949 = vst.msk [vmem:[#allocation4 + $0x8] sm:$0xff] %vm1915, %v1500
    %1950 = vst.msk [vmem:[#allocation4 + $0x10] sm:$0xff] %vm1915, %v1501
    %1951 = vst.msk [vmem:[#allocation4 + $0x18] sm:$0xff] %vm1915, %v1502
    %1952 = vst.msk [vmem:[#allocation4 + $0x20] sm:$0xff] %vm1915, %v1503
    %1953 = vst.msk [vmem:[#allocation4 + $0x28] sm:$0xff] %vm1915, %v1504
    %1954 = vst.msk [vmem:[#allocation4 + $0x30] sm:$0xff] %vm1915, %v1505
    %1955 = vst.msk [vmem:[#allocation4 + $0x38] sm:$0xff] %vm1915, %v1506
    %1956 = vst.msk [vmem:[#allocation4 + $0x40] sm:$0xff] %vm1915, %v1507
    %1957 = vst.msk [vmem:[#allocation4 + $0x48] sm:$0xff] %vm1915, %v1508
    %1958 = vst.msk [vmem:[#allocation4 + $0x50] sm:$0xff] %vm1915, %v1509
    %1959 = vst.msk [vmem:[#allocation4 + $0x58] sm:$0xff] %vm1915, %v1510
    %1960 = vst.msk [vmem:[#allocation4 + $0x60] sm:$0xff] %vm1915, %v1511
    %1961 = vst.msk [vmem:[#allocation4 + $0x68] sm:$0xff] %vm1915, %v1512
    %1962 = vst.msk [vmem:[#allocation4 + $0x70] sm:$0xff] %vm1915, %v1513
    %1963 = vst.msk [vmem:[#allocation4 + $0x78] sm:$0xff] %vm1915, %v1514
    %1964 = vst.msk [vmem:[#allocation4 + $0x80] sm:$0xff] %vm1915, %v1515
    %1965 = vst.msk [vmem:[#allocation4 + $0x88] sm:$0xff] %vm1915, %v1516
    %1966 = vst.msk [vmem:[#allocation4 + $0x90] sm:$0xff] %vm1915, %v1517
    %1967 = vst.msk [vmem:[#allocation4 + $0x98] sm:$0xff] %vm1915, %v1518
    %1968 = vst.msk [vmem:[#allocation4 + $0xa0] sm:$0xff] %vm1915, %v1519
    %1969 = vst.msk [vmem:[#allocation4 + $0xa8] sm:$0xff] %vm1915, %v1520
    %1970 = vst.msk [vmem:[#allocation4 + $0xb0] sm:$0xff] %vm1915, %v1521
    %1971 = vst.msk [vmem:[#allocation4 + $0xb8] sm:$0xff] %vm1915, %v1522
    %1972 = vst.msk [vmem:[#allocation4 + $0xc0] sm:$0xff] %vm1915, %v1523
    %1973 = vst.msk [vmem:[#allocation4 + $0xc8] sm:$0xff] %vm1915, %v1524
    %1974 = vst.msk [vmem:[#allocation4 + $0xd0] sm:$0xff] %vm1915, %v1525
    %1975 = vst.msk [vmem:[#allocation4 + $0xd8] sm:$0xff] %vm1915, %v1526
    %1976 = vst.msk [vmem:[#allocation4 + $0xe0] sm:$0xff] %vm1915, %v1527
    %1977 = vst.msk [vmem:[#allocation4 + $0xe8] sm:$0xff] %vm1915, %v1528
    %1978 = vst.msk [vmem:[#allocation4 + $0xf0] sm:$0xff] %vm1915, %v1529
    %1979 = vst.msk [vmem:[#allocation4 + $0xf8] sm:$0xff] %vm1915, %v1530
    %s1980 = smul.u32 0, 2
    %s1981 = scalar_lea.vmem [#allocation6], %s1980
    %v1982 = vld [vmem:[%s1981] sm:$0x3]
    %v1985 = vcombine.low %v1028, %v1065
    %v1987 = vunpack.c.l.s4 1966171168
    %v1988 = vunpack.c.0.s8 %v1987
    %v1989 = vlaneseq
    %v1990 = vshrl.u32 %v1989, 7
    %v1991 = vsub.s32 %v1988, %v1990
    %v1992 = vrot.slane %v1985, %v1991
    %v1994 = vunpack.c.l.s4 1966171168
    %v1995 = vunpack.c.0.s8 %v1994
    %v1996 = vlaneseq
    %v1997 = vshrl.u32 %v1996, 7
    %v1998 = vsub.s32 %v1995, %v1997
    %v1999 = vrot.slane %v1992, %v1998
    %v2001 = vmax.f32 %v1982, %v1999
    %s2002 = scalar_lea.vmem [#allocation7], %s1980
    %v2003 = vld [vmem:[%s2002] sm:$0x3]
    %v2004 = vsub.f32 %v1982, %v2001
    %v2005 = vmul.f32 %v2004, 1.442695
    %v2006 = vpow.pop %v2005
    %v2007 = vmul.f32 %v2003, %v2006
    %v2008 = vsub.f32 %v1104, %v2001
    %v2009 = vlog2.pop %v1429
    %v2010 = vmul.f32 %v2009, 0.6931472
    %v2011 = vlog2.pop %v1466
    %v2012 = vmul.f32 %v2011, 0.6931472
    %v2015 = vcombine.low %v2010, %v2012
    %v2017 = vunpack.c.l.s4 1966171168
    %v2018 = vunpack.c.0.s8 %v2017
    %v2019 = vlaneseq
    %v2020 = vshrl.u32 %v2019, 7
    %v2021 = vsub.s32 %v2018, %v2020
    %v2022 = vrot.slane %v2015, %v2021
    %v2024 = vunpack.c.l.s4 1966171168
    %v2025 = vunpack.c.0.s8 %v2024
    %v2026 = vlaneseq
    %v2027 = vshrl.u32 %v2026, 7
    %v2028 = vsub.s32 %v2025, %v2027
    %v2029 = vrot.slane %v2022, %v2028
    %v2031 = vadd.f32 %v2008, %v2029
    %v2032 = vmul.f32 %v2031, 1.442695
    %v2033 = vpow.pop %v2032
    %v2034 = vadd.f32 %v2007, %v2033
    %v2035 = vlaneseq
    %vm2036 = vcmp.ge.s32.totalorder %v2035, 0
    %vm2037 = vcmp.lt.s32.totalorder %v2035, 256
    %vm2038 = vmand %vm2036, %vm2037
    %2039 = vst.msk [vmem:[%s2002] sm:$0x3] %vm2038, %v2034
    %2040 = vst.msk [vmem:[%s1981] sm:$0x3] %vm2038, %v2001
    %p2041 = scmp.eq.s32.totalorder 0, 0
    // Predicated region
    $region34: #{tpu_custom_call.1} parent=1 // pred_check
      %p2042 = pneg %p2041
    $region35: #{tpu_custom_call.1} parent=1 // pred_check_branch
      %2044 = sbr.rel (%p2042) target = $region37
    $region36: #{tpu_custom_call.1} parent=1 // pred_region
      %vm2045 = vcmp.eq.s32.totalorder %v594, %v660
      %vm2046 = vcmp.eq.s32.totalorder %v594, %v661
      %vm2047 = vcmp.eq.s32.totalorder %v595, %v660
      %vm2048 = vcmp.eq.s32.totalorder %v595, %v661
      %vm2049 = vcmp.eq.s32.totalorder %v596, %v660
      %vm2050 = vcmp.eq.s32.totalorder %v596, %v661
      %vm2051 = vcmp.eq.s32.totalorder %v597, %v660
      %vm2052 = vcmp.eq.s32.totalorder %v597, %v661
      %vm2053 = vcmp.eq.s32.totalorder %v598, %v660
      %vm2054 = vcmp.eq.s32.totalorder %v598, %v661
      %vm2055 = vcmp.eq.s32.totalorder %v599, %v660
      %vm2056 = vcmp.eq.s32.totalorder %v599, %v661
      %vm2057 = vcmp.eq.s32.totalorder %v600, %v660
      %vm2058 = vcmp.eq.s32.totalorder %v600, %v661
      %vm2059 = vcmp.eq.s32.totalorder %v601, %v660
      %vm2060 = vcmp.eq.s32.totalorder %v601, %v661
      %vm2061 = vcmp.eq.s32.totalorder %v602, %v660
      %vm2062 = vcmp.eq.s32.totalorder %v602, %v661
      %vm2063 = vcmp.eq.s32.totalorder %v603, %v660
      %vm2064 = vcmp.eq.s32.totalorder %v603, %v661
      %vm2065 = vcmp.eq.s32.totalorder %v604, %v660
      %vm2066 = vcmp.eq.s32.totalorder %v604, %v661
      %vm2067 = vcmp.eq.s32.totalorder %v605, %v660
      %vm2068 = vcmp.eq.s32.totalorder %v605, %v661
      %vm2069 = vcmp.eq.s32.totalorder %v606, %v660
      %vm2070 = vcmp.eq.s32.totalorder %v606, %v661
      %vm2071 = vcmp.eq.s32.totalorder %v607, %v660
      %vm2072 = vcmp.eq.s32.totalorder %v607, %v661
      %vm2073 = vcmp.eq.s32.totalorder %v608, %v660
      %vm2074 = vcmp.eq.s32.totalorder %v608, %v661
      %vm2075 = vcmp.eq.s32.totalorder %v609, %v660
      %vm2076 = vcmp.eq.s32.totalorder %v609, %v661
      %vm2077 = vcmp.eq.s32.totalorder %v610, %v660
      %vm2078 = vcmp.eq.s32.totalorder %v610, %v661
      %vm2079 = vcmp.eq.s32.totalorder %v611, %v660
      %vm2080 = vcmp.eq.s32.totalorder %v611, %v661
      %vm2081 = vcmp.eq.s32.totalorder %v612, %v660
      %vm2082 = vcmp.eq.s32.totalorder %v612, %v661
      %vm2083 = vcmp.eq.s32.totalorder %v613, %v660
      %vm2084 = vcmp.eq.s32.totalorder %v613, %v661
      %vm2085 = vcmp.eq.s32.totalorder %v614, %v660
      %vm2086 = vcmp.eq.s32.totalorder %v614, %v661
      %vm2087 = vcmp.eq.s32.totalorder %v615, %v660
      %vm2088 = vcmp.eq.s32.totalorder %v615, %v661
      %vm2089 = vcmp.eq.s32.totalorder %v616, %v660
      %vm2090 = vcmp.eq.s32.totalorder %v616, %v661
      %vm2091 = vcmp.eq.s32.totalorder %v617, %v660
      %vm2092 = vcmp.eq.s32.totalorder %v617, %v661
      %vm2093 = vcmp.eq.s32.totalorder %v618, %v660
      %vm2094 = vcmp.eq.s32.totalorder %v618, %v661
      %vm2095 = vcmp.eq.s32.totalorder %v619, %v660
      %vm2096 = vcmp.eq.s32.totalorder %v619, %v661
      %vm2097 = vcmp.eq.s32.totalorder %v620, %v660
      %vm2098 = vcmp.eq.s32.totalorder %v620, %v661
      %vm2099 = vcmp.eq.s32.totalorder %v621, %v660
      %vm2100 = vcmp.eq.s32.totalorder %v621, %v661
      %vm2101 = vcmp.eq.s32.totalorder %v622, %v660
      %vm2102 = vcmp.eq.s32.totalorder %v622, %v661
      %vm2103 = vcmp.eq.s32.totalorder %v623, %v660
      %vm2104 = vcmp.eq.s32.totalorder %v623, %v661
      %vm2105 = vcmp.eq.s32.totalorder %v624, %v660
      %vm2106 = vcmp.eq.s32.totalorder %v624, %v661
      %vm2107 = vcmp.eq.s32.totalorder %v625, %v660
      %vm2108 = vcmp.eq.s32.totalorder %v625, %v661
      %v2109 = vsel %vm2045, %v832, 0.0
      %v2110 = vsel %vm2046, %v833, 0.0
      %v2111 = vsel %vm2047, %v834, 0.0
      %v2112 = vsel %vm2048, %v835, 0.0
      %v2113 = vsel %vm2049, %v836, 0.0
      %v2114 = vsel %vm2050, %v837, 0.0
      %v2115 = vsel %vm2051, %v838, 0.0
      %v2116 = vsel %vm2052, %v839, 0.0
      %v2117 = vsel %vm2053, %v840, 0.0
      %v2118 = vsel %vm2054, %v841, 0.0
      %v2119 = vsel %vm2055, %v842, 0.0
      %v2120 = vsel %vm2056, %v843, 0.0
      %v2121 = vsel %vm2057, %v844, 0.0
      %v2122 = vsel %vm2058, %v845, 0.0
      %v2123 = vsel %vm2059, %v846, 0.0
      %v2124 = vsel %vm2060, %v847, 0.0
      %v2125 = vsel %vm2061, %v848, 0.0
      %v2126 = vsel %vm2062, %v849, 0.0
      %v2127 = vsel %vm2063, %v850, 0.0
      %v2128 = vsel %vm2064, %v851, 0.0
      %v2129 = vsel %vm2065, %v852, 0.0
      %v2130 = vsel %vm2066, %v853, 0.0
      %v2131 = vsel %vm2067, %v854, 0.0
      %v2132 = vsel %vm2068, %v855, 0.0
      %v2133 = vsel %vm2069, %v856, 0.0
      %v2134 = vsel %vm2070, %v857, 0.0
      %v2135 = vsel %vm2071, %v858, 0.0
      %v2136 = vsel %vm2072, %v859, 0.0
      %v2137 = vsel %vm2073, %v860, 0.0
      %v2138 = vsel %vm2074, %v861, 0.0
      %v2139 = vsel %vm2075, %v862, 0.0
      %v2140 = vsel %vm2076, %v863, 0.0
      %v2141 = vsel %vm2077, %v864, 0.0
      %v2142 = vsel %vm2078, %v865, 0.0
      %v2143 = vsel %vm2079, %v866, 0.0
      %v2144 = vsel %vm2080, %v867, 0.0
      %v2145 = vsel %vm2081, %v868, 0.0
      %v2146 = vsel %vm2082, %v869, 0.0
      %v2147 = vsel %vm2083, %v870, 0.0
      %v2148 = vsel %vm2084, %v871, 0.0
      %v2149 = vsel %vm2085, %v872, 0.0
      %v2150 = vsel %vm2086, %v873, 0.0
      %v2151 = vsel %vm2087, %v874, 0.0
      %v2152 = vsel %vm2088, %v875, 0.0
      %v2153 = vsel %vm2089, %v876, 0.0
      %v2154 = vsel %vm2090, %v877, 0.0
      %v2155 = vsel %vm2091, %v878, 0.0
      %v2156 = vsel %vm2092, %v879, 0.0
      %v2157 = vsel %vm2093, %v880, 0.0
      %v2158 = vsel %vm2094, %v881, 0.0
      %v2159 = vsel %vm2095, %v882, 0.0
      %v2160 = vsel %vm2096, %v883, 0.0
      %v2161 = vsel %vm2097, %v884, 0.0
      %v2162 = vsel %vm2098, %v885, 0.0
      %v2163 = vsel %vm2099, %v886, 0.0
      %v2164 = vsel %vm2100, %v887, 0.0
      %v2165 = vsel %vm2101, %v888, 0.0
      %v2166 = vsel %vm2102, %v889, 0.0
      %v2167 = vsel %vm2103, %v890, 0.0
      %v2168 = vsel %vm2104, %v891, 0.0
      %v2169 = vsel %vm2105, %v892, 0.0
      %v2170 = vsel %vm2106, %v893, 0.0
      %v2171 = vsel %vm2107, %v894, 0.0
      %v2172 = vsel %vm2108, %v895, 0.0
      %v2173 = vadd.f32 %v2109, %v2110
      %2174 = vadd.xlane.f32.xlu0 %v2173
      %v2175 = vpop.xlane.xlu0 %2174
      %v2176 = vadd.f32 %v2111, %v2112
      %2177 = vadd.xlane.f32.xlu0 %v2176
      %v2178 = vpop.xlane.xlu0 %2177
      %v2179 = vadd.f32 %v2113, %v2114
      %2180 = vadd.xlane.f32.xlu0 %v2179
      %v2181 = vpop.xlane.xlu0 %2180
      %v2182 = vadd.f32 %v2115, %v2116
      %2183 = vadd.xlane.f32.xlu0 %v2182
      %v2184 = vpop.xlane.xlu0 %2183
      %v2185 = vadd.f32 %v2117, %v2118
      %2186 = vadd.xlane.f32.xlu0 %v2185
      %v2187 = vpop.xlane.xlu0 %2186
      %v2188 = vadd.f32 %v2119, %v2120
      %2189 = vadd.xlane.f32.xlu0 %v2188
      %v2190 = vpop.xlane.xlu0 %2189
      %v2191 = vadd.f32 %v2121, %v2122
      %2192 = vadd.xlane.f32.xlu0 %v2191
      %v2193 = vpop.xlane.xlu0 %2192
      %v2194 = vadd.f32 %v2123, %v2124
      %2195 = vadd.xlane.f32.xlu0 %v2194
      %v2196 = vpop.xlane.xlu0 %2195
      %v2197 = vadd.f32 %v2125, %v2126
      %2198 = vadd.xlane.f32.xlu0 %v2197
      %v2199 = vpop.xlane.xlu0 %2198
      %v2200 = vadd.f32 %v2127, %v2128
      %2201 = vadd.xlane.f32.xlu0 %v2200
      %v2202 = vpop.xlane.xlu0 %2201
      %v2203 = vadd.f32 %v2129, %v2130
      %2204 = vadd.xlane.f32.xlu0 %v2203
      %v2205 = vpop.xlane.xlu0 %2204
      %v2206 = vadd.f32 %v2131, %v2132
      %2207 = vadd.xlane.f32.xlu0 %v2206
      %v2208 = vpop.xlane.xlu0 %2207
      %v2209 = vadd.f32 %v2133, %v2134
      %2210 = vadd.xlane.f32.xlu0 %v2209
      %v2211 = vpop.xlane.xlu0 %2210
      %v2212 = vadd.f32 %v2135, %v2136
      %2213 = vadd.xlane.f32.xlu0 %v2212
      %v2214 = vpop.xlane.xlu0 %2213
      %v2215 = vadd.f32 %v2137, %v2138
      %2216 = vadd.xlane.f32.xlu0 %v2215
      %v2217 = vpop.xlane.xlu0 %2216
      %v2218 = vadd.f32 %v2139, %v2140
      %2219 = vadd.xlane.f32.xlu0 %v2218
      %v2220 = vpop.xlane.xlu0 %2219
      %v2221 = vadd.f32 %v2141, %v2142
      %2222 = vadd.xlane.f32.xlu0 %v2221
      %v2223 = vpop.xlane.xlu0 %2222
      %v2224 = vadd.f32 %v2143, %v2144
      %2225 = vadd.xlane.f32.xlu0 %v2224
      %v2226 = vpop.xlane.xlu0 %2225
      %v2227 = vadd.f32 %v2145, %v2146
      %2228 = vadd.xlane.f32.xlu0 %v2227
      %v2229 = vpop.xlane.xlu0 %2228
      %v2230 = vadd.f32 %v2147, %v2148
      %2231 = vadd.xlane.f32.xlu0 %v2230
      %v2232 = vpop.xlane.xlu0 %2231
      %v2233 = vadd.f32 %v2149, %v2150
      %2234 = vadd.xlane.f32.xlu0 %v2233
      %v2235 = vpop.xlane.xlu0 %2234
      %v2236 = vadd.f32 %v2151, %v2152
      %2237 = vadd.xlane.f32.xlu0 %v2236
      %v2238 = vpop.xlane.xlu0 %2237
      %v2239 = vadd.f32 %v2153, %v2154
      %2240 = vadd.xlane.f32.xlu0 %v2239
      %v2241 = vpop.xlane.xlu0 %2240
      %v2242 = vadd.f32 %v2155, %v2156
      %2243 = vadd.xlane.f32.xlu0 %v2242
      %v2244 = vpop.xlane.xlu0 %2243
      %v2245 = vadd.f32 %v2157, %v2158
      %2246 = vadd.xlane.f32.xlu0 %v2245
      %v2247 = vpop.xlane.xlu0 %2246
      %v2248 = vadd.f32 %v2159, %v2160
      %2249 = vadd.xlane.f32.xlu0 %v2248
      %v2250 = vpop.xlane.xlu0 %2249
      %v2251 = vadd.f32 %v2161, %v2162
      %2252 = vadd.xlane.f32.xlu0 %v2251
      %v2253 = vpop.xlane.xlu0 %2252
      %v2254 = vadd.f32 %v2163, %v2164
      %2255 = vadd.xlane.f32.xlu0 %v2254
      %v2256 = vpop.xlane.xlu0 %2255
      %v2257 = vadd.f32 %v2165, %v2166
      %2258 = vadd.xlane.f32.xlu0 %v2257
      %v2259 = vpop.xlane.xlu0 %2258
      %v2260 = vadd.f32 %v2167, %v2168
      %2261 = vadd.xlane.f32.xlu0 %v2260
      %v2262 = vpop.xlane.xlu0 %2261
      %v2263 = vadd.f32 %v2169, %v2170
      %2264 = vadd.xlane.f32.xlu0 %v2263
      %v2265 = vpop.xlane.xlu0 %2264
      %v2266 = vadd.f32 %v2171, %v2172
      %2267 = vadd.xlane.f32.xlu0 %v2266
      %v2268 = vpop.xlane.xlu0 %2267
      %v2269 = vsel %vm666, %v2175, 0.0
      %v2270 = vsel %vm667, %v2178, 0.0
      %v2271 = vsel %vm668, %v2181, 0.0
      %v2272 = vsel %vm669, %v2184, 0.0
      %v2273 = vsel %vm670, %v2187, 0.0
      %v2274 = vsel %vm671, %v2190, 0.0
      %v2275 = vsel %vm672, %v2193, 0.0
      %v2276 = vsel %vm673, %v2196, 0.0
      %v2277 = vsel %vm674, %v2199, 0.0
      %v2278 = vsel %vm675, %v2202, 0.0
      %v2279 = vsel %vm676, %v2205, 0.0
      %v2280 = vsel %vm677, %v2208, 0.0
      %v2281 = vsel %vm678, %v2211, 0.0
      %v2282 = vsel %vm679, %v2214, 0.0
      %v2283 = vsel %vm680, %v2217, 0.0
      %v2284 = vsel %vm681, %v2220, 0.0
      %v2285 = vsel %vm682, %v2223, 0.0
      %v2286 = vsel %vm683, %v2226, 0.0
      %v2287 = vsel %vm684, %v2229, 0.0
      %v2288 = vsel %vm685, %v2232, 0.0
      %v2289 = vsel %vm686, %v2235, 0.0
      %v2290 = vsel %vm687, %v2238, 0.0
      %v2291 = vsel %vm688, %v2241, 0.0
      %v2292 = vsel %vm689, %v2244, 0.0
      %v2293 = vsel %vm690, %v2247, 0.0
      %v2294 = vsel %vm691, %v2250, 0.0
      %v2295 = vsel %vm692, %v2253, 0.0
      %v2296 = vsel %vm693, %v2256, 0.0
      %v2297 = vsel %vm694, %v2259, 0.0
      %v2298 = vsel %vm695, %v2262, 0.0
      %v2299 = vsel %vm696, %v2265, 0.0
      %v2300 = vsel %vm697, %v2268, 0.0
      %v2301 = vld [vmem:[#allocation8] sm:$0x1]
      %v2302 = vsel %vm1915, %v2269, 0.0
      %v2303 = vsel %vm1915, %v2270, 0.0
      %v2304 = vadd.f32 %v2302, %v2303
      %v2305 = vsel %vm1915, %v2271, 0.0
      %v2306 = vadd.f32 %v2304, %v2305
      %v2307 = vsel %vm1915, %v2272, 0.0
      %v2308 = vadd.f32 %v2306, %v2307
      %v2309 = vsel %vm1915, %v2273, 0.0
      %v2310 = vadd.f32 %v2308, %v2309
      %v2311 = vsel %vm1915, %v2274, 0.0
      %v2312 = vadd.f32 %v2310, %v2311
      %v2313 = vsel %vm1915, %v2275, 0.0
      %v2314 = vadd.f32 %v2312, %v2313
      %v2315 = vsel %vm1915, %v2276, 0.0
      %v2316 = vadd.f32 %v2314, %v2315
      %v2317 = vsel %vm1915, %v2277, 0.0
      %v2318 = vadd.f32 %v2316, %v2317
      %v2319 = vsel %vm1915, %v2278, 0.0
      %v2320 = vadd.f32 %v2318, %v2319
      %v2321 = vsel %vm1915, %v2279, 0.0
      %v2322 = vadd.f32 %v2320, %v2321
      %v2323 = vsel %vm1915, %v2280, 0.0
      %v2324 = vadd.f32 %v2322, %v2323
      %v2325 = vsel %vm1915, %v2281, 0.0
      %v2326 = vadd.f32 %v2324, %v2325
      %v2327 = vsel %vm1915, %v2282, 0.0
      %v2328 = vadd.f32 %v2326, %v2327
      %v2329 = vsel %vm1915, %v2283, 0.0
      %v2330 = vadd.f32 %v2328, %v2329
      %v2331 = vsel %vm1915, %v2284, 0.0
      %v2332 = vadd.f32 %v2330, %v2331
      %v2333 = vsel %vm1915, %v2285, 0.0
      %v2334 = vadd.f32 %v2332, %v2333
      %v2335 = vsel %vm1915, %v2286, 0.0
      %v2336 = vadd.f32 %v2334, %v2335
      %v2337 = vsel %vm1915, %v2287, 0.0
      %v2338 = vadd.f32 %v2336, %v2337
      %v2339 = vsel %vm1915, %v2288, 0.0
      %v2340 = vadd.f32 %v2338, %v2339
      %v2341 = vsel %vm1915, %v2289, 0.0
      %v2342 = vadd.f32 %v2340, %v2341
      %v2343 = vsel %vm1915, %v2290, 0.0
      %v2344 = vadd.f32 %v2342, %v2343
      %v2345 = vsel %vm1915, %v2291, 0.0
      %v2346 = vadd.f32 %v2344, %v2345
      %v2347 = vsel %vm1915, %v2292, 0.0
      %v2348 = vadd.f32 %v2346, %v2347
      %v2349 = vsel %vm1915, %v2293, 0.0
      %v2350 = vadd.f32 %v2348, %v2349
      %v2351 = vsel %vm1915, %v2294, 0.0
      %v2352 = vadd.f32 %v2350, %v2351
      %v2353 = vsel %vm1915, %v2295, 0.0
      %v2354 = vadd.f32 %v2352, %v2353
      %v2355 = vsel %vm1915, %v2296, 0.0
      %v2356 = vadd.f32 %v2354, %v2355
      %v2357 = vsel %vm1915, %v2297, 0.0
      %v2358 = vadd.f32 %v2356, %v2357
      %v2359 = vsel %vm1915, %v2298, 0.0
      %v2360 = vadd.f32 %v2358, %v2359
      %v2361 = vsel %vm1915, %v2299, 0.0
      %v2362 = vadd.f32 %v2360, %v2361
      %v2363 = vsel %vm1915, %v2300, 0.0
      %v2364 = vadd.f32 %v2362, %v2363
      %2365 = vadd.xlane.f32.xlu0 %v2364
      %v2366 = vpop.xlane.xlu0 %2365
      %v2367 = vrot.slane %v2366, 4
      %v2368 = vadd.f32 %v2366, %v2367
      %v2369 = vrot.slane %v2368, 2
      %v2370 = vadd.f32 %v2368, %v2369
      %v2371 = vrot.slane %v2370, 1
      %v2372 = vadd.f32 %v2370, %v2371
      %s2373 = vtos %v2372
      %v2374 = vstv %s2373
      %v2375 = vmul.f32 %v2374, -2.0
      %v2376 = vadd.f32 %v2301, %v2375
      %vm2377 = vcmask 0
      %2378 = vst.msk [vmem:[#allocation8] sm:$0x1] %vm2377, %v2376
    $region37: #{tpu_custom_call.1} parent=1 // pred_fallthru
      _
    // Predicated region
    $region38: #{tpu_custom_call.1} parent=1 // pred_check
      %p2379 = pneg %p37
    $region39: #{tpu_custom_call.1} parent=1 // pred_check_branch
      %2381 = sbr.rel (%p2379) target = $region41
    $region40: #{tpu_custom_call.1} parent=1 // pred_region
      %v2382 = vld [vmem:[#allocation4] sm:$0xff]
      %v2383 = vld [vmem:[#allocation4 + $0x8] sm:$0xff]
      %v2384 = vld [vmem:[#allocation4 + $0x10] sm:$0xff]
      %v2385 = vld [vmem:[#allocation4 + $0x18] sm:$0xff]
      %v2386 = vld [vmem:[#allocation4 + $0x20] sm:$0xff]
      %v2387 = vld [vmem:[#allocation4 + $0x28] sm:$0xff]
      %v2388 = vld [vmem:[#allocation4 + $0x30] sm:$0xff]
      %v2389 = vld [vmem:[#allocation4 + $0x38] sm:$0xff]
      %v2390 = vld [vmem:[#allocation4 + $0x40] sm:$0xff]
      %v2391 = vld [vmem:[#allocation4 + $0x48] sm:$0xff]
      %v2392 = vld [vmem:[#allocation4 + $0x50] sm:$0xff]
      %v2393 = vld [vmem:[#allocation4 + $0x58] sm:$0xff]
      %v2394 = vld [vmem:[#allocation4 + $0x60] sm:$0xff]
      %v2395 = vld [vmem:[#allocation4 + $0x68] sm:$0xff]
      %v2396 = vld [vmem:[#allocation4 + $0x70] sm:$0xff]
      %v2397 = vld [vmem:[#allocation4 + $0x78] sm:$0xff]
      %v2398 = vld [vmem:[#allocation4 + $0x80] sm:$0xff]
      %v2399 = vld [vmem:[#allocation4 + $0x88] sm:$0xff]
      %v2400 = vld [vmem:[#allocation4 + $0x90] sm:$0xff]
      %v2401 = vld [vmem:[#allocation4 + $0x98] sm:$0xff]
      %v2402 = vld [vmem:[#allocation4 + $0xa0] sm:$0xff]
      %v2403 = vld [vmem:[#allocation4 + $0xa8] sm:$0xff]
      %v2404 = vld [vmem:[#allocation4 + $0xb0] sm:$0xff]
      %v2405 = vld [vmem:[#allocation4 + $0xb8] sm:$0xff]
      %v2406 = vld [vmem:[#allocation4 + $0xc0] sm:$0xff]
      %v2407 = vld [vmem:[#allocation4 + $0xc8] sm:$0xff]
      %v2408 = vld [vmem:[#allocation4 + $0xd0] sm:$0xff]
      %v2409 = vld [vmem:[#allocation4 + $0xd8] sm:$0xff]
      %v2410 = vld [vmem:[#allocation4 + $0xe0] sm:$0xff]
      %v2411 = vld [vmem:[#allocation4 + $0xe8] sm:$0xff]
      %v2412 = vld [vmem:[#allocation4 + $0xf0] sm:$0xff]
      %v2413 = vld [vmem:[#allocation4 + $0xf8] sm:$0xff]
      %v2414 = vld [vmem:[#allocation5] sm:$0xff]
      %v2415 = vld [vmem:[#allocation5 + $0x8] sm:$0xff]
      %v2416 = vld [vmem:[#allocation5 + $0x10] sm:$0xff]
      %v2417 = vld [vmem:[#allocation5 + $0x18] sm:$0xff]
      %v2418 = vld [vmem:[#allocation5 + $0x20] sm:$0xff]
      %v2419 = vld [vmem:[#allocation5 + $0x28] sm:$0xff]
      %v2420 = vld [vmem:[#allocation5 + $0x30] sm:$0xff]
      %v2421 = vld [vmem:[#allocation5 + $0x38] sm:$0xff]
      %v2422 = vld [vmem:[#allocation5 + $0x40] sm:$0xff]
      %v2423 = vld [vmem:[#allocation5 + $0x48] sm:$0xff]
      %v2424 = vld [vmem:[#allocation5 + $0x50] sm:$0xff]
      %v2425 = vld [vmem:[#allocation5 + $0x58] sm:$0xff]
      %v2426 = vld [vmem:[#allocation5 + $0x60] sm:$0xff]
      %v2427 = vld [vmem:[#allocation5 + $0x68] sm:$0xff]
      %v2428 = vld [vmem:[#allocation5 + $0x70] sm:$0xff]
      %v2429 = vld [vmem:[#allocation5 + $0x78] sm:$0xff]
      %v2430 = vld [vmem:[#allocation5 + $0x80] sm:$0xff]
      %v2431 = vld [vmem:[#allocation5 + $0x88] sm:$0xff]
      %v2432 = vld [vmem:[#allocation5 + $0x90] sm:$0xff]
      %v2433 = vld [vmem:[#allocation5 + $0x98] sm:$0xff]
      %v2434 = vld [vmem:[#allocation5 + $0xa0] sm:$0xff]
      %v2435 = vld [vmem:[#allocation5 + $0xa8] sm:$0xff]
      %v2436 = vld [vmem:[#allocation5 + $0xb0] sm:$0xff]
      %v2437 = vld [vmem:[#allocation5 + $0xb8] sm:$0xff]
      %v2438 = vld [vmem:[#allocation5 + $0xc0] sm:$0xff]
      %v2439 = vld [vmem:[#allocation5 + $0xc8] sm:$0xff]
      %v2440 = vld [vmem:[#allocation5 + $0xd0] sm:$0xff]
      %v2441 = vld [vmem:[#allocation5 + $0xd8] sm:$0xff]
      %v2442 = vld [vmem:[#allocation5 + $0xe0] sm:$0xff]
      %v2443 = vld [vmem:[#allocation5 + $0xe8] sm:$0xff]
      %v2444 = vld [vmem:[#allocation5 + $0xf0] sm:$0xff]
      %v2445 = vld [vmem:[#allocation5 + $0xf8] sm:$0xff]
      %v2446 = vlog2.pop %v2414
      %v2447 = vmul.f32 %v2446, 0.6931472
      %v2448 = vlog2.pop %v2415
      %v2449 = vmul.f32 %v2448, 0.6931472
      %v2450 = vlog2.pop %v2416
      %v2451 = vmul.f32 %v2450, 0.6931472
      %v2452 = vlog2.pop %v2417
      %v2453 = vmul.f32 %v2452, 0.6931472
      %v2454 = vlog2.pop %v2418
      %v2455 = vmul.f32 %v2454, 0.6931472
      %v2456 = vlog2.pop %v2419
      %v2457 = vmul.f32 %v2456, 0.6931472
      %v2458 = vlog2.pop %v2420
      %v2459 = vmul.f32 %v2458, 0.6931472
      %v2460 = vlog2.pop %v2421
      %v2461 = vmul.f32 %v2460, 0.6931472
      %v2462 = vlog2.pop %v2422
      %v2463 = vmul.f32 %v2462, 0.6931472
      %v2464 = vlog2.pop %v2423
      %v2465 = vmul.f32 %v2464, 0.6931472
      %v2466 = vlog2.pop %v2424
      %v2467 = vmul.f32 %v2466, 0.6931472
      %v2468 = vlog2.pop %v2425
      %v2469 = vmul.f32 %v2468, 0.6931472
      %v2470 = vlog2.pop %v2426
      %v2471 = vmul.f32 %v2470, 0.6931472
      %v2472 = vlog2.pop %v2427
      %v2473 = vmul.f32 %v2472, 0.6931472
      %v2474 = vlog2.pop %v2428
      %v2475 = vmul.f32 %v2474, 0.6931472
      %v2476 = vlog2.pop %v2429
      %v2477 = vmul.f32 %v2476, 0.6931472
      %v2478 = vlog2.pop %v2430
      %v2479 = vmul.f32 %v2478, 0.6931472
      %v2480 = vlog2.pop %v2431
      %v2481 = vmul.f32 %v2480, 0.6931472
      %v2482 = vlog2.pop %v2432
      %v2483 = vmul.f32 %v2482, 0.6931472
      %v2484 = vlog2.pop %v2433
      %v2485 = vmul.f32 %v2484, 0.6931472
      %v2486 = vlog2.pop %v2434
      %v2487 = vmul.f32 %v2486, 0.6931472
      %v2488 = vlog2.pop %v2435
      %v2489 = vmul.f32 %v2488, 0.6931472
      %v2490 = vlog2.pop %v2436
      %v2491 = vmul.f32 %v2490, 0.6931472
      %v2492 = vlog2.pop %v2437
      %v2493 = vmul.f32 %v2492, 0.6931472
      %v2494 = vlog2.pop %v2438
      %v2495 = vmul.f32 %v2494, 0.6931472
      %v2496 = vlog2.pop %v2439
      %v2497 = vmul.f32 %v2496, 0.6931472
      %v2498 = vlog2.pop %v2440
      %v2499 = vmul.f32 %v2498, 0.6931472
      %v2500 = vlog2.pop %v2441
      %v2501 = vmul.f32 %v2500, 0.6931472
      %v2502 = vlog2.pop %v2442
      %v2503 = vmul.f32 %v2502, 0.6931472
      %v2504 = vlog2.pop %v2443
      %v2505 = vmul.f32 %v2504, 0.6931472
      %v2506 = vlog2.pop %v2444
      %v2507 = vmul.f32 %v2506, 0.6931472
      %v2508 = vlog2.pop %v2445
      %v2509 = vmul.f32 %v2508, 0.6931472
      %v2510 = vadd.f32 %v2382, %v2447
      %v2511 = vadd.f32 %v2383, %v2449
      %v2512 = vadd.f32 %v2384, %v2451
      %v2513 = vadd.f32 %v2385, %v2453
      %v2514 = vadd.f32 %v2386, %v2455
      %v2515 = vadd.f32 %v2387, %v2457
      %v2516 = vadd.f32 %v2388, %v2459
      %v2517 = vadd.f32 %v2389, %v2461
      %v2518 = vadd.f32 %v2390, %v2463
      %v2519 = vadd.f32 %v2391, %v2465
      %v2520 = vadd.f32 %v2392, %v2467
      %v2521 = vadd.f32 %v2393, %v2469
      %v2522 = vadd.f32 %v2394, %v2471
      %v2523 = vadd.f32 %v2395, %v2473
      %v2524 = vadd.f32 %v2396, %v2475
      %v2525 = vadd.f32 %v2397, %v2477
      %v2526 = vadd.f32 %v2398, %v2479
      %v2527 = vadd.f32 %v2399, %v2481
      %v2528 = vadd.f32 %v2400, %v2483
      %v2529 = vadd.f32 %v2401, %v2485
      %v2530 = vadd.f32 %v2402, %v2487
      %v2531 = vadd.f32 %v2403, %v2489
      %v2532 = vadd.f32 %v2404, %v2491
      %v2533 = vadd.f32 %v2405, %v2493
      %v2534 = vadd.f32 %v2406, %v2495
      %v2535 = vadd.f32 %v2407, %v2497
      %v2536 = vadd.f32 %v2408, %v2499
      %v2537 = vadd.f32 %v2409, %v2501
      %v2538 = vadd.f32 %v2410, %v2503
      %v2539 = vadd.f32 %v2411, %v2505
      %v2540 = vadd.f32 %v2412, %v2507
      %v2541 = vadd.f32 %v2413, %v2509
      %v2542 = vsel %vm666, %v2510, 0.0
      %v2543 = vsel %vm667, %v2511, 0.0
      %v2544 = vsel %vm668, %v2512, 0.0
      %v2545 = vsel %vm669, %v2513, 0.0
      %v2546 = vsel %vm670, %v2514, 0.0
      %v2547 = vsel %vm671, %v2515, 0.0
      %v2548 = vsel %vm672, %v2516, 0.0
      %v2549 = vsel %vm673, %v2517, 0.0
      %v2550 = vsel %vm674, %v2518, 0.0
      %v2551 = vsel %vm675, %v2519, 0.0
      %v2552 = vsel %vm676, %v2520, 0.0
      %v2553 = vsel %vm677, %v2521, 0.0
      %v2554 = vsel %vm678, %v2522, 0.0
      %v2555 = vsel %vm679, %v2523, 0.0
      %v2556 = vsel %vm680, %v2524, 0.0
      %v2557 = vsel %vm681, %v2525, 0.0
      %v2558 = vsel %vm682, %v2526, 0.0
      %v2559 = vsel %vm683, %v2527, 0.0
      %v2560 = vsel %vm684, %v2528, 0.0
      %v2561 = vsel %vm685, %v2529, 0.0
      %v2562 = vsel %vm686, %v2530, 0.0
      %v2563 = vsel %vm687, %v2531, 0.0
      %v2564 = vsel %vm688, %v2532, 0.0
      %v2565 = vsel %vm689, %v2533, 0.0
      %v2566 = vsel %vm690, %v2534, 0.0
      %v2567 = vsel %vm691, %v2535, 0.0
      %v2568 = vsel %vm692, %v2536, 0.0
      %v2569 = vsel %vm693, %v2537, 0.0
      %v2570 = vsel %vm694, %v2538, 0.0
      %v2571 = vsel %vm695, %v2539, 0.0
      %v2572 = vsel %vm696, %v2540, 0.0
      %v2573 = vsel %vm697, %v2541, 0.0
      %v2574 = vld [vmem:[#allocation8] sm:$0x1]
      %v2575 = vsel %vm1915, %v2542, 0.0
      %v2576 = vsel %vm1915, %v2543, 0.0
      %v2577 = vadd.f32 %v2575, %v2576
      %v2578 = vsel %vm1915, %v2544, 0.0
      %v2579 = vadd.f32 %v2577, %v2578
      %v2580 = vsel %vm1915, %v2545, 0.0
      %v2581 = vadd.f32 %v2579, %v2580
      %v2582 = vsel %vm1915, %v2546, 0.0
      %v2583 = vadd.f32 %v2581, %v2582
      %v2584 = vsel %vm1915, %v2547, 0.0
      %v2585 = vadd.f32 %v2583, %v2584
      %v2586 = vsel %vm1915, %v2548, 0.0
      %v2587 = vadd.f32 %v2585, %v2586
      %v2588 = vsel %vm1915, %v2549, 0.0
      %v2589 = vadd.f32 %v2587, %v2588
      %v2590 = vsel %vm1915, %v2550, 0.0
      %v2591 = vadd.f32 %v2589, %v2590
      %v2592 = vsel %vm1915, %v2551, 0.0
      %v2593 = vadd.f32 %v2591, %v2592
      %v2594 = vsel %vm1915, %v2552, 0.0
      %v2595 = vadd.f32 %v2593, %v2594
      %v2596 = vsel %vm1915, %v2553, 0.0
      %v2597 = vadd.f32 %v2595, %v2596
      %v2598 = vsel %vm1915, %v2554, 0.0
      %v2599 = vadd.f32 %v2597, %v2598
      %v2600 = vsel %vm1915, %v2555, 0.0
      %v2601 = vadd.f32 %v2599, %v2600
      %v2602 = vsel %vm1915, %v2556, 0.0
      %v2603 = vadd.f32 %v2601, %v2602
      %v2604 = vsel %vm1915, %v2557, 0.0
      %v2605 = vadd.f32 %v2603, %v2604
      %v2606 = vsel %vm1915, %v2558, 0.0
      %v2607 = vadd.f32 %v2605, %v2606
      %v2608 = vsel %vm1915, %v2559, 0.0
      %v2609 = vadd.f32 %v2607, %v2608
      %v2610 = vsel %vm1915, %v2560, 0.0
      %v2611 = vadd.f32 %v2609, %v2610
      %v2612 = vsel %vm1915, %v2561, 0.0
      %v2613 = vadd.f32 %v2611, %v2612
      %v2614 = vsel %vm1915, %v2562, 0.0
      %v2615 = vadd.f32 %v2613, %v2614
      %v2616 = vsel %vm1915, %v2563, 0.0
      %v2617 = vadd.f32 %v2615, %v2616
      %v2618 = vsel %vm1915, %v2564, 0.0
      %v2619 = vadd.f32 %v2617, %v2618
      %v2620 = vsel %vm1915, %v2565, 0.0
      %v2621 = vadd.f32 %v2619, %v2620
      %v2622 = vsel %vm1915, %v2566, 0.0
      %v2623 = vadd.f32 %v2621, %v2622
      %v2624 = vsel %vm1915, %v2567, 0.0
      %v2625 = vadd.f32 %v2623, %v2624
      %v2626 = vsel %vm1915, %v2568, 0.0
      %v2627 = vadd.f32 %v2625, %v2626
      %v2628 = vsel %vm1915, %v2569, 0.0
      %v2629 = vadd.f32 %v2627, %v2628
      %v2630 = vsel %vm1915, %v2570, 0.0
      %v2631 = vadd.f32 %v2629, %v2630
      %v2632 = vsel %vm1915, %v2571, 0.0
      %v2633 = vadd.f32 %v2631, %v2632
      %v2634 = vsel %vm1915, %v2572, 0.0
      %v2635 = vadd.f32 %v2633, %v2634
      %v2636 = vsel %vm1915, %v2573, 0.0
      %v2637 = vadd.f32 %v2635, %v2636
      %2638 = vadd.xlane.f32.xlu0 %v2637
      %v2639 = vpop.xlane.xlu0 %2638
      %v2640 = vrot.slane %v2639, 4
      %v2641 = vadd.f32 %v2639, %v2640
      %v2642 = vrot.slane %v2641, 2
      %v2643 = vadd.f32 %v2641, %v2642
      %v2644 = vrot.slane %v2643, 1
      %v2645 = vadd.f32 %v2643, %v2644
      %s2646 = vtos %v2645
      %v2647 = vstv %s2646
      %v2648 = vadd.f32 %v2574, %v2647
      %vm2649 = vcmask 0
      %2650 = vst.msk [vmem:[#allocation8] sm:$0x1] %vm2649, %v2648
    $region41: #{tpu_custom_call.1} parent=1 // pred_fallthru
      _
    // Predicated region
    $region42: #{tpu_custom_call.1} parent=1 // pred_check
      %p2651 = pneg %p36
    $region43: #{tpu_custom_call.1} parent=1 // pred_check_branch
      %2653 = sbr.rel (%p2651) target = $region45
    $region44: #{tpu_custom_call.1} parent=1 // pred_region
      %v2654 = vld [vmem:[%s1981] sm:$0x3]
      %v2655 = vld [vmem:[%s2002] sm:$0x3]
      %v2656 = vlog2.pop %v2655
      %v2657 = vmul.f32 %v2656, 0.6931472
      %v2658 = vadd.f32 %v2654, %v2657
      %v2660 = vlaneseq
      %v2661 = vshrl.u32 %v2660, 7
      %v2662 = vsub.s32 0, %v2661
      %v2663 = vrot.slane %v2658, %v2662
      %v2664 = vlaneseq
      %v2665 = vshrl.u32 %v2664, 7
      %v2666 = vsub.s32 1, %v2665
      %v2667 = vrot.slane %v2658, %v2666
      %v2670 = vsel %vm698, %v2663, 0.0
      %v2671 = vsel %vm699, %v2667, 0.0
      %v2672 = vld [vmem:[#allocation8] sm:$0x1]
      %vm2673 = vcmask 1040384
      %v2674 = vsel %vm2673, %v2670, 0.0
      %v2675 = vsel %vm2673, %v2671, 0.0
      %v2676 = vadd.f32 %v2674, %v2675
      %2677 = vadd.xlane.f32.xlu0 %v2676
      %v2678 = vpop.xlane.xlu0 %2677
      %v2679 = vrot.slane %v2678, 4
      %v2680 = vadd.f32 %v2678, %v2679
      %v2681 = vrot.slane %v2680, 2
      %v2682 = vadd.f32 %v2680, %v2681
      %v2683 = vrot.slane %v2682, 1
      %v2684 = vadd.f32 %v2682, %v2683
      %s2685 = vtos %v2684
      %v2686 = vstv %s2685
      %v2687 = vadd.f32 %v2672, %v2686
      %vm2688 = vcmask 0
      %2689 = vst.msk [vmem:[#allocation8] sm:$0x1] %vm2688, %v2687
    $region45: #{tpu_custom_call.1} parent=1 // pred_fallthru
      _
    // Predicated region
    $region46: #{tpu_custom_call.1} parent=1 // pred_check
      _
    $region47: #{tpu_custom_call.1} parent=1 // pred_check_branch
      %2691 = sbr.rel (%p38) target = $region49
    $region48: #{tpu_custom_call.1} parent=1 // pred_region
      %s2692 = sld [smem:[#allocation10]]
      %s2693 = scvt.s32.f32 %s2692
      %v2694 = vld [vmem:[#allocation8] sm:$0x1]
      %v2695 = vstv %s2693
      %v2696 = vrcp.pop %v2695
      %s2697 = vtos %v2696
      %s2698 = smul.f32 0.5, %s2697
      %v2699 = vstv %s2698
      %v2700 = vmul.f32 %v2694, %v2699
      %vm2701 = vcmask 0
      %2702 = vst.msk [vmem:[#allocation14] sm:$0x1] %vm2701, %v2700
    $region49: #{tpu_custom_call.1} parent=1 // pred_fallthru
      _
    // Predicated region
    $region50: #{tpu_custom_call.1} parent=1 // pred_check
      _
    $region51: #{tpu_custom_call.1} parent=1 // pred_check_branch
      %2704 = sbr.rel (0) target = $region53
    $region52: #{tpu_custom_call.1} parent=1 // pred_region
      %s2706 = ssub.s32 16, 16
      %2707 = vsyncadd [#allocation13], %s2706
      %s2709 = sshll.u32 [#allocation14], 4
      %s2710 = int_to_ptr.vmem [resolvable:$true] %s2709
      %2712 = dma.vmem_to_hbm [thread:$0]  %s2710, 16, %s4, [#allocation13]
    $region53: #{tpu_custom_call.1} parent=1 // pred_fallthru
      _
    // Predicated region
    $region54: #{tpu_custom_call.1} parent=1 // pred_check
      _
    $region55: #{tpu_custom_call.1} parent=1 // pred_check_branch
      %2714 = sbr.rel (0) target = $region57
    $region56: #{tpu_custom_call.1} parent=1 // pred_region
      %s2716 = ssub.s32 8192, 8192
      %2717 = vsyncadd [#allocation16], %s2716
      %s2718 = sshll.u32 [#allocation15], 4
      %s2719 = int_to_ptr.vmem [resolvable:$true] %s2718
      %2724 = dma.vmem_to_hbm [thread:$0]  %s2719, 8192, %s5, [#allocation16], 256, 256, 16
    $region57: #{tpu_custom_call.1} parent=1 // pred_fallthru
      _
    // Predicated region
    $region58: #{tpu_custom_call.1} parent=1 // pred_check
      _
    $region59: #{tpu_custom_call.1} parent=1 // pred_check_branch
      %2726 = sbr.rel (0) target = $region61
    $region60: #{tpu_custom_call.1} parent=1 // pred_region
      %2727 = dma.done [#allocation13], 16
    $region61: #{tpu_custom_call.1} parent=1 // pred_fallthru
      _
    // Predicated region
    $region62: #{tpu_custom_call.1} parent=1 // pred_check
      _
    $region63: #{tpu_custom_call.1} parent=1 // pred_check_branch
      %2729 = sbr.rel (0) target = $region65
    $region64: #{tpu_custom_call.1} parent=1 // pred_region
      %2730 = dma.done [#allocation16], 8192
    $region65: #{tpu_custom_call.1} parent=1 // pred_fallthru
      _
    %2731 = vsyncpa [#allocation12], 1
    %2732 = vsyncpa [#allocation13], 1
    %2733 = vsyncpa [#allocation16], 1
  %2734 = vsyncmov [#allocation3]
  %s2735 = vpop.sfrf %2734
  %p2736 = scmp.eq.s32.totalorder %s2735, 0
  %p2737 = pneg %p2736
  %2739 = shalt.err (%p2737)

</llo_original>
